<compile_context>
chip_gen: v7x
topology: tpu7x:2x2x1
jax: 0.10.0
libtpu: 0.0.40
codegen_flags: <defaults>
</compile_context>

<pallas_src>
import functools
import math
from collections import namedtuple

import jax
import jax.numpy as jnp
from jax.experimental import pallas as pl
from jax.experimental.pallas import tpu as pltpu


# Activations between kernels: "CP" layout -> d has shape (C, B*H*W), f32.
Feat = namedtuple("Feat", ["d", "B", "H", "W"])


# ----------------------------------------------------------------------------
# Pallas plumbing
# ----------------------------------------------------------------------------
def _p_grid(P):
    """Grid split along the pixel (lane) axis.

    v5e/v6e have one TensorCore, so extra grid steps are pure per-step
    overhead -> single full-extent block.  Only when P is large do we split it
    evenly into two 256-lane-aligned blocks so both v7x TensorCores get
    balanced work."""
    if P >= 2048 and P % 256 == 0:
        return 2, P // 2
    return 1, P


def _pcall(kernel, args, split, out_rows, P, flops=0, transcendentals=0):
    """One fused pallas_call.  split[i]=True marks args whose trailing axis is
    the pixel axis (tiled with the grid); False args are small weight/bias
    blocks kept fully VMEM-resident."""
    gp, tp = _p_grid(P)
    in_specs = []
    for a, s in zip(args, split):
        if s:
            in_specs.append(pl.BlockSpec((a.shape[0], tp), lambda i: (0, i)))
        else:
            in_specs.append(pl.BlockSpec(a.shape, lambda i: (0, 0)))
    bytes_accessed = int(sum(a.size * a.dtype.itemsize for a in args)
                         + out_rows * P * 4)
    return pl.pallas_call(
        kernel,
        out_shape=jax.ShapeDtypeStruct((out_rows, P), jnp.float32),
        grid=(gp,),
        in_specs=in_specs,
        out_specs=pl.BlockSpec((out_rows, tp), lambda i: (0, i)),
        compiler_params=pltpu.CompilerParams(
            dimension_semantics=("parallel",)),
        cost_estimate=pl.CostEstimate(flops=int(flops),
                                      transcendentals=int(transcendentals),
                                      bytes_accessed=bytes_accessed),
    )(*args)


# ----------------------------------------------------------------------------
# Kernel bodies (all GEMMs: small (O,K) weight @ (K,P) patches, P on lanes)
# ----------------------------------------------------------------------------
def _act(y, act):
    if act == "relu":
        return jnp.maximum(y, 0.0)
    if act == "leaky01":                      # nn.LeakyReLU default slope
        return jnp.where(y >= 0, y, 0.01 * y)
    if act == "lrelu02":                      # SFTResblk.actvn
        return jnp.where(y >= 0, y, 0.2 * y)
    return y


def _act_rows(y, act, act_rows):
    if act == "none":
        return y
    a = _act(y, act)
    if act_rows is None or act_rows >= y.shape[0]:
        return a
    row = jax.lax.broadcasted_iota(jnp.int32, y.shape, 0)
    return jnp.where(row < act_rows, a, y)


def _k_conv(x_ref, w_ref, b_ref, o_ref, *, act, act_rows):
    y = jnp.dot(w_ref[...], x_ref[...],
                preferred_element_type=jnp.float32) + b_ref[...]
    o_ref[...] = _act_rows(y, act, act_rows)


def _k_conv_res(x_ref, r_ref, w_ref, b_ref, o_ref, *, act, act_rows):
    y = jnp.dot(w_ref[...], x_ref[...],
                preferred_element_type=jnp.float32) + b_ref[...]
    o_ref[...] = _act_rows(y, act, act_rows) + r_ref[...]


def _k_bneck_tail(p_ref, x_ref, w2_ref, b2_ref, w3_ref, b3_ref, o_ref):
    # relu(conv3x3) -> conv1x1 -> + residual, all in one kernel.
    h = jnp.dot(w2_ref[...], p_ref[...],
                preferred_element_type=jnp.float32) + b2_ref[...]
    h = jnp.maximum(h, 0.0).astype(jnp.bfloat16)
    y = jnp.dot(w3_ref[...], h, preferred_element_type=jnp.float32) + b3_ref[...]
    o_ref[...] = y + x_ref[...]


def _k_conv_gdn_res(p_ref, id_ref, w_ref, b_ref, g_ref, bt_ref, o_ref, *, inverse):
    # conv3x3 -> (inverse) GDN -> + identity, all in one kernel.
    y = jnp.dot(w_ref[...], p_ref[...],
                preferred_element_type=jnp.float32) + b_ref[...]
    z = jnp.dot(g_ref[...], y * y,
                preferred_element_type=jnp.float32) + bt_ref[...]
    if inverse:
        norm = jnp.sqrt(jnp.maximum(z, 0.0))
    else:
        norm = jax.lax.rsqrt(jnp.maximum(z, 1e-12))
    o_ref[...] = y * norm + id_ref[...]


def _k_sft_affine(p_ref, x_ref, w_ref, b_ref, o_ref, *, nc, post_act):
    # gamma & beta convs fused along rows + x*(1+gamma)+beta (+ optional lrelu).
    gb = jnp.dot(w_ref[...], p_ref[...],
                 preferred_element_type=jnp.float32) + b_ref[...]
    gamma = gb[:nc, :]
    beta = gb[nc:, :]
    out = x_ref[...] * (1.0 + gamma) + beta
    if post_act == "lrelu02":
        out = jnp.where(out >= 0, out, 0.2 * out)
    o_ref[...] = out


# ----------------------------------------------------------------------------
# Wrapper-side spatial glue (im2col once in bf16, pixel shuffle)
# ----------------------------------------------------------------------------
def im2col(f, k, stride=1):
    """Patches in CP layout: (k*k*C, B*Ho*Wo) bf16, row = (ki*k+kj)*C + c."""
    C = f.d.shape[0]
    if k == 1 and stride == 1:
        return f.d.astype(jnp.bfloat16), f.H, f.W
    p = k // 2
    Ho = (f.H + 2 * p - k) // stride + 1
    Wo = (f.W + 2 * p - k) // stride + 1
    x = f.d.reshape(C, f.B, f.H, f.W).astype(jnp.bfloat16)   # written once, bf16
    if p:
        x = jnp.pad(x, ((0, 0), (0, 0), (p, p), (p, p)))
    cols = [x[:, :, i:i + stride * Ho:stride, j:j + stride * Wo:stride]
            for i in range(k) for j in range(k)]
    patches = jnp.concatenate(cols, axis=0).reshape(k * k * C, f.B * Ho * Wo)
    # TODO(synk): at real image sizes move im2col into the kernel (row-band DMA
    # + pl.ds shifted views) to avoid the 9x HBM expansion.
    return patches, Ho, Wo


def pixel_shuffle_cp(x, B, H, W, r):
    # TODO(synk): fold this permutation into the producing GEMM's out index_map.
    C = x.shape[0] // (r * r)
    x = x.reshape(C, r, r, B, H, W).transpose(0, 3, 4, 1, 5, 2)
    return x.reshape(C, B * H * r * W * r)


def conv(p, f, *, stride=1, act="none", act_rows=None, residual=None):
    patches, Ho, Wo = im2col(f, p["k"], stride)
    P = f.B * Ho * Wo
    O, K = p["w"].shape
    flops = 2 * O * K * P
    if residual is None:
        out = _pcall(functools.partial(_k_conv, act=act, act_rows=act_rows),
                     [patches, p["w"], p["b"]], [True, False, False],
                     O, P, flops=flops)
    else:
        out = _pcall(functools.partial(_k_conv_res, act=act, act_rows=act_rows),
                     [patches, residual, p["w"], p["b"]],
                     [True, True, False, False], O, P, flops=flops)
    return Feat(out, f.B, Ho, Wo)


# ----------------------------------------------------------------------------
# Deterministic parameter construction (weights stored (O, K) in bf16)
# ----------------------------------------------------------------------------
class KeyGen:
    def __init__(self, seed):
        self.key = jax.random.PRNGKey(seed)

    def __call__(self):
        self.key, sub = jax.random.split(self.key)
        return sub


def init_conv(kg, in_c, out_c, k):
    bound = 1.0 / math.sqrt(in_c * k * k)
    w = jax.random.uniform(kg(), (out_c, k * k * in_c), jnp.float32, -bound, bound)
    b = jax.random.uniform(kg(), (out_c,), jnp.float32, -bound, bound)
    return {"w": w.astype(jnp.bfloat16), "b": b.reshape(out_c, 1), "k": k}


def fuse_rows(a, b_):
    """Concatenate two convs sharing (k, in_c) along output rows."""
    assert a["k"] == b_["k"]
    return {"w": jnp.concatenate([a["w"], b_["w"]], axis=0),
            "b": jnp.concatenate([a["b"], b_["b"]], axis=0),
            "k": a["k"]}


# --- ResidualBottleneck (ELIC-style) ---
def init_bottleneck(kg, N):
    return {"c1": init_conv(kg, N, N // 2, 1),
            "c2": init_conv(kg, N // 2, N // 2, 3),
            "c3": init_conv(kg, N // 2, N, 1)}


def apply_bottleneck(p, f):
    P = f.B * f.H * f.W
    c1, c2, c3 = p["c1"], p["c2"], p["c3"]
    Cm = c1["w"].shape[0]
    C = f.d.shape[0]
    h1 = _pcall(functools.partial(_k_conv, act="relu", act_rows=None),
                [f.d.astype(jnp.bfloat16), c1["w"], c1["b"]],
                [True, False, False], Cm, P,
                flops=2 * Cm * c1["w"].shape[1] * P)
    patches, _, _ = im2col(Feat(h1, f.B, f.H, f.W), 3, 1)
    flops = 2 * P * (Cm * c2["w"].shape[1] + C * Cm)
    out = _pcall(_k_bneck_tail,
                 [patches, f.d, c2["w"], c2["b"], c3["w"], c3["b"]],
                 [True, True, False, False, False, False], C, P, flops=flops)
    return Feat(out, f.B, f.H, f.W)


def _conv_gdn_res(cp, gamma, beta, f, identity, inverse):
    patches, Ho, Wo = im2col(f, cp["k"], 1)
    P = f.B * Ho * Wo
    O, K = cp["w"].shape
    out = _pcall(functools.partial(_k_conv_gdn_res, inverse=inverse),
                 [patches, identity, cp["w"], cp["b"], gamma, beta],
                 [True, True, False, False, False, False], O, P,
                 flops=2 * P * (O * K + O * O), transcendentals=O * P)
    return Feat(out, f.B, Ho, Wo)


# --- ResidualBlockWithStride (compressai, GDN) ---
def init_rbws(kg, in_ch, out_ch, stride=2):
    conv1 = init_conv(kg, in_ch, out_ch, 3)
    conv2 = init_conv(kg, out_ch, out_ch, 3)
    skip = init_conv(kg, in_ch, out_ch, 1)
    # Embed the 1x1 skip as the centre tap of a 3x3 so it shares conv1's
    # im2col; fuse along output rows -> one pallas_call for conv1 + skip.
    w_skip3 = jnp.zeros((out_ch, 9 * in_ch), jnp.bfloat16)
    w_skip3 = w_skip3.at[:, 4 * in_ch:5 * in_ch].set(skip["w"])
    fused = fuse_rows(conv1, {"w": w_skip3, "b": skip["b"], "k": 3})
    return {"fused": fused, "conv2": conv2,
            "gdn_gamma": 0.1 * jnp.eye(out_ch, dtype=jnp.float32),
            "gdn_beta": jnp.ones((out_ch, 1), jnp.float32),
            "stride": stride, "out_ch": out_ch}


def apply_rbws(p, f):
    oc = p["out_ch"]
    patches, Ho, Wo = im2col(f, 3, p["stride"])
    P = f.B * Ho * Wo
    fw = p["fused"]
    both = _pcall(functools.partial(_k_conv, act="leaky01", act_rows=oc),
                  [patches, fw["w"], fw["b"]], [True, False, False],
                  2 * oc, P, flops=2 * 2 * oc * fw["w"].shape[1] * P)
    out1, identity = both[:oc], both[oc:]
    return _conv_gdn_res(p["conv2"], p["gdn_gamma"], p["gdn_beta"],
                         Feat(out1, f.B, Ho, Wo), identity, inverse=False)


# --- ResidualBlockUpsample (compressai, inverse GDN) ---
def init_rbu(kg, in_ch, out_ch, r=2):
    subpel = init_conv(kg, in_ch, out_ch * r * r, 3)
    upsample = init_conv(kg, in_ch, out_ch * r * r, 3)
    conv_p = init_conv(kg, out_ch, out_ch, 3)
    return {"fused": fuse_rows(subpel, upsample), "conv": conv_p,
            "igdn_gamma": 0.1 * jnp.eye(out_ch, dtype=jnp.float32),
            "igdn_beta": jnp.ones((out_ch, 1), jnp.float32),
            "r": r, "out_ch": out_ch}


def apply_rbu(p, f):
    oc, r = p["out_ch"], p["r"]
    n = oc * r * r
    patches, Ho, Wo = im2col(f, 3, 1)
    P = f.B * Ho * Wo
    fw = p["fused"]
    # LeakyReLU commutes with PixelShuffle (pure permutation) -> applied in the
    # GEMM epilogue on the subpel rows only.
    both = _pcall(functools.partial(_k_conv, act="leaky01", act_rows=n),
                  [patches, fw["w"], fw["b"]], [True, False, False],
                  2 * n, P, flops=2 * 2 * n * fw["w"].shape[1] * P)
    out_cp = pixel_shuffle_cp(both[:n], f.B, Ho, Wo, r)
    id_cp = pixel_shuffle_cp(both[n:], f.B, Ho, Wo, r)
    return _conv_gdn_res(p["conv"], p["igdn_gamma"], p["igdn_beta"],
                         Feat(out_cp, f.B, Ho * r, Wo * r), id_cp, inverse=True)


# --- SFT / SFTResblk (DiffEIC) ---
def init_sft(kg, x_nc, prior_nc, ks, nhidden):
    shared = init_conv(kg, prior_nc, nhidden, ks)
    gamma = init_conv(kg, nhidden, x_nc, ks)
    beta = init_conv(kg, nhidden, x_nc, ks)
    return {"shared": shared, "gb": fuse_rows(gamma, beta), "x_nc": x_nc}


def apply_sft(p, f, ref, post_act=None):
    sh, gb = p["shared"], p["gb"]
    patches_r, _, _ = im2col(ref, sh["k"], 1)
    P = ref.B * ref.H * ref.W
    nh = sh["w"].shape[0]
    actv = _pcall(functools.partial(_k_conv, act="relu", act_rows=None),
                  [patches_r, sh["w"], sh["b"]], [True, False, False],
                  nh, P, flops=2 * nh * sh["w"].shape[1] * P)
    patches_a, _, _ = im2col(Feat(actv, ref.B, ref.H, ref.W), gb["k"], 1)
    nc = p["x_nc"]
    out = _pcall(functools.partial(_k_sft_affine, nc=nc, post_act=post_act),
                 [patches_a, f.d, gb["w"], gb["b"]],
                 [True, True, False, False], nc, P,
                 flops=2 * 2 * nc * gb["w"].shape[1] * P)
    return Feat(out, f.B, f.H, f.W)


def init_sftres(kg, x_nc, prior_nc, ks, nhidden):
    return {"conv0": init_conv(kg, x_nc, x_nc, 3),
            "conv1": init_conv(kg, x_nc, x_nc, 3),
            "norm0": init_sft(kg, x_nc, prior_nc, ks, nhidden),
            "norm1": init_sft(kg, x_nc, prior_nc, ks, nhidden)}


def apply_sftres(p, f, ref):
    a0 = apply_sft(p["norm0"], f, ref, post_act="lrelu02")
    dx = conv(p["conv0"], a0)
    a1 = apply_sft(p["norm1"], dx, ref, post_act="lrelu02")
    return conv(p["conv1"], a1, residual=f.d)


# --- sft_1_x feature branches: conv3x3(stride) -> GELU -> conv1x1 ---
def init_sft_feat(kg, in_c, out_c, ks=3):
    return {"c0": init_conv(kg, in_c, out_c, ks),
            "c1": init_conv(kg, out_c, out_c, 1)}


def apply_sft_feat(p, f, stride=1):
    h = conv(p["c0"], f, stride=stride)
    # TODO(synk): exact-erf nn.GELU left to plain XLA between the two conv
    # kernels (erf not relied upon inside the Mosaic kernel body).
    h = Feat(jax.nn.gelu(h.d, approximate=False), h.B, h.H, h.W)
    return conv(p["c1"], h)


# --- Encoder / Decoder / LFGCM ---
def init_encoder(kg, in_nc, mid_nc, out_nc, prior_nc, sft_ks, nhidden):
    p = {}
    p["sft_1_8"] = init_sft_feat(kg, 4, prior_nc)
    p["sft_1_16"] = init_sft_feat(kg, prior_nc, prior_nc)
    p["sft_1_16_2"] = init_sft_feat(kg, prior_nc, prior_nc)
    p["g_a1"] = {"rbws": init_rbws(kg, in_nc, mid_nc[2]),
                 "b": [init_bottleneck(kg, mid_nc[2]) for _ in range(3)]}
    p["g_a1_ref"] = init_sft(kg, mid_nc[2], prior_nc, sft_ks, nhidden)
    p["g_a2"] = {"rbws": init_rbws(kg, mid_nc[2], mid_nc[3]),
                 "b": [init_bottleneck(kg, mid_nc[3]) for _ in range(3)]}
    p["g_a2_ref"] = init_sft(kg, mid_nc[3], prior_nc, sft_ks, nhidden)
    p["g_a3"] = init_conv(kg, mid_nc[3], mid_nc[3], 3)
    p["g_a4"] = init_sftres(kg, mid_nc[3], prior_nc, sft_ks, nhidden)
    p["g_a5"] = init_sftres(kg, mid_nc[3], prior_nc, sft_ks, nhidden)
    p["g_a6"] = init_conv(kg, mid_nc[3], out_nc, 3)
    return p


def encoder_forward(p, x, feature):
    sft_feature = apply_sft_feat(p["sft_1_8"], feature, stride=1)
    x = apply_rbws(p["g_a1"]["rbws"], x)
    for bp in p["g_a1"]["b"]:
        x = apply_bottleneck(bp, x)
    x = apply_sft(p["g_a1_ref"], x, sft_feature)
    sft_feature = apply_sft_feat(p["sft_1_16"], sft_feature, stride=2)
    x = apply_rbws(p["g_a2"]["rbws"], x)
    for bp in p["g_a2"]["b"]:
        x = apply_bottleneck(bp, x)
    x = apply_sft(p["g_a2_ref"], x, sft_feature)
    sft_feature = apply_sft_feat(p["sft_1_16_2"], sft_feature, stride=1)
    x = conv(p["g_a3"], x)
    x = apply_sftres(p["g_a4"], x, sft_feature)
    x = apply_sftres(p["g_a5"], x, sft_feature)
    x = conv(p["g_a6"], x)
    return x


def init_decoder(kg, N, M, out_nc):
    return {"g_s2": {"conv": init_conv(kg, M, N, 3),
                     "b": [init_bottleneck(kg, N) for _ in range(3)]},
            "g_s3": {"rbu": init_rbu(kg, N, N),
                     "b": [init_bottleneck(kg, N) for _ in range(3)]},
            "g_s4": init_conv(kg, N, out_nc, 3)}


def decoder_forward(p, x):
    x = conv(p["g_s2"]["conv"], x)
    for bp in p["g_s2"]["b"]:
        x = apply_bottleneck(bp, x)
    x = apply_rbu(p["g_s3"]["rbu"], x)
    for bp in p["g_s3"]["b"]:
        x = apply_bottleneck(bp, x)
    x = conv(p["g_s4"], x)
    return x


def init_lfgcm(kg, in_nc, out_nc, enc_mid, N, M, prior_nc, sft_ks, nhidden):
    return {"encoder": init_encoder(kg, in_nc, enc_mid, M, prior_nc, sft_ks, nhidden),
            "decoder": init_decoder(kg, N, M, out_nc)}


def nchw_to_feat(x):
    B, C, H, W = x.shape
    return Feat(jnp.transpose(x, (1, 0, 2, 3)).reshape(C, B * H * W), B, H, W)


def feat_to_nchw(f):
    C = f.d.shape[0]
    return jnp.transpose(f.d.reshape(C, f.B, f.H, f.W), (1, 0, 2, 3))


def lfgcm_forward(params, x_nchw, ref_nchw):
    # PyTorch-facing NCHW interface; CP (channels x pixels) layout internally.
    x = nchw_to_feat(x_nchw)
    ref = nchw_to_feat(ref_nchw)
    y = encoder_forward(params["encoder"], x, ref)
    out = decoder_forward(params["decoder"], y)
    return feat_to_nchw(out)


# ----------------------------------------------------------------------------
if __name__ == "__main__":
    # small config:  in_nc=4, out_nc=4, enc_mid[2]=8, enc_mid[3]=16, N=8, M=16,
    # prior_nc=8, sft_ks=3, SFT hidden=16  (slice_num / slice_ch unused in fwd)
    in_nc, out_nc = 4, 4
    enc_mid = [0, 0, 8, 16]
    N, M = 8, 16
    prior_nc, sft_ks, nhidden = 8, 3, 16

    params = init_lfgcm(KeyGen(42), in_nc, out_nc, enc_mid, N, M,
                        prior_nc, sft_ks, nhidden)

    key = jax.random.PRNGKey(0)
    kx, kr = jax.random.split(key)
    x = jax.random.normal(kx, (2, in_nc, 16, 16), jnp.float32)      # NCHW
    ref = jax.random.normal(kr, (2, 4, 8, 8), jnp.float32)          # NCHW, 4 ch

    fwd = jax.jit(lambda a, b: lfgcm_forward(params, a, b))
    out = jax.block_until_ready(fwd(x, ref))

    assert out.shape == (2, out_nc, 8, 8), out.shape
    assert bool(jnp.all(jnp.isfinite(out)))
    print("KERNEL_OK")
</pallas_src>

<mosaic_0001>
module attributes {stable_mosaic.version = 11 : i64} {
  func.func @_k_conv(%arg0: i32, %arg1: memref<36x128xbf16, #tpu.memory_space<vmem>>, %arg2: memref<16x36xbf16, #tpu.memory_space<vmem>>, %arg3: memref<16x1xf32, #tpu.memory_space<vmem>>, %arg4: memref<16x128xf32, #tpu.memory_space<vmem>>) attributes {dimension_semantics = [#tpu.dimension_semantics<parallel>], iteration_bounds = array<i64: 1>, scalar_prefetch = 0 : i64, scratch_operands = 0 : i64, tpu.core_type = #tpu.core_type<tc>, window_params = [{transform_indices = @transform_0, window_bounds = array<i64: 36, 128>}, {pipeline_mode = #tpu.pipeline_mode<synchronous>, transform_indices = @transform_1, window_bounds = array<i64: 16, 36>}, {pipeline_mode = #tpu.pipeline_mode<synchronous>, transform_indices = @transform_2, window_bounds = array<i64: 16, 1>}, {transform_indices = @transform_3, window_bounds = array<i64: 16, 128>}]} {
    %c0 = arith.constant 0 : index
    %c0_0 = arith.constant 0 : index
    %0 = vector.load %arg2[%c0, %c0_0] : memref<16x36xbf16, #tpu.memory_space<vmem>>, vector<16x36xbf16>
    %c0_1 = arith.constant 0 : index
    %c0_2 = arith.constant 0 : index
    %1 = vector.load %arg1[%c0_1, %c0_2] : memref<36x128xbf16, #tpu.memory_space<vmem>>, vector<36x128xbf16>
    %cst = arith.constant dense<0.000000e+00> : vector<16x128xf32>
    %2 = tpu.matmul %0, %1, %cst {dimension_numbers = #tpu.dot_dimension_numbers<[1], [0], [0], [1], [0, 0, 1, 1], [], []>} : vector<16x36xbf16>, vector<36x128xbf16>, vector<16x128xf32> -> vector<16x128xf32>
    %c0_3 = arith.constant 0 : index
    %c0_4 = arith.constant 0 : index
    %3 = vector.load %arg3[%c0_3, %c0_4] : memref<16x1xf32, #tpu.memory_space<vmem>>, vector<16x1xf32>
    %4 = vector.broadcast %3 : vector<16x1xf32> to vector<16x128xf32>
    %5 = arith.addf %2, %4 : vector<16x128xf32>
    %cst_5 = arith.constant 0.000000e+00 : f32
    %6 = vector.broadcast %cst_5 : f32 to vector<16x128xf32>
    %7 = arith.cmpf oge, %5, %6 : vector<16x128xf32>
    %cst_6 = arith.constant 0.00999999977 : f32
    %8 = vector.broadcast %cst_6 : f32 to vector<16x128xf32>
    %9 = arith.mulf %8, %5 : vector<16x128xf32>
    %10 = arith.select %7, %5, %9 : vector<16x128xi1>, vector<16x128xf32>
    %11 = tpu.iota {dimensions = array<i32: 0>} : vector<16x128xi32>
    %c8_i32 = arith.constant 8 : i32
    %12 = vector.broadcast %c8_i32 : i32 to vector<16x128xi32>
    %13 = arith.cmpi slt, %11, %12 : vector<16x128xi32>
    %14 = arith.select %13, %10, %5 : vector<16x128xi1>, vector<16x128xf32>
    %c0_7 = arith.constant 0 : index
    %c0_8 = arith.constant 0 : index
    %15 = vector.load %arg4[%c0_7, %c0_8] : memref<16x128xf32, #tpu.memory_space<vmem>>, vector<16x128xf32>
    tpu.vector_store %arg4[%c0_7, %c0_8], %14 {strides = array<i32>} : memref<16x128xf32, #tpu.memory_space<vmem>>, vector<16x128xf32>,
    return
  }
  func.func @transform_0(%arg0: i32) -> (i32, i32) {
    %c0_i32 = arith.constant 0 : i32
    %c0_i32_0 = arith.constant 0 : i32
    return %c0_i32, %arg0 : i32, i32
  }
  func.func @transform_1(%arg0: i32) -> (i32, i32) {
    %c0_i32 = arith.constant 0 : i32
    %c0_i32_0 = arith.constant 0 : i32
    %c0_i32_1 = arith.constant 0 : i32
    return %c0_i32, %c0_i32_0 : i32, i32
  }
  func.func @transform_2(%arg0: i32) -> (i32, i32) {
    %c0_i32 = arith.constant 0 : i32
    %c0_i32_0 = arith.constant 0 : i32
    %c0_i32_1 = arith.constant 0 : i32
    return %c0_i32, %c0_i32_0 : i32, i32
  }
  func.func @transform_3(%arg0: i32) -> (i32, i32) {
    %c0_i32 = arith.constant 0 : i32
    %c0_i32_0 = arith.constant 0 : i32
    return %c0_i32, %arg0 : i32, i32
  }
}

module attributes {stable_mosaic.version = 11 : i64} {
  func.func @_k_conv(%arg0: i32, %arg1: memref<8x128xbf16, #tpu.memory_space<vmem>>, %arg2: memref<4x8xbf16, #tpu.memory_space<vmem>>, %arg3: memref<4x1xf32, #tpu.memory_space<vmem>>, %arg4: memref<4x128xf32, #tpu.memory_space<vmem>>) attributes {dimension_semantics = [#tpu.dimension_semantics<parallel>], iteration_bounds = array<i64: 1>, scalar_prefetch = 0 : i64, scratch_operands = 0 : i64, tpu.core_type = #tpu.core_type<tc>, window_params = [{transform_indices = @transform_0, window_bounds = array<i64: 8, 128>}, {pipeline_mode = #tpu.pipeline_mode<synchronous>, transform_indices = @transform_1, window_bounds = array<i64: 4, 8>}, {pipeline_mode = #tpu.pipeline_mode<synchronous>, transform_indices = @transform_2, window_bounds = array<i64: 4, 1>}, {transform_indices = @transform_3, window_bounds = array<i64: 4, 128>}]} {
    %c0 = arith.constant 0 : index
    %c0_0 = arith.constant 0 : index
    %0 = vector.load %arg2[%c0, %c0_0] : memref<4x8xbf16, #tpu.memory_space<vmem>>, vector<4x8xbf16>
    %c0_1 = arith.constant 0 : index
    %c0_2 = arith.constant 0 : index
    %1 = vector.load %arg1[%c0_1, %c0_2] : memref<8x128xbf16, #tpu.memory_space<vmem>>, vector<8x128xbf16>
    %cst = arith.constant dense<0.000000e+00> : vector<4x128xf32>
    %2 = tpu.matmul %0, %1, %cst {dimension_numbers = #tpu.dot_dimension_numbers<[1], [0], [0], [1], [0, 0, 1, 1], [], []>} : vector<4x8xbf16>, vector<8x128xbf16>, vector<4x128xf32> -> vector<4x128xf32>
    %c0_3 = arith.constant 0 : index
    %c0_4 = arith.constant 0 : index
    %3 = vector.load %arg3[%c0_3, %c0_4] : memref<4x1xf32, #tpu.memory_space<vmem>>, vector<4x1xf32>
    %4 = vector.broadcast %3 : vector<4x1xf32> to vector<4x128xf32>
    %5 = arith.addf %2, %4 : vector<4x128xf32>
    %cst_5 = arith.constant 0.000000e+00 : f32
    %6 = vector.broadcast %cst_5 : f32 to vector<4x128xf32>
    %7 = arith.maximumf %5, %6 : vector<4x128xf32>
    %c0_6 = arith.constant 0 : index
    %c0_7 = arith.constant 0 : index
    %8 = vector.load %arg4[%c0_6, %c0_7] : memref<4x128xf32, #tpu.memory_space<vmem>>, vector<4x128xf32>
    tpu.vector_store %arg4[%c0_6, %c0_7], %7 {strides = array<i32>} : memref<4x128xf32, #tpu.memory_space<vmem>>, vector<4x128xf32>,
    return
  }
  func.func @transform_0(%arg0: i32) -> (i32, i32) {
    %c0_i32 = arith.constant 0 : i32
    %c0_i32_0 = arith.constant 0 : i32
    return %c0_i32, %arg0 : i32, i32
  }
  func.func @transform_1(%arg0: i32) -> (i32, i32) {
    %c0_i32 = arith.constant 0 : i32
    %c0_i32_0 = arith.constant 0 : i32
    %c0_i32_1 = arith.constant 0 : i32
    return %c0_i32, %c0_i32_0 : i32, i32
  }
  func.func @transform_2(%arg0: i32) -> (i32, i32) {
    %c0_i32 = arith.constant 0 : i32
    %c0_i32_0 = arith.constant 0 : i32
    %c0_i32_1 = arith.constant 0 : i32
    return %c0_i32, %c0_i32_0 : i32, i32
  }
  func.func @transform_3(%arg0: i32) -> (i32, i32) {
    %c0_i32 = arith.constant 0 : i32
    %c0_i32_0 = arith.constant 0 : i32
    return %c0_i32, %arg0 : i32, i32
  }
}

module attributes {stable_mosaic.version = 11 : i64} {
  func.func @_k_conv_gdn_res(%arg0: i32, %arg1: memref<72x128xbf16, #tpu.memory_space<vmem>>, %arg2: memref<8x128xf32, #tpu.memory_space<vmem>>, %arg3: memref<8x72xbf16, #tpu.memory_space<vmem>>, %arg4: memref<8x1xf32, #tpu.memory_space<vmem>>, %arg5: memref<8x8xf32, #tpu.memory_space<vmem>>, %arg6: memref<8x1xf32, #tpu.memory_space<vmem>>, %arg7: memref<8x128xf32, #tpu.memory_space<vmem>>) attributes {dimension_semantics = [#tpu.dimension_semantics<parallel>], iteration_bounds = array<i64: 1>, scalar_prefetch = 0 : i64, scratch_operands = 0 : i64, tpu.core_type = #tpu.core_type<tc>, window_params = [{transform_indices = @transform_0, window_bounds = array<i64: 72, 128>}, {transform_indices = @transform_1, window_bounds = array<i64: 8, 128>}, {pipeline_mode = #tpu.pipeline_mode<synchronous>, transform_indices = @transform_2, window_bounds = array<i64: 8, 72>}, {pipeline_mode = #tpu.pipeline_mode<synchronous>, transform_indices = @transform_3, window_bounds = array<i64: 8, 1>}, {pipeline_mode = #tpu.pipeline_mode<synchronous>, transform_indices = @transform_4, window_bounds = array<i64: 8, 8>}, {pipeline_mode = #tpu.pipeline_mode<synchronous>, transform_indices = @transform_5, window_bounds = array<i64: 8, 1>}, {transform_indices = @transform_6, window_bounds = array<i64: 8, 128>}]} {
    %c0 = arith.constant 0 : index
    %c0_0 = arith.constant 0 : index
    %0 = vector.load %arg3[%c0, %c0_0] : memref<8x72xbf16, #tpu.memory_space<vmem>>, vector<8x72xbf16>
    %c0_1 = arith.constant 0 : index
    %c0_2 = arith.constant 0 : index
    %1 = vector.load %arg1[%c0_1, %c0_2] : memref<72x128xbf16, #tpu.memory_space<vmem>>, vector<72x128xbf16>
    %cst = arith.constant dense<0.000000e+00> : vector<8x128xf32>
    %2 = tpu.matmul %0, %1, %cst {dimension_numbers = #tpu.dot_dimension_numbers<[1], [0], [0], [1], [0, 0, 1, 1], [], []>} : vector<8x72xbf16>, vector<72x128xbf16>, vector<8x128xf32> -> vector<8x128xf32>
    %c0_3 = arith.constant 0 : index
    %c0_4 = arith.constant 0 : index
    %3 = vector.load %arg4[%c0_3, %c0_4] : memref<8x1xf32, #tpu.memory_space<vmem>>, vector<8x1xf32>
    %4 = vector.broadcast %3 : vector<8x1xf32> to vector<8x128xf32>
    %5 = arith.addf %2, %4 : vector<8x128xf32>
    %c0_5 = arith.constant 0 : index
    %c0_6 = arith.constant 0 : index
    %6 = vector.load %arg5[%c0_5, %c0_6] : memref<8x8xf32, #tpu.memory_space<vmem>>, vector<8x8xf32>
    %7 = arith.mulf %5, %5 : vector<8x128xf32>
    %cst_7 = arith.constant dense<0.000000e+00> : vector<8x128xf32>
    %8 = tpu.matmul %6, %7, %cst_7 {dimension_numbers = #tpu.dot_dimension_numbers<[1], [0], [0], [1], [0, 0, 1, 1], [], []>} : vector<8x8xf32>, vector<8x128xf32>, vector<8x128xf32> -> vector<8x128xf32>
    %c0_8 = arith.constant 0 : index
    %c0_9 = arith.constant 0 : index
    %9 = vector.load %arg6[%c0_8, %c0_9] : memref<8x1xf32, #tpu.memory_space<vmem>>, vector<8x1xf32>
    %10 = vector.broadcast %9 : vector<8x1xf32> to vector<8x128xf32>
    %11 = arith.addf %8, %10 : vector<8x128xf32>
    %cst_10 = arith.constant 9.99999996E-13 : f32
    %12 = vector.broadcast %cst_10 : f32 to vector<8x128xf32>
    %13 = arith.maximumf %11, %12 : vector<8x128xf32>
    %14 = math.rsqrt %13 : vector<8x128xf32>
    %15 = arith.mulf %5, %14 : vector<8x128xf32>
    %c0_11 = arith.constant 0 : index
    %c0_12 = arith.constant 0 : index
    %16 = vector.load %arg2[%c0_11, %c0_12] : memref<8x128xf32, #tpu.memory_space<vmem>>, vector<8x128xf32>
    %17 = arith.addf %15, %16 : vector<8x128xf32>
    %c0_13 = arith.constant 0 : index
    %c0_14 = arith.constant 0 : index
    %18 = vector.load %arg7[%c0_13, %c0_14] : memref<8x128xf32, #tpu.memory_space<vmem>>, vector<8x128xf32>
    tpu.vector_store %arg7[%c0_13, %c0_14], %17 {strides = array<i32>} : memref<8x128xf32, #tpu.memory_space<vmem>>, vector<8x128xf32>,
    return
  }
  func.func @transform_0(%arg0: i32) -> (i32, i32) {
    %c0_i32 = arith.constant 0 : i32
    %c0_i32_0 = arith.constant 0 : i32
    return %c0_i32, %arg0 : i32, i32
  }
  func.func @transform_1(%arg0: i32) -> (i32, i32) {
    %c0_i32 = arith.constant 0 : i32
    %c0_i32_0 = arith.constant 0 : i32
    return %c0_i32, %arg0 : i32, i32
  }
  func.func @transform_2(%arg0: i32) -> (i32, i32) {
    %c0_i32 = arith.constant 0 : i32
    %c0_i32_0 = arith.constant 0 : i32
    %c0_i32_1 = arith.constant 0 : i32
    return %c0_i32, %c0_i32_0 : i32, i32
  }
  func.func @transform_3(%arg0: i32) -> (i32, i32) {
    %c0_i32 = arith.constant 0 : i32
    %c0_i32_0 = arith.constant 0 : i32
    %c0_i32_1 = arith.constant 0 : i32
    return %c0_i32, %c0_i32_0 : i32, i32
  }
  func.func @transform_4(%arg0: i32) -> (i32, i32) {
    %c0_i32 = arith.constant 0 : i32
    %c0_i32_0 = arith.constant 0 : i32
    %c0_i32_1 = arith.constant 0 : i32
    return %c0_i32, %c0_i32_0 : i32, i32
  }
  func.func @transform_5(%arg0: i32) -> (i32, i32) {
    %c0_i32 = arith.constant 0 : i32
    %c0_i32_0 = arith.constant 0 : i32
    %c0_i32_1 = arith.constant 0 : i32
    return %c0_i32, %c0_i32_0 : i32, i32
  }
  func.func @transform_6(%arg0: i32) -> (i32, i32) {
    %c0_i32 = arith.constant 0 : i32
    %c0_i32_0 = arith.constant 0 : i32
    return %c0_i32, %arg0 : i32, i32
  }
}

module attributes {stable_mosaic.version = 11 : i64} {
  func.func @_k_bneck_tail(%arg0: i32, %arg1: memref<36x128xbf16, #tpu.memory_space<vmem>>, %arg2: memref<8x128xf32, #tpu.memory_space<vmem>>, %arg3: memref<4x36xbf16, #tpu.memory_space<vmem>>, %arg4: memref<4x1xf32, #tpu.memory_space<vmem>>, %arg5: memref<8x4xbf16, #tpu.memory_space<vmem>>, %arg6: memref<8x1xf32, #tpu.memory_space<vmem>>, %arg7: memref<8x128xf32, #tpu.memory_space<vmem>>) attributes {dimension_semantics = [#tpu.dimension_semantics<parallel>], iteration_bounds = array<i64: 1>, scalar_prefetch = 0 : i64, scratch_operands = 0 : i64, tpu.core_type = #tpu.core_type<tc>, window_params = [{transform_indices = @transform_0, window_bounds = array<i64: 36, 128>}, {transform_indices = @transform_1, window_bounds = array<i64: 8, 128>}, {pipeline_mode = #tpu.pipeline_mode<synchronous>, transform_indices = @transform_2, window_bounds = array<i64: 4, 36>}, {pipeline_mode = #tpu.pipeline_mode<synchronous>, transform_indices = @transform_3, window_bounds = array<i64: 4, 1>}, {pipeline_mode = #tpu.pipeline_mode<synchronous>, transform_indices = @transform_4, window_bounds = array<i64: 8, 4>}, {pipeline_mode = #tpu.pipeline_mode<synchronous>, transform_indices = @transform_5, window_bounds = array<i64: 8, 1>}, {transform_indices = @transform_6, window_bounds = array<i64: 8, 128>}]} {
    %c0 = arith.constant 0 : index
    %c0_0 = arith.constant 0 : index
    %0 = vector.load %arg3[%c0, %c0_0] : memref<4x36xbf16, #tpu.memory_space<vmem>>, vector<4x36xbf16>
    %c0_1 = arith.constant 0 : index
    %c0_2 = arith.constant 0 : index
    %1 = vector.load %arg1[%c0_1, %c0_2] : memref<36x128xbf16, #tpu.memory_space<vmem>>, vector<36x128xbf16>
    %cst = arith.constant dense<0.000000e+00> : vector<4x128xf32>
    %2 = tpu.matmul %0, %1, %cst {dimension_numbers = #tpu.dot_dimension_numbers<[1], [0], [0], [1], [0, 0, 1, 1], [], []>} : vector<4x36xbf16>, vector<36x128xbf16>, vector<4x128xf32> -> vector<4x128xf32>
    %c0_3 = arith.constant 0 : index
    %c0_4 = arith.constant 0 : index
    %3 = vector.load %arg4[%c0_3, %c0_4] : memref<4x1xf32, #tpu.memory_space<vmem>>, vector<4x1xf32>
    %4 = vector.broadcast %3 : vector<4x1xf32> to vector<4x128xf32>
    %5 = arith.addf %2, %4 : vector<4x128xf32>
    %cst_5 = arith.constant 0.000000e+00 : f32
    %6 = vector.broadcast %cst_5 : f32 to vector<4x128xf32>
    %7 = arith.maximumf %5, %6 : vector<4x128xf32>
    %8 = arith.truncf %7 : vector<4x128xf32> to vector<4x128xbf16>
    %c0_6 = arith.constant 0 : index
    %c0_7 = arith.constant 0 : index
    %9 = vector.load %arg5[%c0_6, %c0_7] : memref<8x4xbf16, #tpu.memory_space<vmem>>, vector<8x4xbf16>
    %cst_8 = arith.constant dense<0.000000e+00> : vector<8x128xf32>
    %10 = tpu.matmul %9, %8, %cst_8 {dimension_numbers = #tpu.dot_dimension_numbers<[1], [0], [0], [1], [0, 0, 1, 1], [], []>} : vector<8x4xbf16>, vector<4x128xbf16>, vector<8x128xf32> -> vector<8x128xf32>
    %c0_9 = arith.constant 0 : index
    %c0_10 = arith.constant 0 : index
    %11 = vector.load %arg6[%c0_9, %c0_10] : memref<8x1xf32, #tpu.memory_space<vmem>>, vector<8x1xf32>
    %12 = vector.broadcast %11 : vector<8x1xf32> to vector<8x128xf32>
    %13 = arith.addf %10, %12 : vector<8x128xf32>
    %c0_11 = arith.constant 0 : index
    %c0_12 = arith.constant 0 : index
    %14 = vector.load %arg2[%c0_11, %c0_12] : memref<8x128xf32, #tpu.memory_space<vmem>>, vector<8x128xf32>
    %15 = arith.addf %13, %14 : vector<8x128xf32>
    %c0_13 = arith.constant 0 : index
    %c0_14 = arith.constant 0 : index
    %16 = vector.load %arg7[%c0_13, %c0_14] : memref<8x128xf32, #tpu.memory_space<vmem>>, vector<8x128xf32>
    tpu.vector_store %arg7[%c0_13, %c0_14], %15 {strides = array<i32>} : memref<8x128xf32, #tpu.memory_space<vmem>>, vector<8x128xf32>,
    return
  }
  func.func @transform_0(%arg0: i32) -> (i32, i32) {
    %c0_i32 = arith.constant 0 : i32
    %c0_i32_0 = arith.constant 0 : i32
    return %c0_i32, %arg0 : i32, i32
  }
  func.func @transform_1(%arg0: i32) -> (i32, i32) {
    %c0_i32 = arith.constant 0 : i32
    %c0_i32_0 = arith.constant 0 : i32
    return %c0_i32, %arg0 : i32, i32
  }
  func.func @transform_2(%arg0: i32) -> (i32, i32) {
    %c0_i32 = arith.constant 0 : i32
    %c0_i32_0 = arith.constant 0 : i32
    %c0_i32_1 = arith.constant 0 : i32
    return %c0_i32, %c0_i32_0 : i32, i32
  }
  func.func @transform_3(%arg0: i32) -> (i32, i32) {
    %c0_i32 = arith.constant 0 : i32
    %c0_i32_0 = arith.constant 0 : i32
    %c0_i32_1 = arith.constant 0 : i32
    return %c0_i32, %c0_i32_0 : i32, i32
  }
  func.func @transform_4(%arg0: i32) -> (i32, i32) {
    %c0_i32 = arith.constant 0 : i32
    %c0_i32_0 = arith.constant 0 : i32
    %c0_i32_1 = arith.constant 0 : i32
    return %c0_i32, %c0_i32_0 : i32, i32
  }
  func.func @transform_5(%arg0: i32) -> (i32, i32) {
    %c0_i32 = arith.constant 0 : i32
    %c0_i32_0 = arith.constant 0 : i32
    %c0_i32_1 = arith.constant 0 : i32
    return %c0_i32, %c0_i32_0 : i32, i32
  }
  func.func @transform_6(%arg0: i32) -> (i32, i32) {
    %c0_i32 = arith.constant 0 : i32
    %c0_i32_0 = arith.constant 0 : i32
    return %c0_i32, %arg0 : i32, i32
  }
}

module attributes {stable_mosaic.version = 11 : i64} {
  func.func @_k_conv(%arg0: i32, %arg1: memref<36x128xbf16, #tpu.memory_space<vmem>>, %arg2: memref<8x36xbf16, #tpu.memory_space<vmem>>, %arg3: memref<8x1xf32, #tpu.memory_space<vmem>>, %arg4: memref<8x128xf32, #tpu.memory_space<vmem>>) attributes {dimension_semantics = [#tpu.dimension_semantics<parallel>], iteration_bounds = array<i64: 1>, scalar_prefetch = 0 : i64, scratch_operands = 0 : i64, tpu.core_type = #tpu.core_type<tc>, window_params = [{transform_indices = @transform_0, window_bounds = array<i64: 36, 128>}, {pipeline_mode = #tpu.pipeline_mode<synchronous>, transform_indices = @transform_1, window_bounds = array<i64: 8, 36>}, {pipeline_mode = #tpu.pipeline_mode<synchronous>, transform_indices = @transform_2, window_bounds = array<i64: 8, 1>}, {transform_indices = @transform_3, window_bounds = array<i64: 8, 128>}]} {
    %c0 = arith.constant 0 : index
    %c0_0 = arith.constant 0 : index
    %0 = vector.load %arg2[%c0, %c0_0] : memref<8x36xbf16, #tpu.memory_space<vmem>>, vector<8x36xbf16>
    %c0_1 = arith.constant 0 : index
    %c0_2 = arith.constant 0 : index
    %1 = vector.load %arg1[%c0_1, %c0_2] : memref<36x128xbf16, #tpu.memory_space<vmem>>, vector<36x128xbf16>
    %cst = arith.constant dense<0.000000e+00> : vector<8x128xf32>
    %2 = tpu.matmul %0, %1, %cst {dimension_numbers = #tpu.dot_dimension_numbers<[1], [0], [0], [1], [0, 0, 1, 1], [], []>} : vector<8x36xbf16>, vector<36x128xbf16>, vector<8x128xf32> -> vector<8x128xf32>
    %c0_3 = arith.constant 0 : index
    %c0_4 = arith.constant 0 : index
    %3 = vector.load %arg3[%c0_3, %c0_4] : memref<8x1xf32, #tpu.memory_space<vmem>>, vector<8x1xf32>
    %4 = vector.broadcast %3 : vector<8x1xf32> to vector<8x128xf32>
    %5 = arith.addf %2, %4 : vector<8x128xf32>
    %c0_5 = arith.constant 0 : index
    %c0_6 = arith.constant 0 : index
    %6 = vector.load %arg4[%c0_5, %c0_6] : memref<8x128xf32, #tpu.memory_space<vmem>>, vector<8x128xf32>
    tpu.vector_store %arg4[%c0_5, %c0_6], %5 {strides = array<i32>} : memref<8x128xf32, #tpu.memory_space<vmem>>, vector<8x128xf32>,
    return
  }
  func.func @transform_0(%arg0: i32) -> (i32, i32) {
    %c0_i32 = arith.constant 0 : i32
    %c0_i32_0 = arith.constant 0 : i32
    return %c0_i32, %arg0 : i32, i32
  }
  func.func @transform_1(%arg0: i32) -> (i32, i32) {
    %c0_i32 = arith.constant 0 : i32
    %c0_i32_0 = arith.constant 0 : i32
    %c0_i32_1 = arith.constant 0 : i32
    return %c0_i32, %c0_i32_0 : i32, i32
  }
  func.func @transform_2(%arg0: i32) -> (i32, i32) {
    %c0_i32 = arith.constant 0 : i32
    %c0_i32_0 = arith.constant 0 : i32
    %c0_i32_1 = arith.constant 0 : i32
    return %c0_i32, %c0_i32_0 : i32, i32
  }
  func.func @transform_3(%arg0: i32) -> (i32, i32) {
    %c0_i32 = arith.constant 0 : i32
    %c0_i32_0 = arith.constant 0 : i32
    return %c0_i32, %arg0 : i32, i32
  }
}

module attributes {stable_mosaic.version = 11 : i64} {
  func.func @_k_conv(%arg0: i32, %arg1: memref<8x128xbf16, #tpu.memory_space<vmem>>, %arg2: memref<8x8xbf16, #tpu.memory_space<vmem>>, %arg3: memref<8x1xf32, #tpu.memory_space<vmem>>, %arg4: memref<8x128xf32, #tpu.memory_space<vmem>>) attributes {dimension_semantics = [#tpu.dimension_semantics<parallel>], iteration_bounds = array<i64: 1>, scalar_prefetch = 0 : i64, scratch_operands = 0 : i64, tpu.core_type = #tpu.core_type<tc>, window_params = [{transform_indices = @transform_0, window_bounds = array<i64: 8, 128>}, {pipeline_mode = #tpu.pipeline_mode<synchronous>, transform_indices = @transform_1, window_bounds = array<i64: 8, 8>}, {pipeline_mode = #tpu.pipeline_mode<synchronous>, transform_indices = @transform_2, window_bounds = array<i64: 8, 1>}, {transform_indices = @transform_3, window_bounds = array<i64: 8, 128>}]} {
    %c0 = arith.constant 0 : index
    %c0_0 = arith.constant 0 : index
    %0 = vector.load %arg2[%c0, %c0_0] : memref<8x8xbf16, #tpu.memory_space<vmem>>, vector<8x8xbf16>
    %c0_1 = arith.constant 0 : index
    %c0_2 = arith.constant 0 : index
    %1 = vector.load %arg1[%c0_1, %c0_2] : memref<8x128xbf16, #tpu.memory_space<vmem>>, vector<8x128xbf16>
    %cst = arith.constant dense<0.000000e+00> : vector<8x128xf32>
    %2 = tpu.matmul %0, %1, %cst {dimension_numbers = #tpu.dot_dimension_numbers<[1], [0], [0], [1], [0, 0, 1, 1], [], []>} : vector<8x8xbf16>, vector<8x128xbf16>, vector<8x128xf32> -> vector<8x128xf32>
    %c0_3 = arith.constant 0 : index
    %c0_4 = arith.constant 0 : index
    %3 = vector.load %arg3[%c0_3, %c0_4] : memref<8x1xf32, #tpu.memory_space<vmem>>, vector<8x1xf32>
    %4 = vector.broadcast %3 : vector<8x1xf32> to vector<8x128xf32>
    %5 = arith.addf %2, %4 : vector<8x128xf32>
    %c0_5 = arith.constant 0 : index
    %c0_6 = arith.constant 0 : index
    %6 = vector.load %arg4[%c0_5, %c0_6] : memref<8x128xf32, #tpu.memory_space<vmem>>, vector<8x128xf32>
    tpu.vector_store %arg4[%c0_5, %c0_6], %5 {strides = array<i32>} : memref<8x128xf32, #tpu.memory_space<vmem>>, vector<8x128xf32>,
    return
  }
  func.func @transform_0(%arg0: i32) -> (i32, i32) {
    %c0_i32 = arith.constant 0 : i32
    %c0_i32_0 = arith.constant 0 : i32
    return %c0_i32, %arg0 : i32, i32
  }
  func.func @transform_1(%arg0: i32) -> (i32, i32) {
    %c0_i32 = arith.constant 0 : i32
    %c0_i32_0 = arith.constant 0 : i32
    %c0_i32_1 = arith.constant 0 : i32
    return %c0_i32, %c0_i32_0 : i32, i32
  }
  func.func @transform_2(%arg0: i32) -> (i32, i32) {
    %c0_i32 = arith.constant 0 : i32
    %c0_i32_0 = arith.constant 0 : i32
    %c0_i32_1 = arith.constant 0 : i32
    return %c0_i32, %c0_i32_0 : i32, i32
  }
  func.func @transform_3(%arg0: i32) -> (i32, i32) {
    %c0_i32 = arith.constant 0 : i32
    %c0_i32_0 = arith.constant 0 : i32
    return %c0_i32, %arg0 : i32, i32
  }
}

module attributes {stable_mosaic.version = 11 : i64} {
  func.func @_k_conv(%arg0: i32, %arg1: memref<72x128xbf16, #tpu.memory_space<vmem>>, %arg2: memref<16x72xbf16, #tpu.memory_space<vmem>>, %arg3: memref<16x1xf32, #tpu.memory_space<vmem>>, %arg4: memref<16x128xf32, #tpu.memory_space<vmem>>) attributes {dimension_semantics = [#tpu.dimension_semantics<parallel>], iteration_bounds = array<i64: 1>, scalar_prefetch = 0 : i64, scratch_operands = 0 : i64, tpu.core_type = #tpu.core_type<tc>, window_params = [{transform_indices = @transform_0, window_bounds = array<i64: 72, 128>}, {pipeline_mode = #tpu.pipeline_mode<synchronous>, transform_indices = @transform_1, window_bounds = array<i64: 16, 72>}, {pipeline_mode = #tpu.pipeline_mode<synchronous>, transform_indices = @transform_2, window_bounds = array<i64: 16, 1>}, {transform_indices = @transform_3, window_bounds = array<i64: 16, 128>}]} {
    %c0 = arith.constant 0 : index
    %c0_0 = arith.constant 0 : index
    %0 = vector.load %arg2[%c0, %c0_0] : memref<16x72xbf16, #tpu.memory_space<vmem>>, vector<16x72xbf16>
    %c0_1 = arith.constant 0 : index
    %c0_2 = arith.constant 0 : index
    %1 = vector.load %arg1[%c0_1, %c0_2] : memref<72x128xbf16, #tpu.memory_space<vmem>>, vector<72x128xbf16>
    %cst = arith.constant dense<0.000000e+00> : vector<16x128xf32>
    %2 = tpu.matmul %0, %1, %cst {dimension_numbers = #tpu.dot_dimension_numbers<[1], [0], [0], [1], [0, 0, 1, 1], [], []>} : vector<16x72xbf16>, vector<72x128xbf16>, vector<16x128xf32> -> vector<16x128xf32>
    %c0_3 = arith.constant 0 : index
    %c0_4 = arith.constant 0 : index
    %3 = vector.load %arg3[%c0_3, %c0_4] : memref<16x1xf32, #tpu.memory_space<vmem>>, vector<16x1xf32>
    %4 = vector.broadcast %3 : vector<16x1xf32> to vector<16x128xf32>
    %5 = arith.addf %2, %4 : vector<16x128xf32>
    %cst_5 = arith.constant 0.000000e+00 : f32
    %6 = vector.broadcast %cst_5 : f32 to vector<16x128xf32>
    %7 = arith.maximumf %5, %6 : vector<16x128xf32>
    %c0_6 = arith.constant 0 : index
    %c0_7 = arith.constant 0 : index
    %8 = vector.load %arg4[%c0_6, %c0_7] : memref<16x128xf32, #tpu.memory_space<vmem>>, vector<16x128xf32>
    tpu.vector_store %arg4[%c0_6, %c0_7], %7 {strides = array<i32>} : memref<16x128xf32, #tpu.memory_space<vmem>>, vector<16x128xf32>,
    return
  }
  func.func @transform_0(%arg0: i32) -> (i32, i32) {
    %c0_i32 = arith.constant 0 : i32
    %c0_i32_0 = arith.constant 0 : i32
    return %c0_i32, %arg0 : i32, i32
  }
  func.func @transform_1(%arg0: i32) -> (i32, i32) {
    %c0_i32 = arith.constant 0 : i32
    %c0_i32_0 = arith.constant 0 : i32
    %c0_i32_1 = arith.constant 0 : i32
    return %c0_i32, %c0_i32_0 : i32, i32
  }
  func.func @transform_2(%arg0: i32) -> (i32, i32) {
    %c0_i32 = arith.constant 0 : i32
    %c0_i32_0 = arith.constant 0 : i32
    %c0_i32_1 = arith.constant 0 : i32
    return %c0_i32, %c0_i32_0 : i32, i32
  }
  func.func @transform_3(%arg0: i32) -> (i32, i32) {
    %c0_i32 = arith.constant 0 : i32
    %c0_i32_0 = arith.constant 0 : i32
    return %c0_i32, %arg0 : i32, i32
  }
}

module attributes {stable_mosaic.version = 11 : i64} {
  func.func @_k_sft_affine(%arg0: i32, %arg1: memref<144x128xbf16, #tpu.memory_space<vmem>>, %arg2: memref<8x128xf32, #tpu.memory_space<vmem>>, %arg3: memref<16x144xbf16, #tpu.memory_space<vmem>>, %arg4: memref<16x1xf32, #tpu.memory_space<vmem>>, %arg5: memref<8x128xf32, #tpu.memory_space<vmem>>) attributes {dimension_semantics = [#tpu.dimension_semantics<parallel>], iteration_bounds = array<i64: 1>, scalar_prefetch = 0 : i64, scratch_operands = 0 : i64, tpu.core_type = #tpu.core_type<tc>, window_params = [{transform_indices = @transform_0, window_bounds = array<i64: 144, 128>}, {transform_indices = @transform_1, window_bounds = array<i64: 8, 128>}, {pipeline_mode = #tpu.pipeline_mode<synchronous>, transform_indices = @transform_2, window_bounds = array<i64: 16, 144>}, {pipeline_mode = #tpu.pipeline_mode<synchronous>, transform_indices = @transform_3, window_bounds = array<i64: 16, 1>}, {transform_indices = @transform_4, window_bounds = array<i64: 8, 128>}]} {
    %c0 = arith.constant 0 : index
    %c0_0 = arith.constant 0 : index
    %0 = vector.load %arg3[%c0, %c0_0] : memref<16x144xbf16, #tpu.memory_space<vmem>>, vector<16x144xbf16>
    %c0_1 = arith.constant 0 : index
    %c0_2 = arith.constant 0 : index
    %1 = vector.load %arg1[%c0_1, %c0_2] : memref<144x128xbf16, #tpu.memory_space<vmem>>, vector<144x128xbf16>
    %cst = arith.constant dense<0.000000e+00> : vector<16x128xf32>
    %2 = tpu.matmul %0, %1, %cst {dimension_numbers = #tpu.dot_dimension_numbers<[1], [0], [0], [1], [0, 0, 1, 1], [], []>} : vector<16x144xbf16>, vector<144x128xbf16>, vector<16x128xf32> -> vector<16x128xf32>
    %c0_3 = arith.constant 0 : index
    %c0_4 = arith.constant 0 : index
    %3 = vector.load %arg4[%c0_3, %c0_4] : memref<16x1xf32, #tpu.memory_space<vmem>>, vector<16x1xf32>
    %4 = vector.broadcast %3 : vector<16x1xf32> to vector<16x128xf32>
    %5 = arith.addf %2, %4 : vector<16x128xf32>
    %6 = vector.extract_strided_slice %5 {offsets = [0, 0], sizes = [8, 128], strides = [1, 1]} : vector<16x128xf32> to vector<8x128xf32>
    %7 = vector.extract_strided_slice %5 {offsets = [8, 0], sizes = [8, 128], strides = [1, 1]} : vector<16x128xf32> to vector<8x128xf32>
    %c0_5 = arith.constant 0 : index
    %c0_6 = arith.constant 0 : index
    %8 = vector.load %arg2[%c0_5, %c0_6] : memref<8x128xf32, #tpu.memory_space<vmem>>, vector<8x128xf32>
    %cst_7 = arith.constant 1.000000e+00 : f32
    %9 = vector.broadcast %cst_7 : f32 to vector<8x128xf32>
    %10 = arith.addf %9, %6 : vector<8x128xf32>
    %11 = arith.mulf %8, %10 : vector<8x128xf32>
    %12 = arith.addf %11, %7 : vector<8x128xf32>
    %c0_8 = arith.constant 0 : index
    %c0_9 = arith.constant 0 : index
    %13 = vector.load %arg5[%c0_8, %c0_9] : memref<8x128xf32, #tpu.memory_space<vmem>>, vector<8x128xf32>
    tpu.vector_store %arg5[%c0_8, %c0_9], %12 {strides = array<i32>} : memref<8x128xf32, #tpu.memory_space<vmem>>, vector<8x128xf32>,
    return
  }
  func.func @transform_0(%arg0: i32) -> (i32, i32) {
    %c0_i32 = arith.constant 0 : i32
    %c0_i32_0 = arith.constant 0 : i32
    return %c0_i32, %arg0 : i32, i32
  }
  func.func @transform_1(%arg0: i32) -> (i32, i32) {
    %c0_i32 = arith.constant 0 : i32
    %c0_i32_0 = arith.constant 0 : i32
    return %c0_i32, %arg0 : i32, i32
  }
  func.func @transform_2(%arg0: i32) -> (i32, i32) {
    %c0_i32 = arith.constant 0 : i32
    %c0_i32_0 = arith.constant 0 : i32
    %c0_i32_1 = arith.constant 0 : i32
    return %c0_i32, %c0_i32_0 : i32, i32
  }
  func.func @transform_3(%arg0: i32) -> (i32, i32) {
    %c0_i32 = arith.constant 0 : i32
    %c0_i32_0 = arith.constant 0 : i32
    %c0_i32_1 = arith.constant 0 : i32
    return %c0_i32, %c0_i32_0 : i32, i32
  }
  func.func @transform_4(%arg0: i32) -> (i32, i32) {
    %c0_i32 = arith.constant 0 : i32
    %c0_i32_0 = arith.constant 0 : i32
    return %c0_i32, %arg0 : i32, i32
  }
}

module attributes {stable_mosaic.version = 11 : i64} {
  func.func @_k_conv(%arg0: i32, %arg1: memref<72x32xbf16, #tpu.memory_space<vmem>>, %arg2: memref<32x72xbf16, #tpu.memory_space<vmem>>, %arg3: memref<32x1xf32, #tpu.memory_space<vmem>>, %arg4: memref<32x32xf32, #tpu.memory_space<vmem>>) attributes {dimension_semantics = [#tpu.dimension_semantics<parallel>], iteration_bounds = array<i64: 1>, scalar_prefetch = 0 : i64, scratch_operands = 0 : i64, tpu.core_type = #tpu.core_type<tc>, window_params = [{transform_indices = @transform_0, window_bounds = array<i64: 72, 32>}, {pipeline_mode = #tpu.pipeline_mode<synchronous>, transform_indices = @transform_1, window_bounds = array<i64: 32, 72>}, {pipeline_mode = #tpu.pipeline_mode<synchronous>, transform_indices = @transform_2, window_bounds = array<i64: 32, 1>}, {transform_indices = @transform_3, window_bounds = array<i64: 32, 32>}]} {
    %c0 = arith.constant 0 : index
    %c0_0 = arith.constant 0 : index
    %0 = vector.load %arg2[%c0, %c0_0] : memref<32x72xbf16, #tpu.memory_space<vmem>>, vector<32x72xbf16>
    %c0_1 = arith.constant 0 : index
    %c0_2 = arith.constant 0 : index
    %1 = vector.load %arg1[%c0_1, %c0_2] : memref<72x32xbf16, #tpu.memory_space<vmem>>, vector<72x32xbf16>
    %cst = arith.constant dense<0.000000e+00> : vector<32x32xf32>
    %2 = tpu.matmul %0, %1, %cst {dimension_numbers = #tpu.dot_dimension_numbers<[1], [0], [0], [1], [0, 0, 1, 1], [], []>} : vector<32x72xbf16>, vector<72x32xbf16>, vector<32x32xf32> -> vector<32x32xf32>
    %c0_3 = arith.constant 0 : index
    %c0_4 = arith.constant 0 : index
    %3 = vector.load %arg3[%c0_3, %c0_4] : memref<32x1xf32, #tpu.memory_space<vmem>>, vector<32x1xf32>
    %4 = vector.broadcast %3 : vector<32x1xf32> to vector<32x32xf32>
    %5 = arith.addf %2, %4 : vector<32x32xf32>
    %cst_5 = arith.constant 0.000000e+00 : f32
    %6 = vector.broadcast %cst_5 : f32 to vector<32x32xf32>
    %7 = arith.cmpf oge, %5, %6 : vector<32x32xf32>
    %cst_6 = arith.constant 0.00999999977 : f32
    %8 = vector.broadcast %cst_6 : f32 to vector<32x32xf32>
    %9 = arith.mulf %8, %5 : vector<32x32xf32>
    %10 = arith.select %7, %5, %9 : vector<32x32xi1>, vector<32x32xf32>
    %11 = tpu.iota {dimensions = array<i32: 0>} : vector<32x32xi32>
    %c16_i32 = arith.constant 16 : i32
    %12 = vector.broadcast %c16_i32 : i32 to vector<32x32xi32>
    %13 = arith.cmpi slt, %11, %12 : vector<32x32xi32>
    %14 = arith.select %13, %10, %5 : vector<32x32xi1>, vector<32x32xf32>
    %c0_7 = arith.constant 0 : index
    %c0_8 = arith.constant 0 : index
    %15 = vector.load %arg4[%c0_7, %c0_8] : memref<32x32xf32, #tpu.memory_space<vmem>>, vector<32x32xf32>
    tpu.vector_store %arg4[%c0_7, %c0_8], %14 {strides = array<i32>} : memref<32x32xf32, #tpu.memory_space<vmem>>, vector<32x32xf32>,
    return
  }
  func.func @transform_0(%arg0: i32) -> (i32, i32) {
    %c0_i32 = arith.constant 0 : i32
    %c0_i32_0 = arith.constant 0 : i32
    return %c0_i32, %arg0 : i32, i32
  }
  func.func @transform_1(%arg0: i32) -> (i32, i32) {
    %c0_i32 = arith.constant 0 : i32
    %c0_i32_0 = arith.constant 0 : i32
    %c0_i32_1 = arith.constant 0 : i32
    return %c0_i32, %c0_i32_0 : i32, i32
  }
  func.func @transform_2(%arg0: i32) -> (i32, i32) {
    %c0_i32 = arith.constant 0 : i32
    %c0_i32_0 = arith.constant 0 : i32
    %c0_i32_1 = arith.constant 0 : i32
    return %c0_i32, %c0_i32_0 : i32, i32
  }
  func.func @transform_3(%arg0: i32) -> (i32, i32) {
    %c0_i32 = arith.constant 0 : i32
    %c0_i32_0 = arith.constant 0 : i32
    return %c0_i32, %arg0 : i32, i32
  }
}

module attributes {stable_mosaic.version = 11 : i64} {
  func.func @_k_conv(%arg0: i32, %arg1: memref<16x32xbf16, #tpu.memory_space<vmem>>, %arg2: memref<8x16xbf16, #tpu.memory_space<vmem>>, %arg3: memref<8x1xf32, #tpu.memory_space<vmem>>, %arg4: memref<8x32xf32, #tpu.memory_space<vmem>>) attributes {dimension_semantics = [#tpu.dimension_semantics<parallel>], iteration_bounds = array<i64: 1>, scalar_prefetch = 0 : i64, scratch_operands = 0 : i64, tpu.core_type = #tpu.core_type<tc>, window_params = [{transform_indices = @transform_0, window_bounds = array<i64: 16, 32>}, {pipeline_mode = #tpu.pipeline_mode<synchronous>, transform_indices = @transform_1, window_bounds = array<i64: 8, 16>}, {pipeline_mode = #tpu.pipeline_mode<synchronous>, transform_indices = @transform_2, window_bounds = array<i64: 8, 1>}, {transform_indices = @transform_3, window_bounds = array<i64: 8, 32>}]} {
    %c0 = arith.constant 0 : index
    %c0_0 = arith.constant 0 : index
    %0 = vector.load %arg2[%c0, %c0_0] : memref<8x16xbf16, #tpu.memory_space<vmem>>, vector<8x16xbf16>
    %c0_1 = arith.constant 0 : index
    %c0_2 = arith.constant 0 : index
    %1 = vector.load %arg1[%c0_1, %c0_2] : memref<16x32xbf16, #tpu.memory_space<vmem>>, vector<16x32xbf16>
    %cst = arith.constant dense<0.000000e+00> : vector<8x32xf32>
    %2 = tpu.matmul %0, %1, %cst {dimension_numbers = #tpu.dot_dimension_numbers<[1], [0], [0], [1], [0, 0, 1, 1], [], []>} : vector<8x16xbf16>, vector<16x32xbf16>, vector<8x32xf32> -> vector<8x32xf32>
    %c0_3 = arith.constant 0 : index
    %c0_4 = arith.constant 0 : index
    %3 = vector.load %arg3[%c0_3, %c0_4] : memref<8x1xf32, #tpu.memory_space<vmem>>, vector<8x1xf32>
    %4 = vector.broadcast %3 : vector<8x1xf32> to vector<8x32xf32>
    %5 = arith.addf %2, %4 : vector<8x32xf32>
    %cst_5 = arith.constant 0.000000e+00 : f32
    %6 = vector.broadcast %cst_5 : f32 to vector<8x32xf32>
    %7 = arith.maximumf %5, %6 : vector<8x32xf32>
    %c0_6 = arith.constant 0 : index
    %c0_7 = arith.constant 0 : index
    %8 = vector.load %arg4[%c0_6, %c0_7] : memref<8x32xf32, #tpu.memory_space<vmem>>, vector<8x32xf32>
    tpu.vector_store %arg4[%c0_6, %c0_7], %7 {strides = array<i32>} : memref<8x32xf32, #tpu.memory_space<vmem>>, vector<8x32xf32>,
    return
  }
  func.func @transform_0(%arg0: i32) -> (i32, i32) {
    %c0_i32 = arith.constant 0 : i32
    %c0_i32_0 = arith.constant 0 : i32
    return %c0_i32, %arg0 : i32, i32
  }
  func.func @transform_1(%arg0: i32) -> (i32, i32) {
    %c0_i32 = arith.constant 0 : i32
    %c0_i32_0 = arith.constant 0 : i32
    %c0_i32_1 = arith.constant 0 : i32
    return %c0_i32, %c0_i32_0 : i32, i32
  }
  func.func @transform_2(%arg0: i32) -> (i32, i32) {
    %c0_i32 = arith.constant 0 : i32
    %c0_i32_0 = arith.constant 0 : i32
    %c0_i32_1 = arith.constant 0 : i32
    return %c0_i32, %c0_i32_0 : i32, i32
  }
  func.func @transform_3(%arg0: i32) -> (i32, i32) {
    %c0_i32 = arith.constant 0 : i32
    %c0_i32_0 = arith.constant 0 : i32
    return %c0_i32, %arg0 : i32, i32
  }
}

module attributes {stable_mosaic.version = 11 : i64} {
  func.func @_k_conv_gdn_res(%arg0: i32, %arg1: memref<144x32xbf16, #tpu.memory_space<vmem>>, %arg2: memref<16x32xf32, #tpu.memory_space<vmem>>, %arg3: memref<16x144xbf16, #tpu.memory_space<vmem>>, %arg4: memref<16x1xf32, #tpu.memory_space<vmem>>, %arg5: memref<16x16xf32, #tpu.memory_space<vmem>>, %arg6: memref<16x1xf32, #tpu.memory_space<vmem>>, %arg7: memref<16x32xf32, #tpu.memory_space<vmem>>) attributes {dimension_semantics = [#tpu.dimension_semantics<parallel>], iteration_bounds = array<i64: 1>, scalar_prefetch = 0 : i64, scratch_operands = 0 : i64, tpu.core_type = #tpu.core_type<tc>, window_params = [{transform_indices = @transform_0, window_bounds = array<i64: 144, 32>}, {transform_indices = @transform_1, window_bounds = array<i64: 16, 32>}, {pipeline_mode = #tpu.pipeline_mode<synchronous>, transform_indices = @transform_2, window_bounds = array<i64: 16, 144>}, {pipeline_mode = #tpu.pipeline_mode<synchronous>, transform_indices = @transform_3, window_bounds = array<i64: 16, 1>}, {pipeline_mode = #tpu.pipeline_mode<synchronous>, transform_indices = @transform_4, window_bounds = array<i64: 16, 16>}, {pipeline_mode = #tpu.pipeline_mode<synchronous>, transform_indices = @transform_5, window_bounds = array<i64: 16, 1>}, {transform_indices = @transform_6, window_bounds = array<i64: 16, 32>}]} {
    %c0 = arith.constant 0 : index
    %c0_0 = arith.constant 0 : index
    %0 = vector.load %arg3[%c0, %c0_0] : memref<16x144xbf16, #tpu.memory_space<vmem>>, vector<16x144xbf16>
    %c0_1 = arith.constant 0 : index
    %c0_2 = arith.constant 0 : index
    %1 = vector.load %arg1[%c0_1, %c0_2] : memref<144x32xbf16, #tpu.memory_space<vmem>>, vector<144x32xbf16>
    %cst = arith.constant dense<0.000000e+00> : vector<16x32xf32>
    %2 = tpu.matmul %0, %1, %cst {dimension_numbers = #tpu.dot_dimension_numbers<[1], [0], [0], [1], [0, 0, 1, 1], [], []>} : vector<16x144xbf16>, vector<144x32xbf16>, vector<16x32xf32> -> vector<16x32xf32>
    %c0_3 = arith.constant 0 : index
    %c0_4 = arith.constant 0 : index
    %3 = vector.load %arg4[%c0_3, %c0_4] : memref<16x1xf32, #tpu.memory_space<vmem>>, vector<16x1xf32>
    %4 = vector.broadcast %3 : vector<16x1xf32> to vector<16x32xf32>
    %5 = arith.addf %2, %4 : vector<16x32xf32>
    %c0_5 = arith.constant 0 : index
    %c0_6 = arith.constant 0 : index
    %6 = vector.load %arg5[%c0_5, %c0_6] : memref<16x16xf32, #tpu.memory_space<vmem>>, vector<16x16xf32>
    %7 = arith.mulf %5, %5 : vector<16x32xf32>
    %cst_7 = arith.constant dense<0.000000e+00> : vector<16x32xf32>
    %8 = tpu.matmul %6, %7, %cst_7 {dimension_numbers = #tpu.dot_dimension_numbers<[1], [0], [0], [1], [0, 0, 1, 1], [], []>} : vector<16x16xf32>, vector<16x32xf32>, vector<16x32xf32> -> vector<16x32xf32>
    %c0_8 = arith.constant 0 : index
    %c0_9 = arith.constant 0 : index
    %9 = vector.load %arg6[%c0_8, %c0_9] : memref<16x1xf32, #tpu.memory_space<vmem>>, vector<16x1xf32>
    %10 = vector.broadcast %9 : vector<16x1xf32> to vector<16x32xf32>
    %11 = arith.addf %8, %10 : vector<16x32xf32>
    %cst_10 = arith.constant 9.99999996E-13 : f32
    %12 = vector.broadcast %cst_10 : f32 to vector<16x32xf32>
    %13 = arith.maximumf %11, %12 : vector<16x32xf32>
    %14 = math.rsqrt %13 : vector<16x32xf32>
    %15 = arith.mulf %5, %14 : vector<16x32xf32>
    %c0_11 = arith.constant 0 : index
    %c0_12 = arith.constant 0 : index
    %16 = vector.load %arg2[%c0_11, %c0_12] : memref<16x32xf32, #tpu.memory_space<vmem>>, vector<16x32xf32>
    %17 = arith.addf %15, %16 : vector<16x32xf32>
    %c0_13 = arith.constant 0 : index
    %c0_14 = arith.constant 0 : index
    %18 = vector.load %arg7[%c0_13, %c0_14] : memref<16x32xf32, #tpu.memory_space<vmem>>, vector<16x32xf32>
    tpu.vector_store %arg7[%c0_13, %c0_14], %17 {strides = array<i32>} : memref<16x32xf32, #tpu.memory_space<vmem>>, vector<16x32xf32>,
    return
  }
  func.func @transform_0(%arg0: i32) -> (i32, i32) {
    %c0_i32 = arith.constant 0 : i32
    %c0_i32_0 = arith.constant 0 : i32
    return %c0_i32, %arg0 : i32, i32
  }
  func.func @transform_1(%arg0: i32) -> (i32, i32) {
    %c0_i32 = arith.constant 0 : i32
    %c0_i32_0 = arith.constant 0 : i32
    return %c0_i32, %arg0 : i32, i32
  }
  func.func @transform_2(%arg0: i32) -> (i32, i32) {
    %c0_i32 = arith.constant 0 : i32
    %c0_i32_0 = arith.constant 0 : i32
    %c0_i32_1 = arith.constant 0 : i32
    return %c0_i32, %c0_i32_0 : i32, i32
  }
  func.func @transform_3(%arg0: i32) -> (i32, i32) {
    %c0_i32 = arith.constant 0 : i32
    %c0_i32_0 = arith.constant 0 : i32
    %c0_i32_1 = arith.constant 0 : i32
    return %c0_i32, %c0_i32_0 : i32, i32
  }
  func.func @transform_4(%arg0: i32) -> (i32, i32) {
    %c0_i32 = arith.constant 0 : i32
    %c0_i32_0 = arith.constant 0 : i32
    %c0_i32_1 = arith.constant 0 : i32
    return %c0_i32, %c0_i32_0 : i32, i32
  }
  func.func @transform_5(%arg0: i32) -> (i32, i32) {
    %c0_i32 = arith.constant 0 : i32
    %c0_i32_0 = arith.constant 0 : i32
    %c0_i32_1 = arith.constant 0 : i32
    return %c0_i32, %c0_i32_0 : i32, i32
  }
  func.func @transform_6(%arg0: i32) -> (i32, i32) {
    %c0_i32 = arith.constant 0 : i32
    %c0_i32_0 = arith.constant 0 : i32
    return %c0_i32, %arg0 : i32, i32
  }
}

module attributes {stable_mosaic.version = 11 : i64} {
  func.func @_k_bneck_tail(%arg0: i32, %arg1: memref<72x32xbf16, #tpu.memory_space<vmem>>, %arg2: memref<16x32xf32, #tpu.memory_space<vmem>>, %arg3: memref<8x72xbf16, #tpu.memory_space<vmem>>, %arg4: memref<8x1xf32, #tpu.memory_space<vmem>>, %arg5: memref<16x8xbf16, #tpu.memory_space<vmem>>, %arg6: memref<16x1xf32, #tpu.memory_space<vmem>>, %arg7: memref<16x32xf32, #tpu.memory_space<vmem>>) attributes {dimension_semantics = [#tpu.dimension_semantics<parallel>], iteration_bounds = array<i64: 1>, scalar_prefetch = 0 : i64, scratch_operands = 0 : i64, tpu.core_type = #tpu.core_type<tc>, window_params = [{transform_indices = @transform_0, window_bounds = array<i64: 72, 32>}, {transform_indices = @transform_1, window_bounds = array<i64: 16, 32>}, {pipeline_mode = #tpu.pipeline_mode<synchronous>, transform_indices = @transform_2, window_bounds = array<i64: 8, 72>}, {pipeline_mode = #tpu.pipeline_mode<synchronous>, transform_indices = @transform_3, window_bounds = array<i64: 8, 1>}, {pipeline_mode = #tpu.pipeline_mode<synchronous>, transform_indices = @transform_4, window_bounds = array<i64: 16, 8>}, {pipeline_mode = #tpu.pipeline_mode<synchronous>, transform_indices = @transform_5, window_bounds = array<i64: 16, 1>}, {transform_indices = @transform_6, window_bounds = array<i64: 16, 32>}]} {
    %c0 = arith.constant 0 : index
    %c0_0 = arith.constant 0 : index
    %0 = vector.load %arg3[%c0, %c0_0] : memref<8x72xbf16, #tpu.memory_space<vmem>>, vector<8x72xbf16>
    %c0_1 = arith.constant 0 : index
    %c0_2 = arith.constant 0 : index
    %1 = vector.load %arg1[%c0_1, %c0_2] : memref<72x32xbf16, #tpu.memory_space<vmem>>, vector<72x32xbf16>
    %cst = arith.constant dense<0.000000e+00> : vector<8x32xf32>
    %2 = tpu.matmul %0, %1, %cst {dimension_numbers = #tpu.dot_dimension_numbers<[1], [0], [0], [1], [0, 0, 1, 1], [], []>} : vector<8x72xbf16>, vector<72x32xbf16>, vector<8x32xf32> -> vector<8x32xf32>
    %c0_3 = arith.constant 0 : index
    %c0_4 = arith.constant 0 : index
    %3 = vector.load %arg4[%c0_3, %c0_4] : memref<8x1xf32, #tpu.memory_space<vmem>>, vector<8x1xf32>
    %4 = vector.broadcast %3 : vector<8x1xf32> to vector<8x32xf32>
    %5 = arith.addf %2, %4 : vector<8x32xf32>
    %cst_5 = arith.constant 0.000000e+00 : f32
    %6 = vector.broadcast %cst_5 : f32 to vector<8x32xf32>
    %7 = arith.maximumf %5, %6 : vector<8x32xf32>
    %8 = arith.truncf %7 : vector<8x32xf32> to vector<8x32xbf16>
    %c0_6 = arith.constant 0 : index
    %c0_7 = arith.constant 0 : index
    %9 = vector.load %arg5[%c0_6, %c0_7] : memref<16x8xbf16, #tpu.memory_space<vmem>>, vector<16x8xbf16>
    %cst_8 = arith.constant dense<0.000000e+00> : vector<16x32xf32>
    %10 = tpu.matmul %9, %8, %cst_8 {dimension_numbers = #tpu.dot_dimension_numbers<[1], [0], [0], [1], [0, 0, 1, 1], [], []>} : vector<16x8xbf16>, vector<8x32xbf16>, vector<16x32xf32> -> vector<16x32xf32>
    %c0_9 = arith.constant 0 : index
    %c0_10 = arith.constant 0 : index
    %11 = vector.load %arg6[%c0_9, %c0_10] : memref<16x1xf32, #tpu.memory_space<vmem>>, vector<16x1xf32>
    %12 = vector.broadcast %11 : vector<16x1xf32> to vector<16x32xf32>
    %13 = arith.addf %10, %12 : vector<16x32xf32>
    %c0_11 = arith.constant 0 : index
    %c0_12 = arith.constant 0 : index
    %14 = vector.load %arg2[%c0_11, %c0_12] : memref<16x32xf32, #tpu.memory_space<vmem>>, vector<16x32xf32>
    %15 = arith.addf %13, %14 : vector<16x32xf32>
    %c0_13 = arith.constant 0 : index
    %c0_14 = arith.constant 0 : index
    %16 = vector.load %arg7[%c0_13, %c0_14] : memref<16x32xf32, #tpu.memory_space<vmem>>, vector<16x32xf32>
    tpu.vector_store %arg7[%c0_13, %c0_14], %15 {strides = array<i32>} : memref<16x32xf32, #tpu.memory_space<vmem>>, vector<16x32xf32>,
    return
  }
  func.func @transform_0(%arg0: i32) -> (i32, i32) {
    %c0_i32 = arith.constant 0 : i32
    %c0_i32_0 = arith.constant 0 : i32
    return %c0_i32, %arg0 : i32, i32
  }
  func.func @transform_1(%arg0: i32) -> (i32, i32) {
    %c0_i32 = arith.constant 0 : i32
    %c0_i32_0 = arith.constant 0 : i32
    return %c0_i32, %arg0 : i32, i32
  }
  func.func @transform_2(%arg0: i32) -> (i32, i32) {
    %c0_i32 = arith.constant 0 : i32
    %c0_i32_0 = arith.constant 0 : i32
    %c0_i32_1 = arith.constant 0 : i32
    return %c0_i32, %c0_i32_0 : i32, i32
  }
  func.func @transform_3(%arg0: i32) -> (i32, i32) {
    %c0_i32 = arith.constant 0 : i32
    %c0_i32_0 = arith.constant 0 : i32
    %c0_i32_1 = arith.constant 0 : i32
    return %c0_i32, %c0_i32_0 : i32, i32
  }
  func.func @transform_4(%arg0: i32) -> (i32, i32) {
    %c0_i32 = arith.constant 0 : i32
    %c0_i32_0 = arith.constant 0 : i32
    %c0_i32_1 = arith.constant 0 : i32
    return %c0_i32, %c0_i32_0 : i32, i32
  }
  func.func @transform_5(%arg0: i32) -> (i32, i32) {
    %c0_i32 = arith.constant 0 : i32
    %c0_i32_0 = arith.constant 0 : i32
    %c0_i32_1 = arith.constant 0 : i32
    return %c0_i32, %c0_i32_0 : i32, i32
  }
  func.func @transform_6(%arg0: i32) -> (i32, i32) {
    %c0_i32 = arith.constant 0 : i32
    %c0_i32_0 = arith.constant 0 : i32
    return %c0_i32, %arg0 : i32, i32
  }
}

module attributes {stable_mosaic.version = 11 : i64} {
  func.func @_k_conv(%arg0: i32, %arg1: memref<72x32xbf16, #tpu.memory_space<vmem>>, %arg2: memref<8x72xbf16, #tpu.memory_space<vmem>>, %arg3: memref<8x1xf32, #tpu.memory_space<vmem>>, %arg4: memref<8x32xf32, #tpu.memory_space<vmem>>) attributes {dimension_semantics = [#tpu.dimension_semantics<parallel>], iteration_bounds = array<i64: 1>, scalar_prefetch = 0 : i64, scratch_operands = 0 : i64, tpu.core_type = #tpu.core_type<tc>, window_params = [{transform_indices = @transform_0, window_bounds = array<i64: 72, 32>}, {pipeline_mode = #tpu.pipeline_mode<synchronous>, transform_indices = @transform_1, window_bounds = array<i64: 8, 72>}, {pipeline_mode = #tpu.pipeline_mode<synchronous>, transform_indices = @transform_2, window_bounds = array<i64: 8, 1>}, {transform_indices = @transform_3, window_bounds = array<i64: 8, 32>}]} {
    %c0 = arith.constant 0 : index
    %c0_0 = arith.constant 0 : index
    %0 = vector.load %arg2[%c0, %c0_0] : memref<8x72xbf16, #tpu.memory_space<vmem>>, vector<8x72xbf16>
    %c0_1 = arith.constant 0 : index
    %c0_2 = arith.constant 0 : index
    %1 = vector.load %arg1[%c0_1, %c0_2] : memref<72x32xbf16, #tpu.memory_space<vmem>>, vector<72x32xbf16>
    %cst = arith.constant dense<0.000000e+00> : vector<8x32xf32>
    %2 = tpu.matmul %0, %1, %cst {dimension_numbers = #tpu.dot_dimension_numbers<[1], [0], [0], [1], [0, 0, 1, 1], [], []>} : vector<8x72xbf16>, vector<72x32xbf16>, vector<8x32xf32> -> vector<8x32xf32>
    %c0_3 = arith.constant 0 : index
    %c0_4 = arith.constant 0 : index
    %3 = vector.load %arg3[%c0_3, %c0_4] : memref<8x1xf32, #tpu.memory_space<vmem>>, vector<8x1xf32>
    %4 = vector.broadcast %3 : vector<8x1xf32> to vector<8x32xf32>
    %5 = arith.addf %2, %4 : vector<8x32xf32>
    %c0_5 = arith.constant 0 : index
    %c0_6 = arith.constant 0 : index
    %6 = vector.load %arg4[%c0_5, %c0_6] : memref<8x32xf32, #tpu.memory_space<vmem>>, vector<8x32xf32>
    tpu.vector_store %arg4[%c0_5, %c0_6], %5 {strides = array<i32>} : memref<8x32xf32, #tpu.memory_space<vmem>>, vector<8x32xf32>,
    return
  }
  func.func @transform_0(%arg0: i32) -> (i32, i32) {
    %c0_i32 = arith.constant 0 : i32
    %c0_i32_0 = arith.constant 0 : i32
    return %c0_i32, %arg0 : i32, i32
  }
  func.func @transform_1(%arg0: i32) -> (i32, i32) {
    %c0_i32 = arith.constant 0 : i32
    %c0_i32_0 = arith.constant 0 : i32
    %c0_i32_1 = arith.constant 0 : i32
    return %c0_i32, %c0_i32_0 : i32, i32
  }
  func.func @transform_2(%arg0: i32) -> (i32, i32) {
    %c0_i32 = arith.constant 0 : i32
    %c0_i32_0 = arith.constant 0 : i32
    %c0_i32_1 = arith.constant 0 : i32
    return %c0_i32, %c0_i32_0 : i32, i32
  }
  func.func @transform_3(%arg0: i32) -> (i32, i32) {
    %c0_i32 = arith.constant 0 : i32
    %c0_i32_0 = arith.constant 0 : i32
    return %c0_i32, %arg0 : i32, i32
  }
}

module attributes {stable_mosaic.version = 11 : i64} {
  func.func @_k_conv(%arg0: i32, %arg1: memref<8x32xbf16, #tpu.memory_space<vmem>>, %arg2: memref<8x8xbf16, #tpu.memory_space<vmem>>, %arg3: memref<8x1xf32, #tpu.memory_space<vmem>>, %arg4: memref<8x32xf32, #tpu.memory_space<vmem>>) attributes {dimension_semantics = [#tpu.dimension_semantics<parallel>], iteration_bounds = array<i64: 1>, scalar_prefetch = 0 : i64, scratch_operands = 0 : i64, tpu.core_type = #tpu.core_type<tc>, window_params = [{transform_indices = @transform_0, window_bounds = array<i64: 8, 32>}, {pipeline_mode = #tpu.pipeline_mode<synchronous>, transform_indices = @transform_1, window_bounds = array<i64: 8, 8>}, {pipeline_mode = #tpu.pipeline_mode<synchronous>, transform_indices = @transform_2, window_bounds = array<i64: 8, 1>}, {transform_indices = @transform_3, window_bounds = array<i64: 8, 32>}]} {
    %c0 = arith.constant 0 : index
    %c0_0 = arith.constant 0 : index
    %0 = vector.load %arg2[%c0, %c0_0] : memref<8x8xbf16, #tpu.memory_space<vmem>>, vector<8x8xbf16>
    %c0_1 = arith.constant 0 : index
    %c0_2 = arith.constant 0 : index
    %1 = vector.load %arg1[%c0_1, %c0_2] : memref<8x32xbf16, #tpu.memory_space<vmem>>, vector<8x32xbf16>
    %cst = arith.constant dense<0.000000e+00> : vector<8x32xf32>
    %2 = tpu.matmul %0, %1, %cst {dimension_numbers = #tpu.dot_dimension_numbers<[1], [0], [0], [1], [0, 0, 1, 1], [], []>} : vector<8x8xbf16>, vector<8x32xbf16>, vector<8x32xf32> -> vector<8x32xf32>
    %c0_3 = arith.constant 0 : index
    %c0_4 = arith.constant 0 : index
    %3 = vector.load %arg3[%c0_3, %c0_4] : memref<8x1xf32, #tpu.memory_space<vmem>>, vector<8x1xf32>
    %4 = vector.broadcast %3 : vector<8x1xf32> to vector<8x32xf32>
    %5 = arith.addf %2, %4 : vector<8x32xf32>
    %c0_5 = arith.constant 0 : index
    %c0_6 = arith.constant 0 : index
    %6 = vector.load %arg4[%c0_5, %c0_6] : memref<8x32xf32, #tpu.memory_space<vmem>>, vector<8x32xf32>
    tpu.vector_store %arg4[%c0_5, %c0_6], %5 {strides = array<i32>} : memref<8x32xf32, #tpu.memory_space<vmem>>, vector<8x32xf32>,
    return
  }
  func.func @transform_0(%arg0: i32) -> (i32, i32) {
    %c0_i32 = arith.constant 0 : i32
    %c0_i32_0 = arith.constant 0 : i32
    return %c0_i32, %arg0 : i32, i32
  }
  func.func @transform_1(%arg0: i32) -> (i32, i32) {
    %c0_i32 = arith.constant 0 : i32
    %c0_i32_0 = arith.constant 0 : i32
    %c0_i32_1 = arith.constant 0 : i32
    return %c0_i32, %c0_i32_0 : i32, i32
  }
  func.func @transform_2(%arg0: i32) -> (i32, i32) {
    %c0_i32 = arith.constant 0 : i32
    %c0_i32_0 = arith.constant 0 : i32
    %c0_i32_1 = arith.constant 0 : i32
    return %c0_i32, %c0_i32_0 : i32, i32
  }
  func.func @transform_3(%arg0: i32) -> (i32, i32) {
    %c0_i32 = arith.constant 0 : i32
    %c0_i32_0 = arith.constant 0 : i32
    return %c0_i32, %arg0 : i32, i32
  }
}

module attributes {stable_mosaic.version = 11 : i64} {
  func.func @_k_conv(%arg0: i32, %arg1: memref<72x32xbf16, #tpu.memory_space<vmem>>, %arg2: memref<16x72xbf16, #tpu.memory_space<vmem>>, %arg3: memref<16x1xf32, #tpu.memory_space<vmem>>, %arg4: memref<16x32xf32, #tpu.memory_space<vmem>>) attributes {dimension_semantics = [#tpu.dimension_semantics<parallel>], iteration_bounds = array<i64: 1>, scalar_prefetch = 0 : i64, scratch_operands = 0 : i64, tpu.core_type = #tpu.core_type<tc>, window_params = [{transform_indices = @transform_0, window_bounds = array<i64: 72, 32>}, {pipeline_mode = #tpu.pipeline_mode<synchronous>, transform_indices = @transform_1, window_bounds = array<i64: 16, 72>}, {pipeline_mode = #tpu.pipeline_mode<synchronous>, transform_indices = @transform_2, window_bounds = array<i64: 16, 1>}, {transform_indices = @transform_3, window_bounds = array<i64: 16, 32>}]} {
    %c0 = arith.constant 0 : index
    %c0_0 = arith.constant 0 : index
    %0 = vector.load %arg2[%c0, %c0_0] : memref<16x72xbf16, #tpu.memory_space<vmem>>, vector<16x72xbf16>
    %c0_1 = arith.constant 0 : index
    %c0_2 = arith.constant 0 : index
    %1 = vector.load %arg1[%c0_1, %c0_2] : memref<72x32xbf16, #tpu.memory_space<vmem>>, vector<72x32xbf16>
    %cst = arith.constant dense<0.000000e+00> : vector<16x32xf32>
    %2 = tpu.matmul %0, %1, %cst {dimension_numbers = #tpu.dot_dimension_numbers<[1], [0], [0], [1], [0, 0, 1, 1], [], []>} : vector<16x72xbf16>, vector<72x32xbf16>, vector<16x32xf32> -> vector<16x32xf32>
    %c0_3 = arith.constant 0 : index
    %c0_4 = arith.constant 0 : index
    %3 = vector.load %arg3[%c0_3, %c0_4] : memref<16x1xf32, #tpu.memory_space<vmem>>, vector<16x1xf32>
    %4 = vector.broadcast %3 : vector<16x1xf32> to vector<16x32xf32>
    %5 = arith.addf %2, %4 : vector<16x32xf32>
    %cst_5 = arith.constant 0.000000e+00 : f32
    %6 = vector.broadcast %cst_5 : f32 to vector<16x32xf32>
    %7 = arith.maximumf %5, %6 : vector<16x32xf32>
    %c0_6 = arith.constant 0 : index
    %c0_7 = arith.constant 0 : index
    %8 = vector.load %arg4[%c0_6, %c0_7] : memref<16x32xf32, #tpu.memory_space<vmem>>, vector<16x32xf32>
    tpu.vector_store %arg4[%c0_6, %c0_7], %7 {strides = array<i32>} : memref<16x32xf32, #tpu.memory_space<vmem>>, vector<16x32xf32>,
    return
  }
  func.func @transform_0(%arg0: i32) -> (i32, i32) {
    %c0_i32 = arith.constant 0 : i32
    %c0_i32_0 = arith.constant 0 : i32
    return %c0_i32, %arg0 : i32, i32
  }
  func.func @transform_1(%arg0: i32) -> (i32, i32) {
    %c0_i32 = arith.constant 0 : i32
    %c0_i32_0 = arith.constant 0 : i32
    %c0_i32_1 = arith.constant 0 : i32
    return %c0_i32, %c0_i32_0 : i32, i32
  }
  func.func @transform_2(%arg0: i32) -> (i32, i32) {
    %c0_i32 = arith.constant 0 : i32
    %c0_i32_0 = arith.constant 0 : i32
    %c0_i32_1 = arith.constant 0 : i32
    return %c0_i32, %c0_i32_0 : i32, i32
  }
  func.func @transform_3(%arg0: i32) -> (i32, i32) {
    %c0_i32 = arith.constant 0 : i32
    %c0_i32_0 = arith.constant 0 : i32
    return %c0_i32, %arg0 : i32, i32
  }
}

module attributes {stable_mosaic.version = 11 : i64} {
  func.func @_k_sft_affine(%arg0: i32, %arg1: memref<144x32xbf16, #tpu.memory_space<vmem>>, %arg2: memref<16x32xf32, #tpu.memory_space<vmem>>, %arg3: memref<32x144xbf16, #tpu.memory_space<vmem>>, %arg4: memref<32x1xf32, #tpu.memory_space<vmem>>, %arg5: memref<16x32xf32, #tpu.memory_space<vmem>>) attributes {dimension_semantics = [#tpu.dimension_semantics<parallel>], iteration_bounds = array<i64: 1>, scalar_prefetch = 0 : i64, scratch_operands = 0 : i64, tpu.core_type = #tpu.core_type<tc>, window_params = [{transform_indices = @transform_0, window_bounds = array<i64: 144, 32>}, {transform_indices = @transform_1, window_bounds = array<i64: 16, 32>}, {pipeline_mode = #tpu.pipeline_mode<synchronous>, transform_indices = @transform_2, window_bounds = array<i64: 32, 144>}, {pipeline_mode = #tpu.pipeline_mode<synchronous>, transform_indices = @transform_3, window_bounds = array<i64: 32, 1>}, {transform_indices = @transform_4, window_bounds = array<i64: 16, 32>}]} {
    %c0 = arith.constant 0 : index
    %c0_0 = arith.constant 0 : index
    %0 = vector.load %arg3[%c0, %c0_0] : memref<32x144xbf16, #tpu.memory_space<vmem>>, vector<32x144xbf16>
    %c0_1 = arith.constant 0 : index
    %c0_2 = arith.constant 0 : index
    %1 = vector.load %arg1[%c0_1, %c0_2] : memref<144x32xbf16, #tpu.memory_space<vmem>>, vector<144x32xbf16>
    %cst = arith.constant dense<0.000000e+00> : vector<32x32xf32>
    %2 = tpu.matmul %0, %1, %cst {dimension_numbers = #tpu.dot_dimension_numbers<[1], [0], [0], [1], [0, 0, 1, 1], [], []>} : vector<32x144xbf16>, vector<144x32xbf16>, vector<32x32xf32> -> vector<32x32xf32>
    %c0_3 = arith.constant 0 : index
    %c0_4 = arith.constant 0 : index
    %3 = vector.load %arg4[%c0_3, %c0_4] : memref<32x1xf32, #tpu.memory_space<vmem>>, vector<32x1xf32>
    %4 = vector.broadcast %3 : vector<32x1xf32> to vector<32x32xf32>
    %5 = arith.addf %2, %4 : vector<32x32xf32>
    %6 = vector.extract_strided_slice %5 {offsets = [0, 0], sizes = [16, 32], strides = [1, 1]} : vector<32x32xf32> to vector<16x32xf32>
    %7 = vector.extract_strided_slice %5 {offsets = [16, 0], sizes = [16, 32], strides = [1, 1]} : vector<32x32xf32> to vector<16x32xf32>
    %c0_5 = arith.constant 0 : index
    %c0_6 = arith.constant 0 : index
    %8 = vector.load %arg2[%c0_5, %c0_6] : memref<16x32xf32, #tpu.memory_space<vmem>>, vector<16x32xf32>
    %cst_7 = arith.constant 1.000000e+00 : f32
    %9 = vector.broadcast %cst_7 : f32 to vector<16x32xf32>
    %10 = arith.addf %9, %6 : vector<16x32xf32>
    %11 = arith.mulf %8, %10 : vector<16x32xf32>
    %12 = arith.addf %11, %7 : vector<16x32xf32>
    %c0_8 = arith.constant 0 : index
    %c0_9 = arith.constant 0 : index
    %13 = vector.load %arg5[%c0_8, %c0_9] : memref<16x32xf32, #tpu.memory_space<vmem>>, vector<16x32xf32>
    tpu.vector_store %arg5[%c0_8, %c0_9], %12 {strides = array<i32>} : memref<16x32xf32, #tpu.memory_space<vmem>>, vector<16x32xf32>,
    return
  }
  func.func @transform_0(%arg0: i32) -> (i32, i32) {
    %c0_i32 = arith.constant 0 : i32
    %c0_i32_0 = arith.constant 0 : i32
    return %c0_i32, %arg0 : i32, i32
  }
  func.func @transform_1(%arg0: i32) -> (i32, i32) {
    %c0_i32 = arith.constant 0 : i32
    %c0_i32_0 = arith.constant 0 : i32
    return %c0_i32, %arg0 : i32, i32
  }
  func.func @transform_2(%arg0: i32) -> (i32, i32) {
    %c0_i32 = arith.constant 0 : i32
    %c0_i32_0 = arith.constant 0 : i32
    %c0_i32_1 = arith.constant 0 : i32
    return %c0_i32, %c0_i32_0 : i32, i32
  }
  func.func @transform_3(%arg0: i32) -> (i32, i32) {
    %c0_i32 = arith.constant 0 : i32
    %c0_i32_0 = arith.constant 0 : i32
    %c0_i32_1 = arith.constant 0 : i32
    return %c0_i32, %c0_i32_0 : i32, i32
  }
  func.func @transform_4(%arg0: i32) -> (i32, i32) {
    %c0_i32 = arith.constant 0 : i32
    %c0_i32_0 = arith.constant 0 : i32
    return %c0_i32, %arg0 : i32, i32
  }
}

module attributes {stable_mosaic.version = 11 : i64} {
  func.func @_k_conv(%arg0: i32, %arg1: memref<144x32xbf16, #tpu.memory_space<vmem>>, %arg2: memref<16x144xbf16, #tpu.memory_space<vmem>>, %arg3: memref<16x1xf32, #tpu.memory_space<vmem>>, %arg4: memref<16x32xf32, #tpu.memory_space<vmem>>) attributes {dimension_semantics = [#tpu.dimension_semantics<parallel>], iteration_bounds = array<i64: 1>, scalar_prefetch = 0 : i64, scratch_operands = 0 : i64, tpu.core_type = #tpu.core_type<tc>, window_params = [{transform_indices = @transform_0, window_bounds = array<i64: 144, 32>}, {pipeline_mode = #tpu.pipeline_mode<synchronous>, transform_indices = @transform_1, window_bounds = array<i64: 16, 144>}, {pipeline_mode = #tpu.pipeline_mode<synchronous>, transform_indices = @transform_2, window_bounds = array<i64: 16, 1>}, {transform_indices = @transform_3, window_bounds = array<i64: 16, 32>}]} {
    %c0 = arith.constant 0 : index
    %c0_0 = arith.constant 0 : index
    %0 = vector.load %arg2[%c0, %c0_0] : memref<16x144xbf16, #tpu.memory_space<vmem>>, vector<16x144xbf16>
    %c0_1 = arith.constant 0 : index
    %c0_2 = arith.constant 0 : index
    %1 = vector.load %arg1[%c0_1, %c0_2] : memref<144x32xbf16, #tpu.memory_space<vmem>>, vector<144x32xbf16>
    %cst = arith.constant dense<0.000000e+00> : vector<16x32xf32>
    %2 = tpu.matmul %0, %1, %cst {dimension_numbers = #tpu.dot_dimension_numbers<[1], [0], [0], [1], [0, 0, 1, 1], [], []>} : vector<16x144xbf16>, vector<144x32xbf16>, vector<16x32xf32> -> vector<16x32xf32>
    %c0_3 = arith.constant 0 : index
    %c0_4 = arith.constant 0 : index
    %3 = vector.load %arg3[%c0_3, %c0_4] : memref<16x1xf32, #tpu.memory_space<vmem>>, vector<16x1xf32>
    %4 = vector.broadcast %3 : vector<16x1xf32> to vector<16x32xf32>
    %5 = arith.addf %2, %4 : vector<16x32xf32>
    %c0_5 = arith.constant 0 : index
    %c0_6 = arith.constant 0 : index
    %6 = vector.load %arg4[%c0_5, %c0_6] : memref<16x32xf32, #tpu.memory_space<vmem>>, vector<16x32xf32>
    tpu.vector_store %arg4[%c0_5, %c0_6], %5 {strides = array<i32>} : memref<16x32xf32, #tpu.memory_space<vmem>>, vector<16x32xf32>,
    return
  }
  func.func @transform_0(%arg0: i32) -> (i32, i32) {
    %c0_i32 = arith.constant 0 : i32
    %c0_i32_0 = arith.constant 0 : i32
    return %c0_i32, %arg0 : i32, i32
  }
  func.func @transform_1(%arg0: i32) -> (i32, i32) {
    %c0_i32 = arith.constant 0 : i32
    %c0_i32_0 = arith.constant 0 : i32
    %c0_i32_1 = arith.constant 0 : i32
    return %c0_i32, %c0_i32_0 : i32, i32
  }
  func.func @transform_2(%arg0: i32) -> (i32, i32) {
    %c0_i32 = arith.constant 0 : i32
    %c0_i32_0 = arith.constant 0 : i32
    %c0_i32_1 = arith.constant 0 : i32
    return %c0_i32, %c0_i32_0 : i32, i32
  }
  func.func @transform_3(%arg0: i32) -> (i32, i32) {
    %c0_i32 = arith.constant 0 : i32
    %c0_i32_0 = arith.constant 0 : i32
    return %c0_i32, %arg0 : i32, i32
  }
}

module attributes {stable_mosaic.version = 11 : i64} {
  func.func @_k_sft_affine(%arg0: i32, %arg1: memref<144x32xbf16, #tpu.memory_space<vmem>>, %arg2: memref<16x32xf32, #tpu.memory_space<vmem>>, %arg3: memref<32x144xbf16, #tpu.memory_space<vmem>>, %arg4: memref<32x1xf32, #tpu.memory_space<vmem>>, %arg5: memref<16x32xf32, #tpu.memory_space<vmem>>) attributes {dimension_semantics = [#tpu.dimension_semantics<parallel>], iteration_bounds = array<i64: 1>, scalar_prefetch = 0 : i64, scratch_operands = 0 : i64, tpu.core_type = #tpu.core_type<tc>, window_params = [{transform_indices = @transform_0, window_bounds = array<i64: 144, 32>}, {transform_indices = @transform_1, window_bounds = array<i64: 16, 32>}, {pipeline_mode = #tpu.pipeline_mode<synchronous>, transform_indices = @transform_2, window_bounds = array<i64: 32, 144>}, {pipeline_mode = #tpu.pipeline_mode<synchronous>, transform_indices = @transform_3, window_bounds = array<i64: 32, 1>}, {transform_indices = @transform_4, window_bounds = array<i64: 16, 32>}]} {
    %c0 = arith.constant 0 : index
    %c0_0 = arith.constant 0 : index
    %0 = vector.load %arg3[%c0, %c0_0] : memref<32x144xbf16, #tpu.memory_space<vmem>>, vector<32x144xbf16>
    %c0_1 = arith.constant 0 : index
    %c0_2 = arith.constant 0 : index
    %1 = vector.load %arg1[%c0_1, %c0_2] : memref<144x32xbf16, #tpu.memory_space<vmem>>, vector<144x32xbf16>
    %cst = arith.constant dense<0.000000e+00> : vector<32x32xf32>
    %2 = tpu.matmul %0, %1, %cst {dimension_numbers = #tpu.dot_dimension_numbers<[1], [0], [0], [1], [0, 0, 1, 1], [], []>} : vector<32x144xbf16>, vector<144x32xbf16>, vector<32x32xf32> -> vector<32x32xf32>
    %c0_3 = arith.constant 0 : index
    %c0_4 = arith.constant 0 : index
    %3 = vector.load %arg4[%c0_3, %c0_4] : memref<32x1xf32, #tpu.memory_space<vmem>>, vector<32x1xf32>
    %4 = vector.broadcast %3 : vector<32x1xf32> to vector<32x32xf32>
    %5 = arith.addf %2, %4 : vector<32x32xf32>
    %6 = vector.extract_strided_slice %5 {offsets = [0, 0], sizes = [16, 32], strides = [1, 1]} : vector<32x32xf32> to vector<16x32xf32>
    %7 = vector.extract_strided_slice %5 {offsets = [16, 0], sizes = [16, 32], strides = [1, 1]} : vector<32x32xf32> to vector<16x32xf32>
    %c0_5 = arith.constant 0 : index
    %c0_6 = arith.constant 0 : index
    %8 = vector.load %arg2[%c0_5, %c0_6] : memref<16x32xf32, #tpu.memory_space<vmem>>, vector<16x32xf32>
    %cst_7 = arith.constant 1.000000e+00 : f32
    %9 = vector.broadcast %cst_7 : f32 to vector<16x32xf32>
    %10 = arith.addf %9, %6 : vector<16x32xf32>
    %11 = arith.mulf %8, %10 : vector<16x32xf32>
    %12 = arith.addf %11, %7 : vector<16x32xf32>
    %cst_8 = arith.constant 0.000000e+00 : f32
    %13 = vector.broadcast %cst_8 : f32 to vector<16x32xf32>
    %14 = arith.cmpf oge, %12, %13 : vector<16x32xf32>
    %cst_9 = arith.constant 2.000000e-01 : f32
    %15 = vector.broadcast %cst_9 : f32 to vector<16x32xf32>
    %16 = arith.mulf %15, %12 : vector<16x32xf32>
    %17 = arith.select %14, %12, %16 : vector<16x32xi1>, vector<16x32xf32>
    %c0_10 = arith.constant 0 : index
    %c0_11 = arith.constant 0 : index
    %18 = vector.load %arg5[%c0_10, %c0_11] : memref<16x32xf32, #tpu.memory_space<vmem>>, vector<16x32xf32>
    tpu.vector_store %arg5[%c0_10, %c0_11], %17 {strides = array<i32>} : memref<16x32xf32, #tpu.memory_space<vmem>>, vector<16x32xf32>,
    return
  }
  func.func @transform_0(%arg0: i32) -> (i32, i32) {
    %c0_i32 = arith.constant 0 : i32
    %c0_i32_0 = arith.constant 0 : i32
    return %c0_i32, %arg0 : i32, i32
  }
  func.func @transform_1(%arg0: i32) -> (i32, i32) {
    %c0_i32 = arith.constant 0 : i32
    %c0_i32_0 = arith.constant 0 : i32
    return %c0_i32, %arg0 : i32, i32
  }
  func.func @transform_2(%arg0: i32) -> (i32, i32) {
    %c0_i32 = arith.constant 0 : i32
    %c0_i32_0 = arith.constant 0 : i32
    %c0_i32_1 = arith.constant 0 : i32
    return %c0_i32, %c0_i32_0 : i32, i32
  }
  func.func @transform_3(%arg0: i32) -> (i32, i32) {
    %c0_i32 = arith.constant 0 : i32
    %c0_i32_0 = arith.constant 0 : i32
    %c0_i32_1 = arith.constant 0 : i32
    return %c0_i32, %c0_i32_0 : i32, i32
  }
  func.func @transform_4(%arg0: i32) -> (i32, i32) {
    %c0_i32 = arith.constant 0 : i32
    %c0_i32_0 = arith.constant 0 : i32
    return %c0_i32, %arg0 : i32, i32
  }
}

module attributes {stable_mosaic.version = 11 : i64} {
  func.func @_k_conv_res(%arg0: i32, %arg1: memref<144x32xbf16, #tpu.memory_space<vmem>>, %arg2: memref<16x32xf32, #tpu.memory_space<vmem>>, %arg3: memref<16x144xbf16, #tpu.memory_space<vmem>>, %arg4: memref<16x1xf32, #tpu.memory_space<vmem>>, %arg5: memref<16x32xf32, #tpu.memory_space<vmem>>) attributes {dimension_semantics = [#tpu.dimension_semantics<parallel>], iteration_bounds = array<i64: 1>, scalar_prefetch = 0 : i64, scratch_operands = 0 : i64, tpu.core_type = #tpu.core_type<tc>, window_params = [{transform_indices = @transform_0, window_bounds = array<i64: 144, 32>}, {transform_indices = @transform_1, window_bounds = array<i64: 16, 32>}, {pipeline_mode = #tpu.pipeline_mode<synchronous>, transform_indices = @transform_2, window_bounds = array<i64: 16, 144>}, {pipeline_mode = #tpu.pipeline_mode<synchronous>, transform_indices = @transform_3, window_bounds = array<i64: 16, 1>}, {transform_indices = @transform_4, window_bounds = array<i64: 16, 32>}]} {
    %c0 = arith.constant 0 : index
    %c0_0 = arith.constant 0 : index
    %0 = vector.load %arg3[%c0, %c0_0] : memref<16x144xbf16, #tpu.memory_space<vmem>>, vector<16x144xbf16>
    %c0_1 = arith.constant 0 : index
    %c0_2 = arith.constant 0 : index
    %1 = vector.load %arg1[%c0_1, %c0_2] : memref<144x32xbf16, #tpu.memory_space<vmem>>, vector<144x32xbf16>
    %cst = arith.constant dense<0.000000e+00> : vector<16x32xf32>
    %2 = tpu.matmul %0, %1, %cst {dimension_numbers = #tpu.dot_dimension_numbers<[1], [0], [0], [1], [0, 0, 1, 1], [], []>} : vector<16x144xbf16>, vector<144x32xbf16>, vector<16x32xf32> -> vector<16x32xf32>
    %c0_3 = arith.constant 0 : index
    %c0_4 = arith.constant 0 : index
    %3 = vector.load %arg4[%c0_3, %c0_4] : memref<16x1xf32, #tpu.memory_space<vmem>>, vector<16x1xf32>
    %4 = vector.broadcast %3 : vector<16x1xf32> to vector<16x32xf32>
    %5 = arith.addf %2, %4 : vector<16x32xf32>
    %c0_5 = arith.constant 0 : index
    %c0_6 = arith.constant 0 : index
    %6 = vector.load %arg2[%c0_5, %c0_6] : memref<16x32xf32, #tpu.memory_space<vmem>>, vector<16x32xf32>
    %7 = arith.addf %5, %6 : vector<16x32xf32>
    %c0_7 = arith.constant 0 : index
    %c0_8 = arith.constant 0 : index
    %8 = vector.load %arg5[%c0_7, %c0_8] : memref<16x32xf32, #tpu.memory_space<vmem>>, vector<16x32xf32>
    tpu.vector_store %arg5[%c0_7, %c0_8], %7 {strides = array<i32>} : memref<16x32xf32, #tpu.memory_space<vmem>>, vector<16x32xf32>,
    return
  }
  func.func @transform_0(%arg0: i32) -> (i32, i32) {
    %c0_i32 = arith.constant 0 : i32
    %c0_i32_0 = arith.constant 0 : i32
    return %c0_i32, %arg0 : i32, i32
  }
  func.func @transform_1(%arg0: i32) -> (i32, i32) {
    %c0_i32 = arith.constant 0 : i32
    %c0_i32_0 = arith.constant 0 : i32
    return %c0_i32, %arg0 : i32, i32
  }
  func.func @transform_2(%arg0: i32) -> (i32, i32) {
    %c0_i32 = arith.constant 0 : i32
    %c0_i32_0 = arith.constant 0 : i32
    %c0_i32_1 = arith.constant 0 : i32
    return %c0_i32, %c0_i32_0 : i32, i32
  }
  func.func @transform_3(%arg0: i32) -> (i32, i32) {
    %c0_i32 = arith.constant 0 : i32
    %c0_i32_0 = arith.constant 0 : i32
    %c0_i32_1 = arith.constant 0 : i32
    return %c0_i32, %c0_i32_0 : i32, i32
  }
  func.func @transform_4(%arg0: i32) -> (i32, i32) {
    %c0_i32 = arith.constant 0 : i32
    %c0_i32_0 = arith.constant 0 : i32
    return %c0_i32, %arg0 : i32, i32
  }
}

module attributes {stable_mosaic.version = 11 : i64} {
  func.func @_k_conv(%arg0: i32, %arg1: memref<144x32xbf16, #tpu.memory_space<vmem>>, %arg2: memref<8x144xbf16, #tpu.memory_space<vmem>>, %arg3: memref<8x1xf32, #tpu.memory_space<vmem>>, %arg4: memref<8x32xf32, #tpu.memory_space<vmem>>) attributes {dimension_semantics = [#tpu.dimension_semantics<parallel>], iteration_bounds = array<i64: 1>, scalar_prefetch = 0 : i64, scratch_operands = 0 : i64, tpu.core_type = #tpu.core_type<tc>, window_params = [{transform_indices = @transform_0, window_bounds = array<i64: 144, 32>}, {pipeline_mode = #tpu.pipeline_mode<synchronous>, transform_indices = @transform_1, window_bounds = array<i64: 8, 144>}, {pipeline_mode = #tpu.pipeline_mode<synchronous>, transform_indices = @transform_2, window_bounds = array<i64: 8, 1>}, {transform_indices = @transform_3, window_bounds = array<i64: 8, 32>}]} {
    %c0 = arith.constant 0 : index
    %c0_0 = arith.constant 0 : index
    %0 = vector.load %arg2[%c0, %c0_0] : memref<8x144xbf16, #tpu.memory_space<vmem>>, vector<8x144xbf16>
    %c0_1 = arith.constant 0 : index
    %c0_2 = arith.constant 0 : index
    %1 = vector.load %arg1[%c0_1, %c0_2] : memref<144x32xbf16, #tpu.memory_space<vmem>>, vector<144x32xbf16>
    %cst = arith.constant dense<0.000000e+00> : vector<8x32xf32>
    %2 = tpu.matmul %0, %1, %cst {dimension_numbers = #tpu.dot_dimension_numbers<[1], [0], [0], [1], [0, 0, 1, 1], [], []>} : vector<8x144xbf16>, vector<144x32xbf16>, vector<8x32xf32> -> vector<8x32xf32>
    %c0_3 = arith.constant 0 : index
    %c0_4 = arith.constant 0 : index
    %3 = vector.load %arg3[%c0_3, %c0_4] : memref<8x1xf32, #tpu.memory_space<vmem>>, vector<8x1xf32>
    %4 = vector.broadcast %3 : vector<8x1xf32> to vector<8x32xf32>
    %5 = arith.addf %2, %4 : vector<8x32xf32>
    %c0_5 = arith.constant 0 : index
    %c0_6 = arith.constant 0 : index
    %6 = vector.load %arg4[%c0_5, %c0_6] : memref<8x32xf32, #tpu.memory_space<vmem>>, vector<8x32xf32>
    tpu.vector_store %arg4[%c0_5, %c0_6], %5 {strides = array<i32>} : memref<8x32xf32, #tpu.memory_space<vmem>>, vector<8x32xf32>,
    return
  }
  func.func @transform_0(%arg0: i32) -> (i32, i32) {
    %c0_i32 = arith.constant 0 : i32
    %c0_i32_0 = arith.constant 0 : i32
    return %c0_i32, %arg0 : i32, i32
  }
  func.func @transform_1(%arg0: i32) -> (i32, i32) {
    %c0_i32 = arith.constant 0 : i32
    %c0_i32_0 = arith.constant 0 : i32
    %c0_i32_1 = arith.constant 0 : i32
    return %c0_i32, %c0_i32_0 : i32, i32
  }
  func.func @transform_2(%arg0: i32) -> (i32, i32) {
    %c0_i32 = arith.constant 0 : i32
    %c0_i32_0 = arith.constant 0 : i32
    %c0_i32_1 = arith.constant 0 : i32
    return %c0_i32, %c0_i32_0 : i32, i32
  }
  func.func @transform_3(%arg0: i32) -> (i32, i32) {
    %c0_i32 = arith.constant 0 : i32
    %c0_i32_0 = arith.constant 0 : i32
    return %c0_i32, %arg0 : i32, i32
  }
}

module attributes {stable_mosaic.version = 11 : i64} {
  func.func @_k_conv(%arg0: i32, %arg1: memref<8x32xbf16, #tpu.memory_space<vmem>>, %arg2: memref<4x8xbf16, #tpu.memory_space<vmem>>, %arg3: memref<4x1xf32, #tpu.memory_space<vmem>>, %arg4: memref<4x32xf32, #tpu.memory_space<vmem>>) attributes {dimension_semantics = [#tpu.dimension_semantics<parallel>], iteration_bounds = array<i64: 1>, scalar_prefetch = 0 : i64, scratch_operands = 0 : i64, tpu.core_type = #tpu.core_type<tc>, window_params = [{transform_indices = @transform_0, window_bounds = array<i64: 8, 32>}, {pipeline_mode = #tpu.pipeline_mode<synchronous>, transform_indices = @transform_1, window_bounds = array<i64: 4, 8>}, {pipeline_mode = #tpu.pipeline_mode<synchronous>, transform_indices = @transform_2, window_bounds = array<i64: 4, 1>}, {transform_indices = @transform_3, window_bounds = array<i64: 4, 32>}]} {
    %c0 = arith.constant 0 : index
    %c0_0 = arith.constant 0 : index
    %0 = vector.load %arg2[%c0, %c0_0] : memref<4x8xbf16, #tpu.memory_space<vmem>>, vector<4x8xbf16>
    %c0_1 = arith.constant 0 : index
    %c0_2 = arith.constant 0 : index
    %1 = vector.load %arg1[%c0_1, %c0_2] : memref<8x32xbf16, #tpu.memory_space<vmem>>, vector<8x32xbf16>
    %cst = arith.constant dense<0.000000e+00> : vector<4x32xf32>
    %2 = tpu.matmul %0, %1, %cst {dimension_numbers = #tpu.dot_dimension_numbers<[1], [0], [0], [1], [0, 0, 1, 1], [], []>} : vector<4x8xbf16>, vector<8x32xbf16>, vector<4x32xf32> -> vector<4x32xf32>
    %c0_3 = arith.constant 0 : index
    %c0_4 = arith.constant 0 : index
    %3 = vector.load %arg3[%c0_3, %c0_4] : memref<4x1xf32, #tpu.memory_space<vmem>>, vector<4x1xf32>
    %4 = vector.broadcast %3 : vector<4x1xf32> to vector<4x32xf32>
    %5 = arith.addf %2, %4 : vector<4x32xf32>
    %cst_5 = arith.constant 0.000000e+00 : f32
    %6 = vector.broadcast %cst_5 : f32 to vector<4x32xf32>
    %7 = arith.maximumf %5, %6 : vector<4x32xf32>
    %c0_6 = arith.constant 0 : index
    %c0_7 = arith.constant 0 : index
    %8 = vector.load %arg4[%c0_6, %c0_7] : memref<4x32xf32, #tpu.memory_space<vmem>>, vector<4x32xf32>
    tpu.vector_store %arg4[%c0_6, %c0_7], %7 {strides = array<i32>} : memref<4x32xf32, #tpu.memory_space<vmem>>, vector<4x32xf32>,
    return
  }
  func.func @transform_0(%arg0: i32) -> (i32, i32) {
    %c0_i32 = arith.constant 0 : i32
    %c0_i32_0 = arith.constant 0 : i32
    return %c0_i32, %arg0 : i32, i32
  }
  func.func @transform_1(%arg0: i32) -> (i32, i32) {
    %c0_i32 = arith.constant 0 : i32
    %c0_i32_0 = arith.constant 0 : i32
    %c0_i32_1 = arith.constant 0 : i32
    return %c0_i32, %c0_i32_0 : i32, i32
  }
  func.func @transform_2(%arg0: i32) -> (i32, i32) {
    %c0_i32 = arith.constant 0 : i32
    %c0_i32_0 = arith.constant 0 : i32
    %c0_i32_1 = arith.constant 0 : i32
    return %c0_i32, %c0_i32_0 : i32, i32
  }
  func.func @transform_3(%arg0: i32) -> (i32, i32) {
    %c0_i32 = arith.constant 0 : i32
    %c0_i32_0 = arith.constant 0 : i32
    return %c0_i32, %arg0 : i32, i32
  }
}

module attributes {stable_mosaic.version = 11 : i64} {
  func.func @_k_conv(%arg0: i32, %arg1: memref<72x32xbf16, #tpu.memory_space<vmem>>, %arg2: memref<64x72xbf16, #tpu.memory_space<vmem>>, %arg3: memref<64x1xf32, #tpu.memory_space<vmem>>, %arg4: memref<64x32xf32, #tpu.memory_space<vmem>>) attributes {dimension_semantics = [#tpu.dimension_semantics<parallel>], iteration_bounds = array<i64: 1>, scalar_prefetch = 0 : i64, scratch_operands = 0 : i64, tpu.core_type = #tpu.core_type<tc>, window_params = [{transform_indices = @transform_0, window_bounds = array<i64: 72, 32>}, {pipeline_mode = #tpu.pipeline_mode<synchronous>, transform_indices = @transform_1, window_bounds = array<i64: 64, 72>}, {pipeline_mode = #tpu.pipeline_mode<synchronous>, transform_indices = @transform_2, window_bounds = array<i64: 64, 1>}, {transform_indices = @transform_3, window_bounds = array<i64: 64, 32>}]} {
    %c0 = arith.constant 0 : index
    %c0_0 = arith.constant 0 : index
    %0 = vector.load %arg2[%c0, %c0_0] : memref<64x72xbf16, #tpu.memory_space<vmem>>, vector<64x72xbf16>
    %c0_1 = arith.constant 0 : index
    %c0_2 = arith.constant 0 : index
    %1 = vector.load %arg1[%c0_1, %c0_2] : memref<72x32xbf16, #tpu.memory_space<vmem>>, vector<72x32xbf16>
    %cst = arith.constant dense<0.000000e+00> : vector<64x32xf32>
    %2 = tpu.matmul %0, %1, %cst {dimension_numbers = #tpu.dot_dimension_numbers<[1], [0], [0], [1], [0, 0, 1, 1], [], []>} : vector<64x72xbf16>, vector<72x32xbf16>, vector<64x32xf32> -> vector<64x32xf32>
    %c0_3 = arith.constant 0 : index
    %c0_4 = arith.constant 0 : index
    %3 = vector.load %arg3[%c0_3, %c0_4] : memref<64x1xf32, #tpu.memory_space<vmem>>, vector<64x1xf32>
    %4 = vector.broadcast %3 : vector<64x1xf32> to vector<64x32xf32>
    %5 = arith.addf %2, %4 : vector<64x32xf32>
    %cst_5 = arith.constant 0.000000e+00 : f32
    %6 = vector.broadcast %cst_5 : f32 to vector<64x32xf32>
    %7 = arith.cmpf oge, %5, %6 : vector<64x32xf32>
    %cst_6 = arith.constant 0.00999999977 : f32
    %8 = vector.broadcast %cst_6 : f32 to vector<64x32xf32>
    %9 = arith.mulf %8, %5 : vector<64x32xf32>
    %10 = arith.select %7, %5, %9 : vector<64x32xi1>, vector<64x32xf32>
    %11 = tpu.iota {dimensions = array<i32: 0>} : vector<64x32xi32>
    %c32_i32 = arith.constant 32 : i32
    %12 = vector.broadcast %c32_i32 : i32 to vector<64x32xi32>
    %13 = arith.cmpi slt, %11, %12 : vector<64x32xi32>
    %14 = arith.select %13, %10, %5 : vector<64x32xi1>, vector<64x32xf32>
    %c0_7 = arith.constant 0 : index
    %c0_8 = arith.constant 0 : index
    %15 = vector.load %arg4[%c0_7, %c0_8] : memref<64x32xf32, #tpu.memory_space<vmem>>, vector<64x32xf32>
    tpu.vector_store %arg4[%c0_7, %c0_8], %14 {strides = array<i32>} : memref<64x32xf32, #tpu.memory_space<vmem>>, vector<64x32xf32>,
    return
  }
  func.func @transform_0(%arg0: i32) -> (i32, i32) {
    %c0_i32 = arith.constant 0 : i32
    %c0_i32_0 = arith.constant 0 : i32
    return %c0_i32, %arg0 : i32, i32
  }
  func.func @transform_1(%arg0: i32) -> (i32, i32) {
    %c0_i32 = arith.constant 0 : i32
    %c0_i32_0 = arith.constant 0 : i32
    %c0_i32_1 = arith.constant 0 : i32
    return %c0_i32, %c0_i32_0 : i32, i32
  }
  func.func @transform_2(%arg0: i32) -> (i32, i32) {
    %c0_i32 = arith.constant 0 : i32
    %c0_i32_0 = arith.constant 0 : i32
    %c0_i32_1 = arith.constant 0 : i32
    return %c0_i32, %c0_i32_0 : i32, i32
  }
  func.func @transform_3(%arg0: i32) -> (i32, i32) {
    %c0_i32 = arith.constant 0 : i32
    %c0_i32_0 = arith.constant 0 : i32
    return %c0_i32, %arg0 : i32, i32
  }
}

module attributes {stable_mosaic.version = 11 : i64} {
  func.func @_k_bneck_tail(%arg0: i32, %arg1: memref<36x32xbf16, #tpu.memory_space<vmem>>, %arg2: memref<8x32xf32, #tpu.memory_space<vmem>>, %arg3: memref<4x36xbf16, #tpu.memory_space<vmem>>, %arg4: memref<4x1xf32, #tpu.memory_space<vmem>>, %arg5: memref<8x4xbf16, #tpu.memory_space<vmem>>, %arg6: memref<8x1xf32, #tpu.memory_space<vmem>>, %arg7: memref<8x32xf32, #tpu.memory_space<vmem>>) attributes {dimension_semantics = [#tpu.dimension_semantics<parallel>], iteration_bounds = array<i64: 1>, scalar_prefetch = 0 : i64, scratch_operands = 0 : i64, tpu.core_type = #tpu.core_type<tc>, window_params = [{transform_indices = @transform_0, window_bounds = array<i64: 36, 32>}, {transform_indices = @transform_1, window_bounds = array<i64: 8, 32>}, {pipeline_mode = #tpu.pipeline_mode<synchronous>, transform_indices = @transform_2, window_bounds = array<i64: 4, 36>}, {pipeline_mode = #tpu.pipeline_mode<synchronous>, transform_indices = @transform_3, window_bounds = array<i64: 4, 1>}, {pipeline_mode = #tpu.pipeline_mode<synchronous>, transform_indices = @transform_4, window_bounds = array<i64: 8, 4>}, {pipeline_mode = #tpu.pipeline_mode<synchronous>, transform_indices = @transform_5, window_bounds = array<i64: 8, 1>}, {transform_indices = @transform_6, window_bounds = array<i64: 8, 32>}]} {
    %c0 = arith.constant 0 : index
    %c0_0 = arith.constant 0 : index
    %0 = vector.load %arg3[%c0, %c0_0] : memref<4x36xbf16, #tpu.memory_space<vmem>>, vector<4x36xbf16>
    %c0_1 = arith.constant 0 : index
    %c0_2 = arith.constant 0 : index
    %1 = vector.load %arg1[%c0_1, %c0_2] : memref<36x32xbf16, #tpu.memory_space<vmem>>, vector<36x32xbf16>
    %cst = arith.constant dense<0.000000e+00> : vector<4x32xf32>
    %2 = tpu.matmul %0, %1, %cst {dimension_numbers = #tpu.dot_dimension_numbers<[1], [0], [0], [1], [0, 0, 1, 1], [], []>} : vector<4x36xbf16>, vector<36x32xbf16>, vector<4x32xf32> -> vector<4x32xf32>
    %c0_3 = arith.constant 0 : index
    %c0_4 = arith.constant 0 : index
    %3 = vector.load %arg4[%c0_3, %c0_4] : memref<4x1xf32, #tpu.memory_space<vmem>>, vector<4x1xf32>
    %4 = vector.broadcast %3 : vector<4x1xf32> to vector<4x32xf32>
    %5 = arith.addf %2, %4 : vector<4x32xf32>
    %cst_5 = arith.constant 0.000000e+00 : f32
    %6 = vector.broadcast %cst_5 : f32 to vector<4x32xf32>
    %7 = arith.maximumf %5, %6 : vector<4x32xf32>
    %8 = arith.truncf %7 : vector<4x32xf32> to vector<4x32xbf16>
    %c0_6 = arith.constant 0 : index
    %c0_7 = arith.constant 0 : index
    %9 = vector.load %arg5[%c0_6, %c0_7] : memref<8x4xbf16, #tpu.memory_space<vmem>>, vector<8x4xbf16>
    %cst_8 = arith.constant dense<0.000000e+00> : vector<8x32xf32>
    %10 = tpu.matmul %9, %8, %cst_8 {dimension_numbers = #tpu.dot_dimension_numbers<[1], [0], [0], [1], [0, 0, 1, 1], [], []>} : vector<8x4xbf16>, vector<4x32xbf16>, vector<8x32xf32> -> vector<8x32xf32>
    %c0_9 = arith.constant 0 : index
    %c0_10 = arith.constant 0 : index
    %11 = vector.load %arg6[%c0_9, %c0_10] : memref<8x1xf32, #tpu.memory_space<vmem>>, vector<8x1xf32>
    %12 = vector.broadcast %11 : vector<8x1xf32> to vector<8x32xf32>
    %13 = arith.addf %10, %12 : vector<8x32xf32>
    %c0_11 = arith.constant 0 : index
    %c0_12 = arith.constant 0 : index
    %14 = vector.load %arg2[%c0_11, %c0_12] : memref<8x32xf32, #tpu.memory_space<vmem>>, vector<8x32xf32>
    %15 = arith.addf %13, %14 : vector<8x32xf32>
    %c0_13 = arith.constant 0 : index
    %c0_14 = arith.constant 0 : index
    %16 = vector.load %arg7[%c0_13, %c0_14] : memref<8x32xf32, #tpu.memory_space<vmem>>, vector<8x32xf32>
    tpu.vector_store %arg7[%c0_13, %c0_14], %15 {strides = array<i32>} : memref<8x32xf32, #tpu.memory_space<vmem>>, vector<8x32xf32>,
    return
  }
  func.func @transform_0(%arg0: i32) -> (i32, i32) {
    %c0_i32 = arith.constant 0 : i32
    %c0_i32_0 = arith.constant 0 : i32
    return %c0_i32, %arg0 : i32, i32
  }
  func.func @transform_1(%arg0: i32) -> (i32, i32) {
    %c0_i32 = arith.constant 0 : i32
    %c0_i32_0 = arith.constant 0 : i32
    return %c0_i32, %arg0 : i32, i32
  }
  func.func @transform_2(%arg0: i32) -> (i32, i32) {
    %c0_i32 = arith.constant 0 : i32
    %c0_i32_0 = arith.constant 0 : i32
    %c0_i32_1 = arith.constant 0 : i32
    return %c0_i32, %c0_i32_0 : i32, i32
  }
  func.func @transform_3(%arg0: i32) -> (i32, i32) {
    %c0_i32 = arith.constant 0 : i32
    %c0_i32_0 = arith.constant 0 : i32
    %c0_i32_1 = arith.constant 0 : i32
    return %c0_i32, %c0_i32_0 : i32, i32
  }
  func.func @transform_4(%arg0: i32) -> (i32, i32) {
    %c0_i32 = arith.constant 0 : i32
    %c0_i32_0 = arith.constant 0 : i32
    %c0_i32_1 = arith.constant 0 : i32
    return %c0_i32, %c0_i32_0 : i32, i32
  }
  func.func @transform_5(%arg0: i32) -> (i32, i32) {
    %c0_i32 = arith.constant 0 : i32
    %c0_i32_0 = arith.constant 0 : i32
    %c0_i32_1 = arith.constant 0 : i32
    return %c0_i32, %c0_i32_0 : i32, i32
  }
  func.func @transform_6(%arg0: i32) -> (i32, i32) {
    %c0_i32 = arith.constant 0 : i32
    %c0_i32_0 = arith.constant 0 : i32
    return %c0_i32, %arg0 : i32, i32
  }
}

module attributes {stable_mosaic.version = 11 : i64} {
  func.func @_k_conv_gdn_res(%arg0: i32, %arg1: memref<72x128xbf16, #tpu.memory_space<vmem>>, %arg2: memref<8x128xf32, #tpu.memory_space<vmem>>, %arg3: memref<8x72xbf16, #tpu.memory_space<vmem>>, %arg4: memref<8x1xf32, #tpu.memory_space<vmem>>, %arg5: memref<8x8xf32, #tpu.memory_space<vmem>>, %arg6: memref<8x1xf32, #tpu.memory_space<vmem>>, %arg7: memref<8x128xf32, #tpu.memory_space<vmem>>) attributes {dimension_semantics = [#tpu.dimension_semantics<parallel>], iteration_bounds = array<i64: 1>, scalar_prefetch = 0 : i64, scratch_operands = 0 : i64, tpu.core_type = #tpu.core_type<tc>, window_params = [{transform_indices = @transform_0, window_bounds = array<i64: 72, 128>}, {transform_indices = @transform_1, window_bounds = array<i64: 8, 128>}, {pipeline_mode = #tpu.pipeline_mode<synchronous>, transform_indices = @transform_2, window_bounds = array<i64: 8, 72>}, {pipeline_mode = #tpu.pipeline_mode<synchronous>, transform_indices = @transform_3, window_bounds = array<i64: 8, 1>}, {pipeline_mode = #tpu.pipeline_mode<synchronous>, transform_indices = @transform_4, window_bounds = array<i64: 8, 8>}, {pipeline_mode = #tpu.pipeline_mode<synchronous>, transform_indices = @transform_5, window_bounds = array<i64: 8, 1>}, {transform_indices = @transform_6, window_bounds = array<i64: 8, 128>}]} {
    %c0 = arith.constant 0 : index
    %c0_0 = arith.constant 0 : index
    %0 = vector.load %arg3[%c0, %c0_0] : memref<8x72xbf16, #tpu.memory_space<vmem>>, vector<8x72xbf16>
    %c0_1 = arith.constant 0 : index
    %c0_2 = arith.constant 0 : index
    %1 = vector.load %arg1[%c0_1, %c0_2] : memref<72x128xbf16, #tpu.memory_space<vmem>>, vector<72x128xbf16>
    %cst = arith.constant dense<0.000000e+00> : vector<8x128xf32>
    %2 = tpu.matmul %0, %1, %cst {dimension_numbers = #tpu.dot_dimension_numbers<[1], [0], [0], [1], [0, 0, 1, 1], [], []>} : vector<8x72xbf16>, vector<72x128xbf16>, vector<8x128xf32> -> vector<8x128xf32>
    %c0_3 = arith.constant 0 : index
    %c0_4 = arith.constant 0 : index
    %3 = vector.load %arg4[%c0_3, %c0_4] : memref<8x1xf32, #tpu.memory_space<vmem>>, vector<8x1xf32>
    %4 = vector.broadcast %3 : vector<8x1xf32> to vector<8x128xf32>
    %5 = arith.addf %2, %4 : vector<8x128xf32>
    %c0_5 = arith.constant 0 : index
    %c0_6 = arith.constant 0 : index
    %6 = vector.load %arg5[%c0_5, %c0_6] : memref<8x8xf32, #tpu.memory_space<vmem>>, vector<8x8xf32>
    %7 = arith.mulf %5, %5 : vector<8x128xf32>
    %cst_7 = arith.constant dense<0.000000e+00> : vector<8x128xf32>
    %8 = tpu.matmul %6, %7, %cst_7 {dimension_numbers = #tpu.dot_dimension_numbers<[1], [0], [0], [1], [0, 0, 1, 1], [], []>} : vector<8x8xf32>, vector<8x128xf32>, vector<8x128xf32> -> vector<8x128xf32>
    %c0_8 = arith.constant 0 : index
    %c0_9 = arith.constant 0 : index
    %9 = vector.load %arg6[%c0_8, %c0_9] : memref<8x1xf32, #tpu.memory_space<vmem>>, vector<8x1xf32>
    %10 = vector.broadcast %9 : vector<8x1xf32> to vector<8x128xf32>
    %11 = arith.addf %8, %10 : vector<8x128xf32>
    %cst_10 = arith.constant 0.000000e+00 : f32
    %12 = vector.broadcast %cst_10 : f32 to vector<8x128xf32>
    %13 = arith.maximumf %11, %12 : vector<8x128xf32>
    %14 = math.sqrt %13 : vector<8x128xf32>
    %15 = arith.mulf %5, %14 : vector<8x128xf32>
    %c0_11 = arith.constant 0 : index
    %c0_12 = arith.constant 0 : index
    %16 = vector.load %arg2[%c0_11, %c0_12] : memref<8x128xf32, #tpu.memory_space<vmem>>, vector<8x128xf32>
    %17 = arith.addf %15, %16 : vector<8x128xf32>
    %c0_13 = arith.constant 0 : index
    %c0_14 = arith.constant 0 : index
    %18 = vector.load %arg7[%c0_13, %c0_14] : memref<8x128xf32, #tpu.memory_space<vmem>>, vector<8x128xf32>
    tpu.vector_store %arg7[%c0_13, %c0_14], %17 {strides = array<i32>} : memref<8x128xf32, #tpu.memory_space<vmem>>, vector<8x128xf32>,
    return
  }
  func.func @transform_0(%arg0: i32) -> (i32, i32) {
    %c0_i32 = arith.constant 0 : i32
    %c0_i32_0 = arith.constant 0 : i32
    return %c0_i32, %arg0 : i32, i32
  }
  func.func @transform_1(%arg0: i32) -> (i32, i32) {
    %c0_i32 = arith.constant 0 : i32
    %c0_i32_0 = arith.constant 0 : i32
    return %c0_i32, %arg0 : i32, i32
  }
  func.func @transform_2(%arg0: i32) -> (i32, i32) {
    %c0_i32 = arith.constant 0 : i32
    %c0_i32_0 = arith.constant 0 : i32
    %c0_i32_1 = arith.constant 0 : i32
    return %c0_i32, %c0_i32_0 : i32, i32
  }
  func.func @transform_3(%arg0: i32) -> (i32, i32) {
    %c0_i32 = arith.constant 0 : i32
    %c0_i32_0 = arith.constant 0 : i32
    %c0_i32_1 = arith.constant 0 : i32
    return %c0_i32, %c0_i32_0 : i32, i32
  }
  func.func @transform_4(%arg0: i32) -> (i32, i32) {
    %c0_i32 = arith.constant 0 : i32
    %c0_i32_0 = arith.constant 0 : i32
    %c0_i32_1 = arith.constant 0 : i32
    return %c0_i32, %c0_i32_0 : i32, i32
  }
  func.func @transform_5(%arg0: i32) -> (i32, i32) {
    %c0_i32 = arith.constant 0 : i32
    %c0_i32_0 = arith.constant 0 : i32
    %c0_i32_1 = arith.constant 0 : i32
    return %c0_i32, %c0_i32_0 : i32, i32
  }
  func.func @transform_6(%arg0: i32) -> (i32, i32) {
    %c0_i32 = arith.constant 0 : i32
    %c0_i32_0 = arith.constant 0 : i32
    return %c0_i32, %arg0 : i32, i32
  }
}

module attributes {stable_mosaic.version = 11 : i64} {
  func.func @_k_conv(%arg0: i32, %arg1: memref<72x128xbf16, #tpu.memory_space<vmem>>, %arg2: memref<4x72xbf16, #tpu.memory_space<vmem>>, %arg3: memref<4x1xf32, #tpu.memory_space<vmem>>, %arg4: memref<4x128xf32, #tpu.memory_space<vmem>>) attributes {dimension_semantics = [#tpu.dimension_semantics<parallel>], iteration_bounds = array<i64: 1>, scalar_prefetch = 0 : i64, scratch_operands = 0 : i64, tpu.core_type = #tpu.core_type<tc>, window_params = [{transform_indices = @transform_0, window_bounds = array<i64: 72, 128>}, {pipeline_mode = #tpu.pipeline_mode<synchronous>, transform_indices = @transform_1, window_bounds = array<i64: 4, 72>}, {pipeline_mode = #tpu.pipeline_mode<synchronous>, transform_indices = @transform_2, window_bounds = array<i64: 4, 1>}, {transform_indices = @transform_3, window_bounds = array<i64: 4, 128>}]} {
    %c0 = arith.constant 0 : index
    %c0_0 = arith.constant 0 : index
    %0 = vector.load %arg2[%c0, %c0_0] : memref<4x72xbf16, #tpu.memory_space<vmem>>, vector<4x72xbf16>
    %c0_1 = arith.constant 0 : index
    %c0_2 = arith.constant 0 : index
    %1 = vector.load %arg1[%c0_1, %c0_2] : memref<72x128xbf16, #tpu.memory_space<vmem>>, vector<72x128xbf16>
    %cst = arith.constant dense<0.000000e+00> : vector<4x128xf32>
    %2 = tpu.matmul %0, %1, %cst {dimension_numbers = #tpu.dot_dimension_numbers<[1], [0], [0], [1], [0, 0, 1, 1], [], []>} : vector<4x72xbf16>, vector<72x128xbf16>, vector<4x128xf32> -> vector<4x128xf32>
    %c0_3 = arith.constant 0 : index
    %c0_4 = arith.constant 0 : index
    %3 = vector.load %arg3[%c0_3, %c0_4] : memref<4x1xf32, #tpu.memory_space<vmem>>, vector<4x1xf32>
    %4 = vector.broadcast %3 : vector<4x1xf32> to vector<4x128xf32>
    %5 = arith.addf %2, %4 : vector<4x128xf32>
    %c0_5 = arith.constant 0 : index
    %c0_6 = arith.constant 0 : index
    %6 = vector.load %arg4[%c0_5, %c0_6] : memref<4x128xf32, #tpu.memory_space<vmem>>, vector<4x128xf32>
    tpu.vector_store %arg4[%c0_5, %c0_6], %5 {strides = array<i32>} : memref<4x128xf32, #tpu.memory_space<vmem>>, vector<4x128xf32>,
    return
  }
  func.func @transform_0(%arg0: i32) -> (i32, i32) {
    %c0_i32 = arith.constant 0 : i32
    %c0_i32_0 = arith.constant 0 : i32
    return %c0_i32, %arg0 : i32, i32
  }
  func.func @transform_1(%arg0: i32) -> (i32, i32) {
    %c0_i32 = arith.constant 0 : i32
    %c0_i32_0 = arith.constant 0 : i32
    %c0_i32_1 = arith.constant 0 : i32
    return %c0_i32, %c0_i32_0 : i32, i32
  }
  func.func @transform_2(%arg0: i32) -> (i32, i32) {
    %c0_i32 = arith.constant 0 : i32
    %c0_i32_0 = arith.constant 0 : i32
    %c0_i32_1 = arith.constant 0 : i32
    return %c0_i32, %c0_i32_0 : i32, i32
  }
  func.func @transform_3(%arg0: i32) -> (i32, i32) {
    %c0_i32 = arith.constant 0 : i32
    %c0_i32_0 = arith.constant 0 : i32
    return %c0_i32, %arg0 : i32, i32
  }
}

</mosaic_0001>

<llo_original>
// kernel: _lambda_.58
$region0: #{_lambda_.58}
  #allocation0 [shape = 'u32[]', space=smem, size = 0x4, offset = 0x4, fixed_abs, tag = 'smem constant byte address 0x4 - core index']
  #allocation1 [shape = 'u32[144,128]{1,0:T(1,128)}', space=vmem, size = 0x12000, scoped, tag = 'internal scratch']
  %s0 = inlined_call_operand.vmem [shape: bf16[36,128], index: 0, kind: input, shape index: {}]
  %s1 = inlined_call_operand.vmem [shape: bf16[16,36], index: 1, kind: input, shape index: {}]
  %s2 = inlined_call_operand.vmem [shape: f32[16,1], index: 2, kind: input, shape index: {}]
  %s3 = inlined_call_operand.vmem [shape: f32[16,128], index: 3, kind: output, shape index: {}]
  %s4 = sld [smem:[#allocation0]]
  $region22: #{_lambda_.58} parent=0
    _
  %s6 = ssub.s32 1, %s4
  %s7 = scalar_select 0, %s6, %s4
  // Predicated region
  $region2: #{_lambda_.58} parent=0 // pred_check
    _
  $region3: #{_lambda_.58} parent=0 // pred_check_branch
    %9 = sbr.rel (0) target = $region5
  $region4: #{_lambda_.58} parent=0 // pred_region
    _
  $region5: #{_lambda_.58} parent=0 // pred_fallthru
    _
  // Predicated region
  $region6: #{_lambda_.58} parent=0 // pred_check
    _
  $region7: #{_lambda_.58} parent=0 // pred_check_branch
    %11 = sbr.rel (0) target = $region9
  $region8: #{_lambda_.58} parent=0 // pred_region
    _
  $region9: #{_lambda_.58} parent=0 // pred_fallthru
    _
  // Predicated region
  $region10: #{_lambda_.58} parent=0 // pred_check
    _
  $region11: #{_lambda_.58} parent=0 // pred_check_branch
    %13 = sbr.rel (0) target = $region13
  $region12: #{_lambda_.58} parent=0 // pred_region
    _
  $region13: #{_lambda_.58} parent=0 // pred_fallthru
    _
  %v15 = vld [vmem:[%s1] sm:$0xf]
  %v16 = vld [vmem:[%s1 + $0x4] sm:$0xf]
  %v17 = vld [vmem:[%s0] sm:$0xf]
  %v18 = vld [vmem:[%s0 + $0x4] sm:$0xf]
  %v19 = vld [vmem:[%s0 + $0x8] sm:$0xf]
  %v20 = vld [vmem:[%s0 + $0xc] sm:$0xf]
  %v21 = vld [vmem:[%s0 + $0x10] sm:$0x3]
  %v22 = vld [vmem:[%s2] sm:$0xff]
  %v23 = vld [vmem:[%s2 + $0x8] sm:$0xff]
  %25 = vset.pattern.permute.xlu0 0
  %26 = vperm.xlu0 %25, %v22
  %v27 = vpop.permute.xlu0 %26
  %30 = vset.pattern.permute.xlu0 0
  %31 = vperm.xlu0 %30, %v23
  %v32 = vpop.permute.xlu0 %31
  %v36 = vunpack.c.l.b16 %v15
  %v37 = vunpack.c.l.b16 %v16
  %v38 = vpack.c.b16 %v37, %v36
  %v44 = vunpack.c.l.b16 %v17
  %v45 = vunpack.c.l.b16 %v18
  %v46 = vunpack.c.l.b16 %v19
  %v47 = vunpack.c.l.b16 %v20
  %v48 = vunpack.c.l.b16 %v21
  %v49 = vpack.c.b16 %v45, %v44
  %v50 = vpack.c.b16 %v47, %v46
  %v51 = vpack.c.b16 %v48, %v48
  %vm54 = vcmask 293888
  %v56 = vsel %vm54, %v38, 0
  %vm58 = vcmask 1041408
  %v60 = vsel %vm58, %v51, 0
  %62 = vmatprep.subr.bf16.mxu0 0
  %63 = vmatpush1.bf16.msra.mxu0 %v49
  %64 = vmatprep.subr.bf16.mxu0 0
  %65 = vmatpush1.bf16.msra.mxu0 %v50
  %66 = vmatprep.subr.bf16.mxu0 0
  %67 = vmatpush1.bf16.msra.mxu0 %v60
  %68 = vmatprep.subr.bf16.mxu0 0
  %69 = vmatpush1.bf16.msra.mxu0 0
  %70 = vmatprep.subr.bf16.mxu0 0
  %71 = vmatpush1.bf16.msra.mxu0 0
  %72 = vmatprep.subr.bf16.mxu0 0
  %73 = vmatpush1.bf16.msra.mxu0 0
  %74 = vmatprep.subr.bf16.mxu0 0
  %75 = vmatpush1.bf16.msra.mxu0 0
  %76 = vmatprep.subr.bf16.mxu0 0
  %77 = vmatpush1.bf16.msra.mxu0 0
  %78 = vmatprep.subr.bf16.mxu0 0
  %79 = vmatpush1.bf16.msra.mxu0 0
  %80 = vmatprep.subr.bf16.mxu0 0
  %81 = vmatpush1.bf16.msra.mxu0 0
  %82 = vmatprep.subr.bf16.mxu0 0
  %83 = vmatpush1.bf16.msra.mxu0 0
  %84 = vmatprep.subr.bf16.mxu0 0
  %85 = vmatpush1.bf16.msra.mxu0 0
  %86 = vmatprep.subr.bf16.mxu0 0
  %87 = vmatpush1.bf16.msra.mxu0 0
  %88 = vmatprep.subr.bf16.mxu0 0
  %89 = vmatpush1.bf16.msra.mxu0 0
  %90 = vmatprep.subr.bf16.mxu0 0
  %91 = vmatpush1.bf16.msra.mxu0 0
  %92 = vmatprep.subr.bf16.mxu0 0
  %93 = vmatpush1.bf16.msra.mxu0 0
  %94 = vmatprep.mubr.bf16.mxu0 0
  %95 = vmatmul.mubr.bf16.gmra.mrb[0].mxu0 %v56
  %v96 = vpop.f32.mrb[0].mxu0
  %v97 = vadd.f32 %v27, %v96
  %v98 = vpop.f32.mrb[0].mxu0
  %v99 = vpop.f32.mrb[0].mxu0
  %v100 = vadd.f32 %v32, %v99
  %v101 = vpop.f32.mrb[0].mxu0
  %102 = vdwg.mxu0
  %vm103 = vcmp.ge.f32.partialorder %v97, 0.0
  %vm104 = vcmp.ge.f32.partialorder %v100, 0.0
  %v105 = vmul.f32 %v97, 0.01
  %v106 = vmul.f32 %v100, 0.01
  %v107 = vsel %vm103, %v97, %v105
  %v108 = vsel %vm104, %v100, %v106
  %v109 = vlaneseq
  %v110 = vshrl.u32 %v109, 7
  %v111 = vadd.s32 %v110, 8
  %vm112 = vcmp.lt.s32.totalorder %v110, 8
  %vm113 = vcmp.lt.s32.totalorder %v111, 8
  %v114 = vsel %vm112, %v107, %v97
  %v115 = vsel %vm113, %v108, %v100
  %116 = vst [vmem:[%s3] sm:$0xff] %v114
  %117 = vst [vmem:[%s3 + $0x8] sm:$0xff] %v115
  // Predicated region
  $region14: #{_lambda_.58} parent=0 // pred_check
    _
  $region15: #{_lambda_.58} parent=0 // pred_check_branch
    %119 = sbr.rel (0) target = $region17
  $region16: #{_lambda_.58} parent=0 // pred_region
    _
  $region17: #{_lambda_.58} parent=0 // pred_fallthru
    _
  // Predicated region
  $region18: #{_lambda_.58} parent=0 // pred_check
    _
  $region19: #{_lambda_.58} parent=0 // pred_check_branch
    %121 = sbr.rel (0) target = $region21
  $region20: #{_lambda_.58} parent=0 // pred_region
    _
  $region21: #{_lambda_.58} parent=0 // pred_fallthru
    _

// kernel: _lambda_.60
$region0: #{_lambda_.60}
  #allocation0 [shape = 'u32[]', space=smem, size = 0x4, offset = 0x4, fixed_abs, tag = 'smem constant byte address 0x4 - core index']
  #allocation1 [shape = 'u32[144,128]{1,0:T(1,128)}', space=vmem, size = 0x12000, scoped, tag = 'internal scratch']
  %s0 = inlined_call_operand.vmem [shape: bf16[8,128], index: 0, kind: input, shape index: {}]
  %s1 = inlined_call_operand.vmem [shape: bf16[4,8], index: 1, kind: input, shape index: {}]
  %s2 = inlined_call_operand.vmem [shape: f32[4,1], index: 2, kind: input, shape index: {}]
  %s3 = inlined_call_operand.vmem [shape: f32[4,128], index: 3, kind: output, shape index: {}]
  %s4 = sld [smem:[#allocation0]]
  $region22: #{_lambda_.60} parent=0
    _
  %s6 = ssub.s32 1, %s4
  %s7 = scalar_select 0, %s6, %s4
  // Predicated region
  $region2: #{_lambda_.60} parent=0 // pred_check
    _
  $region3: #{_lambda_.60} parent=0 // pred_check_branch
    %9 = sbr.rel (0) target = $region5
  $region4: #{_lambda_.60} parent=0 // pred_region
    _
  $region5: #{_lambda_.60} parent=0 // pred_fallthru
    _
  // Predicated region
  $region6: #{_lambda_.60} parent=0 // pred_check
    _
  $region7: #{_lambda_.60} parent=0 // pred_check_branch
    %11 = sbr.rel (0) target = $region9
  $region8: #{_lambda_.60} parent=0 // pred_region
    _
  $region9: #{_lambda_.60} parent=0 // pred_fallthru
    _
  // Predicated region
  $region10: #{_lambda_.60} parent=0 // pred_check
    _
  $region11: #{_lambda_.60} parent=0 // pred_check_branch
    %13 = sbr.rel (0) target = $region13
  $region12: #{_lambda_.60} parent=0 // pred_region
    _
  $region13: #{_lambda_.60} parent=0 // pred_fallthru
    _
  %v15 = vld [vmem:[%s1] sm:$0x3]
  %v16 = vld [vmem:[%s0] sm:$0xf]
  %v17 = vld [vmem:[%s2] sm:$0xf]
  %19 = vset.pattern.permute.xlu0 0
  %20 = vperm.xlu0 %19, %v17
  %v21 = vpop.permute.xlu0 %20
  %vm23 = vcmask 64512
  %v25 = vsel %vm23, %v15, 0
  %vm27 = vcmask 1043456
  %v29 = vsel %vm27, %v16, 0
  %31 = vmatprep.subr.bf16.mxu0 0
  %32 = vmatpush1.bf16.msra.mxu0 %v29
  %33 = vmatprep.subr.bf16.mxu0 0
  %34 = vmatpush1.bf16.msra.mxu0 0
  %35 = vmatprep.subr.bf16.mxu0 0
  %36 = vmatpush1.bf16.msra.mxu0 0
  %37 = vmatprep.subr.bf16.mxu0 0
  %38 = vmatpush1.bf16.msra.mxu0 0
  %39 = vmatprep.subr.bf16.mxu0 0
  %40 = vmatpush1.bf16.msra.mxu0 0
  %41 = vmatprep.subr.bf16.mxu0 0
  %42 = vmatpush1.bf16.msra.mxu0 0
  %43 = vmatprep.subr.bf16.mxu0 0
  %44 = vmatpush1.bf16.msra.mxu0 0
  %45 = vmatprep.subr.bf16.mxu0 0
  %46 = vmatpush1.bf16.msra.mxu0 0
  %47 = vmatprep.subr.bf16.mxu0 0
  %48 = vmatpush1.bf16.msra.mxu0 0
  %49 = vmatprep.subr.bf16.mxu0 0
  %50 = vmatpush1.bf16.msra.mxu0 0
  %51 = vmatprep.subr.bf16.mxu0 0
  %52 = vmatpush1.bf16.msra.mxu0 0
  %53 = vmatprep.subr.bf16.mxu0 0
  %54 = vmatpush1.bf16.msra.mxu0 0
  %55 = vmatprep.subr.bf16.mxu0 0
  %56 = vmatpush1.bf16.msra.mxu0 0
  %57 = vmatprep.subr.bf16.mxu0 0
  %58 = vmatpush1.bf16.msra.mxu0 0
  %59 = vmatprep.subr.bf16.mxu0 0
  %60 = vmatpush1.bf16.msra.mxu0 0
  %61 = vmatprep.subr.bf16.mxu0 0
  %62 = vmatpush1.bf16.msra.mxu0 0
  %63 = vmatprep.mubr.bf16.mxu0 0
  %64 = vmatmul.mubr.bf16.gmra.mrb[0].mxu0 %v25
  %v65 = vpop.f32.mrb[0].mxu0
  %v66 = vadd.f32 %v21, %v65
  %v67 = vpop.f32.mrb[0].mxu0
  %v68 = vpop.f32.mrb[0].mxu0
  %v69 = vpop.f32.mrb[0].mxu0
  %70 = vdwg.mxu0
  %v71 = vmax.f32 %v66, 0.0
  %72 = vst [vmem:[%s3] sm:$0xf] %v71
  // Predicated region
  $region14: #{_lambda_.60} parent=0 // pred_check
    _
  $region15: #{_lambda_.60} parent=0 // pred_check_branch
    %74 = sbr.rel (0) target = $region17
  $region16: #{_lambda_.60} parent=0 // pred_region
    _
  $region17: #{_lambda_.60} parent=0 // pred_fallthru
    _
  // Predicated region
  $region18: #{_lambda_.60} parent=0 // pred_check
    _
  $region19: #{_lambda_.60} parent=0 // pred_check_branch
    %76 = sbr.rel (0) target = $region21
  $region20: #{_lambda_.60} parent=0 // pred_region
    _
  $region21: #{_lambda_.60} parent=0 // pred_fallthru
    _

// kernel: _lambda_.59
$region0: #{_lambda_.59}
  #allocation0 [shape = 'u32[]', space=smem, size = 0x4, offset = 0x4, fixed_abs, tag = 'smem constant byte address 0x4 - core index']
  #allocation1 [shape = 'u32[144,128]{1,0:T(1,128)}', space=vmem, size = 0x12000, scoped, tag = 'internal scratch']
  %s0 = inlined_call_operand.vmem [shape: bf16[72,128], index: 0, kind: input, shape index: {}]
  %s1 = inlined_call_operand.vmem [shape: f32[8,128], index: 1, kind: input, shape index: {}]
  %s2 = inlined_call_operand.vmem [shape: bf16[8,72], index: 2, kind: input, shape index: {}]
  %s3 = inlined_call_operand.vmem [shape: f32[8,1], index: 3, kind: input, shape index: {}]
  %s4 = inlined_call_operand.vmem [shape: f32[8,8], index: 4, kind: input, shape index: {}]
  %s5 = inlined_call_operand.vmem [shape: f32[8,1], index: 5, kind: input, shape index: {}]
  %s6 = inlined_call_operand.vmem [shape: f32[8,128], index: 6, kind: output, shape index: {}]
  %s7 = sld [smem:[#allocation0]]
  $region34: #{_lambda_.59} parent=0
    _
  %s9 = ssub.s32 1, %s7
  %s10 = scalar_select 0, %s9, %s7
  // Predicated region
  $region2: #{_lambda_.59} parent=0 // pred_check
    _
  $region3: #{_lambda_.59} parent=0 // pred_check_branch
    %12 = sbr.rel (0) target = $region5
  $region4: #{_lambda_.59} parent=0 // pred_region
    _
  $region5: #{_lambda_.59} parent=0 // pred_fallthru
    _
  // Predicated region
  $region6: #{_lambda_.59} parent=0 // pred_check
    _
  $region7: #{_lambda_.59} parent=0 // pred_check_branch
    %14 = sbr.rel (0) target = $region9
  $region8: #{_lambda_.59} parent=0 // pred_region
    _
  $region9: #{_lambda_.59} parent=0 // pred_fallthru
    _
  // Predicated region
  $region10: #{_lambda_.59} parent=0 // pred_check
    _
  $region11: #{_lambda_.59} parent=0 // pred_check_branch
    %16 = sbr.rel (0) target = $region13
  $region12: #{_lambda_.59} parent=0 // pred_region
    _
  $region13: #{_lambda_.59} parent=0 // pred_fallthru
    _
  // Predicated region
  $region14: #{_lambda_.59} parent=0 // pred_check
    _
  $region15: #{_lambda_.59} parent=0 // pred_check_branch
    %18 = sbr.rel (0) target = $region17
  $region16: #{_lambda_.59} parent=0 // pred_region
    _
  $region17: #{_lambda_.59} parent=0 // pred_fallthru
    _
  // Predicated region
  $region18: #{_lambda_.59} parent=0 // pred_check
    _
  $region19: #{_lambda_.59} parent=0 // pred_check_branch
    %20 = sbr.rel (0) target = $region21
  $region20: #{_lambda_.59} parent=0 // pred_region
    _
  $region21: #{_lambda_.59} parent=0 // pred_fallthru
    _
  // Predicated region
  $region22: #{_lambda_.59} parent=0 // pred_check
    _
  $region23: #{_lambda_.59} parent=0 // pred_check_branch
    %22 = sbr.rel (0) target = $region25
  $region24: #{_lambda_.59} parent=0 // pred_region
    _
  $region25: #{_lambda_.59} parent=0 // pred_fallthru
    _
  %v24 = vld [vmem:[%s2] sm:$0xf]
  %v25 = vld [vmem:[%s0] sm:$0xf]
  %v26 = vld [vmem:[%s0 + $0x4] sm:$0xf]
  %v27 = vld [vmem:[%s0 + $0x8] sm:$0xf]
  %v28 = vld [vmem:[%s0 + $0xc] sm:$0xf]
  %v29 = vld [vmem:[%s0 + $0x10] sm:$0xf]
  %v30 = vld [vmem:[%s0 + $0x14] sm:$0xf]
  %v31 = vld [vmem:[%s0 + $0x18] sm:$0xf]
  %v32 = vld [vmem:[%s0 + $0x1c] sm:$0xf]
  %v33 = vld [vmem:[%s0 + $0x20] sm:$0xf]
  %v34 = vld [vmem:[%s3] sm:$0xff]
  %36 = vset.pattern.permute.xlu0 0
  %37 = vperm.xlu0 %36, %v34
  %v38 = vpop.permute.xlu0 %37
  %v49 = vunpack.c.l.b16 %v25
  %v50 = vunpack.c.l.b16 %v26
  %v51 = vunpack.c.l.b16 %v27
  %v52 = vunpack.c.l.b16 %v28
  %v53 = vunpack.c.l.b16 %v29
  %v54 = vunpack.c.l.b16 %v30
  %v55 = vunpack.c.l.b16 %v31
  %v56 = vunpack.c.l.b16 %v32
  %v57 = vunpack.c.l.b16 %v33
  %v58 = vpack.c.b16 %v50, %v49
  %v59 = vpack.c.b16 %v52, %v51
  %v60 = vpack.c.b16 %v54, %v53
  %v61 = vpack.c.b16 %v56, %v55
  %v62 = vpack.c.b16 %v57, %v57
  %vm67 = vcmask 588800
  %v69 = vsel %vm67, %v24, 0
  %vm71 = vcmask 1043456
  %v73 = vsel %vm71, %v62, 0
  %75 = vmatprep.subr.bf16.mxu0 0
  %76 = vmatpush1.bf16.msra.mxu0 %v58
  %77 = vmatprep.subr.bf16.mxu0 0
  %78 = vmatpush1.bf16.msra.mxu0 %v59
  %79 = vmatprep.subr.bf16.mxu0 0
  %80 = vmatpush1.bf16.msra.mxu0 %v60
  %81 = vmatprep.subr.bf16.mxu0 0
  %82 = vmatpush1.bf16.msra.mxu0 %v61
  %83 = vmatprep.subr.bf16.mxu0 0
  %84 = vmatpush1.bf16.msra.mxu0 %v73
  %85 = vmatprep.subr.bf16.mxu0 0
  %86 = vmatpush1.bf16.msra.mxu0 0
  %87 = vmatprep.subr.bf16.mxu0 0
  %88 = vmatpush1.bf16.msra.mxu0 0
  %89 = vmatprep.subr.bf16.mxu0 0
  %90 = vmatpush1.bf16.msra.mxu0 0
  %91 = vmatprep.subr.bf16.mxu0 0
  %92 = vmatpush1.bf16.msra.mxu0 0
  %93 = vmatprep.subr.bf16.mxu0 0
  %94 = vmatpush1.bf16.msra.mxu0 0
  %95 = vmatprep.subr.bf16.mxu0 0
  %96 = vmatpush1.bf16.msra.mxu0 0
  %97 = vmatprep.subr.bf16.mxu0 0
  %98 = vmatpush1.bf16.msra.mxu0 0
  %99 = vmatprep.subr.bf16.mxu0 0
  %100 = vmatpush1.bf16.msra.mxu0 0
  %101 = vmatprep.subr.bf16.mxu0 0
  %102 = vmatpush1.bf16.msra.mxu0 0
  %103 = vmatprep.subr.bf16.mxu0 0
  %104 = vmatpush1.bf16.msra.mxu0 0
  %105 = vmatprep.subr.bf16.mxu0 0
  %106 = vmatpush1.bf16.msra.mxu0 0
  %107 = vmatprep.mubr.bf16.mxu0 0
  %108 = vmatmul.mubr.bf16.gmra.mrb[0].mxu0 %v69
  %v109 = vpop.f32.mrb[0].mxu0
  %v110 = vadd.f32 %v38, %v109
  %v111 = vpop.f32.mrb[0].mxu0
  %v112 = vpop.f32.mrb[0].mxu0
  %v113 = vpop.f32.mrb[0].mxu0
  %114 = vdwg.mxu0
  %v115 = vld [vmem:[%s4] sm:$0xff]
  %v116 = vmul.f32 %v110, %v110
  %v117 = vld [vmem:[%s5] sm:$0xff]
  %119 = vset.pattern.permute.xlu0 0
  %120 = vperm.xlu0 %119, %v117
  %v121 = vpop.permute.xlu0 %120
  %vm123 = vcmask 64512
  %v125 = vsel %vm123, %v115, 0
  %127 = vmatprep.subr.mxu0 0.0
  %128 = vmatpush1.msra.mxu0 %v116
  %129 = vmatprep.subr.mxu0 0.0
  %130 = vmatpush1.msra.mxu0 0.0
  %131 = vmatprep.subr.mxu0 0.0
  %132 = vmatpush1.msra.mxu0 0.0
  %133 = vmatprep.subr.mxu0 0.0
  %134 = vmatpush1.msra.mxu0 0.0
  %135 = vmatprep.subr.mxu0 0.0
  %136 = vmatpush1.msra.mxu0 0.0
  %137 = vmatprep.subr.mxu0 0.0
  %138 = vmatpush1.msra.mxu0 0.0
  %139 = vmatprep.subr.mxu0 0.0
  %140 = vmatpush1.msra.mxu0 0.0
  %141 = vmatprep.subr.mxu0 0.0
  %142 = vmatpush1.msra.mxu0 0.0
  %143 = vmatprep.subr.mxu0 0.0
  %144 = vmatpush1.msra.mxu0 0.0
  %145 = vmatprep.subr.mxu0 0.0
  %146 = vmatpush1.msra.mxu0 0.0
  %147 = vmatprep.subr.mxu0 0.0
  %148 = vmatpush1.msra.mxu0 0.0
  %149 = vmatprep.subr.mxu0 0.0
  %150 = vmatpush1.msra.mxu0 0.0
  %151 = vmatprep.subr.mxu0 0.0
  %152 = vmatpush1.msra.mxu0 0.0
  %153 = vmatprep.subr.mxu0 0.0
  %154 = vmatpush1.msra.mxu0 0.0
  %155 = vmatprep.subr.mxu0 0.0
  %156 = vmatpush1.msra.mxu0 0.0
  %157 = vmatprep.subr.mxu0 0.0
  %158 = vmatpush1.msra.mxu0 0.0
  %159 = vmatprep.subr.mxu0 0.0
  %160 = vmatpush1.msra.mxu0 0.0
  %161 = vmatprep.subr.mxu0 0.0
  %162 = vmatpush1.msra.mxu0 0.0
  %163 = vmatprep.subr.mxu0 0.0
  %164 = vmatpush1.msra.mxu0 0.0
  %165 = vmatprep.subr.mxu0 0.0
  %166 = vmatpush1.msra.mxu0 0.0
  %167 = vmatprep.subr.mxu0 0.0
  %168 = vmatpush1.msra.mxu0 0.0
  %169 = vmatprep.subr.mxu0 0.0
  %170 = vmatpush1.msra.mxu0 0.0
  %171 = vmatprep.subr.mxu0 0.0
  %172 = vmatpush1.msra.mxu0 0.0
  %173 = vmatprep.subr.mxu0 0.0
  %174 = vmatpush1.msra.mxu0 0.0
  %175 = vmatprep.subr.mxu0 0.0
  %176 = vmatpush1.msra.mxu0 0.0
  %177 = vmatprep.subr.mxu0 0.0
  %178 = vmatpush1.msra.mxu0 0.0
  %179 = vmatprep.subr.mxu0 0.0
  %180 = vmatpush1.msra.mxu0 0.0
  %181 = vmatprep.subr.mxu0 0.0
  %182 = vmatpush1.msra.mxu0 0.0
  %183 = vmatprep.subr.mxu0 0.0
  %184 = vmatpush1.msra.mxu0 0.0
  %185 = vmatprep.subr.mxu0 0.0
  %186 = vmatpush1.msra.mxu0 0.0
  %187 = vmatprep.subr.mxu0 0.0
  %188 = vmatpush1.msra.mxu0 0.0
  %189 = vmatprep.subr.mxu0 0.0
  %190 = vmatpush1.msra.mxu0 0.0
  %191 = vmatprep.mubr.f32.mxu0 0.0
  %192 = vmatmul.mubr.f32.gmra.mrb[0].mxu0 %v125
  %v193 = vpop.f32.mrb[0].mxu0
  %v194 = vadd.f32 %v121, %v193
  %v195 = vpop.f32.mrb[0].mxu0
  %196 = vdwg.mxu0
  %v197 = vmax.f32 %v194, 1e-12
  %v198 = vrsqrt.pop %v197
  %v199 = vmul.f32 %v110, %v198
  %v200 = vld [vmem:[%s1] sm:$0xff]
  %v201 = vadd.f32 %v199, %v200
  %202 = vst [vmem:[%s6] sm:$0xff] %v201
  // Predicated region
  $region26: #{_lambda_.59} parent=0 // pred_check
    _
  $region27: #{_lambda_.59} parent=0 // pred_check_branch
    %204 = sbr.rel (0) target = $region29
  $region28: #{_lambda_.59} parent=0 // pred_region
    _
  $region29: #{_lambda_.59} parent=0 // pred_fallthru
    _
  // Predicated region
  $region30: #{_lambda_.59} parent=0 // pred_check
    _
  $region31: #{_lambda_.59} parent=0 // pred_check_branch
    %206 = sbr.rel (0) target = $region33
  $region32: #{_lambda_.59} parent=0 // pred_region
    _
  $region33: #{_lambda_.59} parent=0 // pred_fallthru
    _

// kernel: _lambda_.61
$region0: #{_lambda_.61}
  #allocation0 [shape = 'u32[]', space=smem, size = 0x4, offset = 0x4, fixed_abs, tag = 'smem constant byte address 0x4 - core index']
  #allocation1 [shape = 'u32[144,128]{1,0:T(1,128)}', space=vmem, size = 0x12000, scoped, tag = 'internal scratch']
  %s0 = inlined_call_operand.vmem [shape: bf16[36,128], index: 0, kind: input, shape index: {}]
  %s1 = inlined_call_operand.vmem [shape: f32[8,128], index: 1, kind: input, shape index: {}]
  %s2 = inlined_call_operand.vmem [shape: bf16[4,36], index: 2, kind: input, shape index: {}]
  %s3 = inlined_call_operand.vmem [shape: f32[4,1], index: 3, kind: input, shape index: {}]
  %s4 = inlined_call_operand.vmem [shape: bf16[8,4], index: 4, kind: input, shape index: {}]
  %s5 = inlined_call_operand.vmem [shape: f32[8,1], index: 5, kind: input, shape index: {}]
  %s6 = inlined_call_operand.vmem [shape: f32[8,128], index: 6, kind: output, shape index: {}]
  %s7 = sld [smem:[#allocation0]]
  $region34: #{_lambda_.61} parent=0
    _
  %s9 = ssub.s32 1, %s7
  %s10 = scalar_select 0, %s9, %s7
  // Predicated region
  $region2: #{_lambda_.61} parent=0 // pred_check
    _
  $region3: #{_lambda_.61} parent=0 // pred_check_branch
    %12 = sbr.rel (0) target = $region5
  $region4: #{_lambda_.61} parent=0 // pred_region
    _
  $region5: #{_lambda_.61} parent=0 // pred_fallthru
    _
  // Predicated region
  $region6: #{_lambda_.61} parent=0 // pred_check
    _
  $region7: #{_lambda_.61} parent=0 // pred_check_branch
    %14 = sbr.rel (0) target = $region9
  $region8: #{_lambda_.61} parent=0 // pred_region
    _
  $region9: #{_lambda_.61} parent=0 // pred_fallthru
    _
  // Predicated region
  $region10: #{_lambda_.61} parent=0 // pred_check
    _
  $region11: #{_lambda_.61} parent=0 // pred_check_branch
    %16 = sbr.rel (0) target = $region13
  $region12: #{_lambda_.61} parent=0 // pred_region
    _
  $region13: #{_lambda_.61} parent=0 // pred_fallthru
    _
  // Predicated region
  $region14: #{_lambda_.61} parent=0 // pred_check
    _
  $region15: #{_lambda_.61} parent=0 // pred_check_branch
    %18 = sbr.rel (0) target = $region17
  $region16: #{_lambda_.61} parent=0 // pred_region
    _
  $region17: #{_lambda_.61} parent=0 // pred_fallthru
    _
  // Predicated region
  $region18: #{_lambda_.61} parent=0 // pred_check
    _
  $region19: #{_lambda_.61} parent=0 // pred_check_branch
    %20 = sbr.rel (0) target = $region21
  $region20: #{_lambda_.61} parent=0 // pred_region
    _
  $region21: #{_lambda_.61} parent=0 // pred_fallthru
    _
  // Predicated region
  $region22: #{_lambda_.61} parent=0 // pred_check
    _
  $region23: #{_lambda_.61} parent=0 // pred_check_branch
    %22 = sbr.rel (0) target = $region25
  $region24: #{_lambda_.61} parent=0 // pred_region
    _
  $region25: #{_lambda_.61} parent=0 // pred_fallthru
    _
  %v24 = vld [vmem:[%s2] sm:$0x3]
  %v25 = vld [vmem:[%s0] sm:$0xf]
  %v26 = vld [vmem:[%s0 + $0x4] sm:$0xf]
  %v27 = vld [vmem:[%s0 + $0x8] sm:$0xf]
  %v28 = vld [vmem:[%s0 + $0xc] sm:$0xf]
  %v29 = vld [vmem:[%s0 + $0x10] sm:$0x3]
  %v30 = vld [vmem:[%s3] sm:$0xf]
  %32 = vset.pattern.permute.xlu0 0
  %33 = vperm.xlu0 %32, %v30
  %v34 = vpop.permute.xlu0 %33
  %v41 = vunpack.c.l.b16 %v25
  %v42 = vunpack.c.l.b16 %v26
  %v43 = vunpack.c.l.b16 %v27
  %v44 = vunpack.c.l.b16 %v28
  %v45 = vunpack.c.l.b16 %v29
  %v46 = vpack.c.b16 %v42, %v41
  %v47 = vpack.c.b16 %v44, %v43
  %v48 = vpack.c.b16 %v45, %v45
  %vm51 = vcmask 293888
  %v53 = vsel %vm51, %v24, 0
  %vm55 = vcmask 1041408
  %v57 = vsel %vm55, %v48, 0
  %59 = vmatprep.subr.bf16.mxu0 0
  %60 = vmatpush1.bf16.msra.mxu0 %v46
  %61 = vmatprep.subr.bf16.mxu0 0
  %62 = vmatpush1.bf16.msra.mxu0 %v47
  %63 = vmatprep.subr.bf16.mxu0 0
  %64 = vmatpush1.bf16.msra.mxu0 %v57
  %65 = vmatprep.subr.bf16.mxu0 0
  %66 = vmatpush1.bf16.msra.mxu0 0
  %67 = vmatprep.subr.bf16.mxu0 0
  %68 = vmatpush1.bf16.msra.mxu0 0
  %69 = vmatprep.subr.bf16.mxu0 0
  %70 = vmatpush1.bf16.msra.mxu0 0
  %71 = vmatprep.subr.bf16.mxu0 0
  %72 = vmatpush1.bf16.msra.mxu0 0
  %73 = vmatprep.subr.bf16.mxu0 0
  %74 = vmatpush1.bf16.msra.mxu0 0
  %75 = vmatprep.subr.bf16.mxu0 0
  %76 = vmatpush1.bf16.msra.mxu0 0
  %77 = vmatprep.subr.bf16.mxu0 0
  %78 = vmatpush1.bf16.msra.mxu0 0
  %79 = vmatprep.subr.bf16.mxu0 0
  %80 = vmatpush1.bf16.msra.mxu0 0
  %81 = vmatprep.subr.bf16.mxu0 0
  %82 = vmatpush1.bf16.msra.mxu0 0
  %83 = vmatprep.subr.bf16.mxu0 0
  %84 = vmatpush1.bf16.msra.mxu0 0
  %85 = vmatprep.subr.bf16.mxu0 0
  %86 = vmatpush1.bf16.msra.mxu0 0
  %87 = vmatprep.subr.bf16.mxu0 0
  %88 = vmatpush1.bf16.msra.mxu0 0
  %89 = vmatprep.subr.bf16.mxu0 0
  %90 = vmatpush1.bf16.msra.mxu0 0
  %91 = vmatprep.mubr.bf16.mxu0 0
  %92 = vmatmul.mubr.bf16.gmra.mrb[0].mxu0 %v53
  %v93 = vpop.f32.mrb[0].mxu0
  %v94 = vadd.f32 %v34, %v93
  %v95 = vpop.f32.mrb[0].mxu0
  %v96 = vpop.f32.mrb[0].mxu0
  %v97 = vpop.f32.mrb[0].mxu0
  %98 = vdwg.mxu0
  %v99 = vmax.f32 %v94, 0.0
  %v100 = vpack.c.bf16 %v99, %v99
  %v101 = vld [vmem:[%s4] sm:$0xf]
  %v102 = vld [vmem:[%s5] sm:$0xff]
  %104 = vset.pattern.permute.xlu0 0
  %105 = vperm.xlu0 %104, %v102
  %v106 = vpop.permute.xlu0 %105
  %vm108 = vcmask 31744
  %v110 = vsel %vm108, %v101, 0
  %v113 = vsel %vm55, %v100, 0
  %115 = vmatprep.subr.bf16.mxu0 0
  %116 = vmatpush1.bf16.msra.mxu0 %v113
  %117 = vmatprep.subr.bf16.mxu0 0
  %118 = vmatpush1.bf16.msra.mxu0 0
  %119 = vmatprep.subr.bf16.mxu0 0
  %120 = vmatpush1.bf16.msra.mxu0 0
  %121 = vmatprep.subr.bf16.mxu0 0
  %122 = vmatpush1.bf16.msra.mxu0 0
  %123 = vmatprep.subr.bf16.mxu0 0
  %124 = vmatpush1.bf16.msra.mxu0 0
  %125 = vmatprep.subr.bf16.mxu0 0
  %126 = vmatpush1.bf16.msra.mxu0 0
  %127 = vmatprep.subr.bf16.mxu0 0
  %128 = vmatpush1.bf16.msra.mxu0 0
  %129 = vmatprep.subr.bf16.mxu0 0
  %130 = vmatpush1.bf16.msra.mxu0 0
  %131 = vmatprep.subr.bf16.mxu0 0
  %132 = vmatpush1.bf16.msra.mxu0 0
  %133 = vmatprep.subr.bf16.mxu0 0
  %134 = vmatpush1.bf16.msra.mxu0 0
  %135 = vmatprep.subr.bf16.mxu0 0
  %136 = vmatpush1.bf16.msra.mxu0 0
  %137 = vmatprep.subr.bf16.mxu0 0
  %138 = vmatpush1.bf16.msra.mxu0 0
  %139 = vmatprep.subr.bf16.mxu0 0
  %140 = vmatpush1.bf16.msra.mxu0 0
  %141 = vmatprep.subr.bf16.mxu0 0
  %142 = vmatpush1.bf16.msra.mxu0 0
  %143 = vmatprep.subr.bf16.mxu0 0
  %144 = vmatpush1.bf16.msra.mxu0 0
  %145 = vmatprep.subr.bf16.mxu0 0
  %146 = vmatpush1.bf16.msra.mxu0 0
  %147 = vmatprep.mubr.bf16.mxu0 0
  %148 = vmatmul.mubr.bf16.gmra.mrb[0].mxu0 %v110
  %v149 = vpop.f32.mrb[0].mxu0
  %v150 = vadd.f32 %v106, %v149
  %v151 = vpop.f32.mrb[0].mxu0
  %v152 = vpop.f32.mrb[0].mxu0
  %v153 = vpop.f32.mrb[0].mxu0
  %154 = vdwg.mxu0
  %v155 = vld [vmem:[%s1] sm:$0xff]
  %v156 = vadd.f32 %v150, %v155
  %157 = vst [vmem:[%s6] sm:$0xff] %v156
  // Predicated region
  $region26: #{_lambda_.61} parent=0 // pred_check
    _
  $region27: #{_lambda_.61} parent=0 // pred_check_branch
    %159 = sbr.rel (0) target = $region29
  $region28: #{_lambda_.61} parent=0 // pred_region
    _
  $region29: #{_lambda_.61} parent=0 // pred_fallthru
    _
  // Predicated region
  $region30: #{_lambda_.61} parent=0 // pred_check
    _
  $region31: #{_lambda_.61} parent=0 // pred_check_branch
    %161 = sbr.rel (0) target = $region33
  $region32: #{_lambda_.61} parent=0 // pred_region
    _
  $region33: #{_lambda_.61} parent=0 // pred_fallthru
    _

// kernel: _lambda_.56
$region0: #{_lambda_.56}
  #allocation0 [shape = 'u32[]', space=smem, size = 0x4, offset = 0x4, fixed_abs, tag = 'smem constant byte address 0x4 - core index']
  #allocation1 [shape = 'u32[144,128]{1,0:T(1,128)}', space=vmem, size = 0x12000, scoped, tag = 'internal scratch']
  %s0 = inlined_call_operand.vmem [shape: bf16[36,128], index: 0, kind: input, shape index: {}]
  %s1 = inlined_call_operand.vmem [shape: bf16[8,36], index: 1, kind: input, shape index: {}]
  %s2 = inlined_call_operand.vmem [shape: f32[8,1], index: 2, kind: input, shape index: {}]
  %s3 = inlined_call_operand.vmem [shape: f32[8,128], index: 3, kind: output, shape index: {}]
  %s4 = sld [smem:[#allocation0]]
  $region22: #{_lambda_.56} parent=0
    _
  %s6 = ssub.s32 1, %s4
  %s7 = scalar_select 0, %s6, %s4
  // Predicated region
  $region2: #{_lambda_.56} parent=0 // pred_check
    _
  $region3: #{_lambda_.56} parent=0 // pred_check_branch
    %9 = sbr.rel (0) target = $region5
  $region4: #{_lambda_.56} parent=0 // pred_region
    _
  $region5: #{_lambda_.56} parent=0 // pred_fallthru
    _
  // Predicated region
  $region6: #{_lambda_.56} parent=0 // pred_check
    _
  $region7: #{_lambda_.56} parent=0 // pred_check_branch
    %11 = sbr.rel (0) target = $region9
  $region8: #{_lambda_.56} parent=0 // pred_region
    _
  $region9: #{_lambda_.56} parent=0 // pred_fallthru
    _
  // Predicated region
  $region10: #{_lambda_.56} parent=0 // pred_check
    _
  $region11: #{_lambda_.56} parent=0 // pred_check_branch
    %13 = sbr.rel (0) target = $region13
  $region12: #{_lambda_.56} parent=0 // pred_region
    _
  $region13: #{_lambda_.56} parent=0 // pred_fallthru
    _
  %v15 = vld [vmem:[%s1] sm:$0xf]
  %v16 = vld [vmem:[%s0] sm:$0xf]
  %v17 = vld [vmem:[%s0 + $0x4] sm:$0xf]
  %v18 = vld [vmem:[%s0 + $0x8] sm:$0xf]
  %v19 = vld [vmem:[%s0 + $0xc] sm:$0xf]
  %v20 = vld [vmem:[%s0 + $0x10] sm:$0x3]
  %v21 = vld [vmem:[%s2] sm:$0xff]
  %23 = vset.pattern.permute.xlu0 0
  %24 = vperm.xlu0 %23, %v21
  %v25 = vpop.permute.xlu0 %24
  %v32 = vunpack.c.l.b16 %v16
  %v33 = vunpack.c.l.b16 %v17
  %v34 = vunpack.c.l.b16 %v18
  %v35 = vunpack.c.l.b16 %v19
  %v36 = vunpack.c.l.b16 %v20
  %v37 = vpack.c.b16 %v33, %v32
  %v38 = vpack.c.b16 %v35, %v34
  %v39 = vpack.c.b16 %v36, %v36
  %vm42 = vcmask 293888
  %v44 = vsel %vm42, %v15, 0
  %vm46 = vcmask 1041408
  %v48 = vsel %vm46, %v39, 0
  %50 = vmatprep.subr.bf16.mxu0 0
  %51 = vmatpush1.bf16.msra.mxu0 %v37
  %52 = vmatprep.subr.bf16.mxu0 0
  %53 = vmatpush1.bf16.msra.mxu0 %v38
  %54 = vmatprep.subr.bf16.mxu0 0
  %55 = vmatpush1.bf16.msra.mxu0 %v48
  %56 = vmatprep.subr.bf16.mxu0 0
  %57 = vmatpush1.bf16.msra.mxu0 0
  %58 = vmatprep.subr.bf16.mxu0 0
  %59 = vmatpush1.bf16.msra.mxu0 0
  %60 = vmatprep.subr.bf16.mxu0 0
  %61 = vmatpush1.bf16.msra.mxu0 0
  %62 = vmatprep.subr.bf16.mxu0 0
  %63 = vmatpush1.bf16.msra.mxu0 0
  %64 = vmatprep.subr.bf16.mxu0 0
  %65 = vmatpush1.bf16.msra.mxu0 0
  %66 = vmatprep.subr.bf16.mxu0 0
  %67 = vmatpush1.bf16.msra.mxu0 0
  %68 = vmatprep.subr.bf16.mxu0 0
  %69 = vmatpush1.bf16.msra.mxu0 0
  %70 = vmatprep.subr.bf16.mxu0 0
  %71 = vmatpush1.bf16.msra.mxu0 0
  %72 = vmatprep.subr.bf16.mxu0 0
  %73 = vmatpush1.bf16.msra.mxu0 0
  %74 = vmatprep.subr.bf16.mxu0 0
  %75 = vmatpush1.bf16.msra.mxu0 0
  %76 = vmatprep.subr.bf16.mxu0 0
  %77 = vmatpush1.bf16.msra.mxu0 0
  %78 = vmatprep.subr.bf16.mxu0 0
  %79 = vmatpush1.bf16.msra.mxu0 0
  %80 = vmatprep.subr.bf16.mxu0 0
  %81 = vmatpush1.bf16.msra.mxu0 0
  %82 = vmatprep.mubr.bf16.mxu0 0
  %83 = vmatmul.mubr.bf16.gmra.mrb[0].mxu0 %v44
  %v84 = vpop.f32.mrb[0].mxu0
  %v85 = vadd.f32 %v25, %v84
  %v86 = vpop.f32.mrb[0].mxu0
  %v87 = vpop.f32.mrb[0].mxu0
  %v88 = vpop.f32.mrb[0].mxu0
  %89 = vdwg.mxu0
  %90 = vst [vmem:[%s3] sm:$0xff] %v85
  // Predicated region
  $region14: #{_lambda_.56} parent=0 // pred_check
    _
  $region15: #{_lambda_.56} parent=0 // pred_check_branch
    %92 = sbr.rel (0) target = $region17
  $region16: #{_lambda_.56} parent=0 // pred_region
    _
  $region17: #{_lambda_.56} parent=0 // pred_fallthru
    _
  // Predicated region
  $region18: #{_lambda_.56} parent=0 // pred_check
    _
  $region19: #{_lambda_.56} parent=0 // pred_check_branch
    %94 = sbr.rel (0) target = $region21
  $region20: #{_lambda_.56} parent=0 // pred_region
    _
  $region21: #{_lambda_.56} parent=0 // pred_fallthru
    _

// kernel: _lambda_.57
$region0: #{_lambda_.57}
  #allocation0 [shape = 'u32[]', space=smem, size = 0x4, offset = 0x4, fixed_abs, tag = 'smem constant byte address 0x4 - core index']
  #allocation1 [shape = 'u32[144,128]{1,0:T(1,128)}', space=vmem, size = 0x12000, scoped, tag = 'internal scratch']
  %s0 = inlined_call_operand.vmem [shape: bf16[8,128], index: 0, kind: input, shape index: {}]
  %s1 = inlined_call_operand.vmem [shape: bf16[8,8], index: 1, kind: input, shape index: {}]
  %s2 = inlined_call_operand.vmem [shape: f32[8,1], index: 2, kind: input, shape index: {}]
  %s3 = inlined_call_operand.vmem [shape: f32[8,128], index: 3, kind: output, shape index: {}]
  %s4 = sld [smem:[#allocation0]]
  $region22: #{_lambda_.57} parent=0
    _
  %s6 = ssub.s32 1, %s4
  %s7 = scalar_select 0, %s6, %s4
  // Predicated region
  $region2: #{_lambda_.57} parent=0 // pred_check
    _
  $region3: #{_lambda_.57} parent=0 // pred_check_branch
    %9 = sbr.rel (0) target = $region5
  $region4: #{_lambda_.57} parent=0 // pred_region
    _
  $region5: #{_lambda_.57} parent=0 // pred_fallthru
    _
  // Predicated region
  $region6: #{_lambda_.57} parent=0 // pred_check
    _
  $region7: #{_lambda_.57} parent=0 // pred_check_branch
    %11 = sbr.rel (0) target = $region9
  $region8: #{_lambda_.57} parent=0 // pred_region
    _
  $region9: #{_lambda_.57} parent=0 // pred_fallthru
    _
  // Predicated region
  $region10: #{_lambda_.57} parent=0 // pred_check
    _
  $region11: #{_lambda_.57} parent=0 // pred_check_branch
    %13 = sbr.rel (0) target = $region13
  $region12: #{_lambda_.57} parent=0 // pred_region
    _
  $region13: #{_lambda_.57} parent=0 // pred_fallthru
    _
  %v15 = vld [vmem:[%s1] sm:$0xf]
  %v16 = vld [vmem:[%s0] sm:$0xf]
  %v17 = vld [vmem:[%s2] sm:$0xff]
  %19 = vset.pattern.permute.xlu0 0
  %20 = vperm.xlu0 %19, %v17
  %v21 = vpop.permute.xlu0 %20
  %vm23 = vcmask 64512
  %v25 = vsel %vm23, %v15, 0
  %vm27 = vcmask 1043456
  %v29 = vsel %vm27, %v16, 0
  %31 = vmatprep.subr.bf16.mxu0 0
  %32 = vmatpush1.bf16.msra.mxu0 %v29
  %33 = vmatprep.subr.bf16.mxu0 0
  %34 = vmatpush1.bf16.msra.mxu0 0
  %35 = vmatprep.subr.bf16.mxu0 0
  %36 = vmatpush1.bf16.msra.mxu0 0
  %37 = vmatprep.subr.bf16.mxu0 0
  %38 = vmatpush1.bf16.msra.mxu0 0
  %39 = vmatprep.subr.bf16.mxu0 0
  %40 = vmatpush1.bf16.msra.mxu0 0
  %41 = vmatprep.subr.bf16.mxu0 0
  %42 = vmatpush1.bf16.msra.mxu0 0
  %43 = vmatprep.subr.bf16.mxu0 0
  %44 = vmatpush1.bf16.msra.mxu0 0
  %45 = vmatprep.subr.bf16.mxu0 0
  %46 = vmatpush1.bf16.msra.mxu0 0
  %47 = vmatprep.subr.bf16.mxu0 0
  %48 = vmatpush1.bf16.msra.mxu0 0
  %49 = vmatprep.subr.bf16.mxu0 0
  %50 = vmatpush1.bf16.msra.mxu0 0
  %51 = vmatprep.subr.bf16.mxu0 0
  %52 = vmatpush1.bf16.msra.mxu0 0
  %53 = vmatprep.subr.bf16.mxu0 0
  %54 = vmatpush1.bf16.msra.mxu0 0
  %55 = vmatprep.subr.bf16.mxu0 0
  %56 = vmatpush1.bf16.msra.mxu0 0
  %57 = vmatprep.subr.bf16.mxu0 0
  %58 = vmatpush1.bf16.msra.mxu0 0
  %59 = vmatprep.subr.bf16.mxu0 0
  %60 = vmatpush1.bf16.msra.mxu0 0
  %61 = vmatprep.subr.bf16.mxu0 0
  %62 = vmatpush1.bf16.msra.mxu0 0
  %63 = vmatprep.mubr.bf16.mxu0 0
  %64 = vmatmul.mubr.bf16.gmra.mrb[0].mxu0 %v25
  %v65 = vpop.f32.mrb[0].mxu0
  %v66 = vadd.f32 %v21, %v65
  %v67 = vpop.f32.mrb[0].mxu0
  %v68 = vpop.f32.mrb[0].mxu0
  %v69 = vpop.f32.mrb[0].mxu0
  %70 = vdwg.mxu0
  %71 = vst [vmem:[%s3] sm:$0xff] %v66
  // Predicated region
  $region14: #{_lambda_.57} parent=0 // pred_check
    _
  $region15: #{_lambda_.57} parent=0 // pred_check_branch
    %73 = sbr.rel (0) target = $region17
  $region16: #{_lambda_.57} parent=0 // pred_region
    _
  $region17: #{_lambda_.57} parent=0 // pred_fallthru
    _
  // Predicated region
  $region18: #{_lambda_.57} parent=0 // pred_check
    _
  $region19: #{_lambda_.57} parent=0 // pred_check_branch
    %75 = sbr.rel (0) target = $region21
  $region20: #{_lambda_.57} parent=0 // pred_region
    _
  $region21: #{_lambda_.57} parent=0 // pred_fallthru
    _

// kernel: _lambda_.66
$region0: #{_lambda_.66}
  #allocation0 [shape = 'u32[]', space=smem, size = 0x4, offset = 0x4, fixed_abs, tag = 'smem constant byte address 0x4 - core index']
  #allocation1 [shape = 'u32[144,128]{1,0:T(1,128)}', space=vmem, size = 0x12000, scoped, tag = 'internal scratch']
  %s0 = inlined_call_operand.vmem [shape: bf16[72,128], index: 0, kind: input, shape index: {}]
  %s1 = inlined_call_operand.vmem [shape: bf16[16,72], index: 1, kind: input, shape index: {}]
  %s2 = inlined_call_operand.vmem [shape: f32[16,1], index: 2, kind: input, shape index: {}]
  %s3 = inlined_call_operand.vmem [shape: f32[16,128], index: 3, kind: output, shape index: {}]
  %s4 = sld [smem:[#allocation0]]
  $region22: #{_lambda_.66} parent=0
    _
  %s6 = ssub.s32 1, %s4
  %s7 = scalar_select 0, %s6, %s4
  // Predicated region
  $region2: #{_lambda_.66} parent=0 // pred_check
    _
  $region3: #{_lambda_.66} parent=0 // pred_check_branch
    %9 = sbr.rel (0) target = $region5
  $region4: #{_lambda_.66} parent=0 // pred_region
    _
  $region5: #{_lambda_.66} parent=0 // pred_fallthru
    _
  // Predicated region
  $region6: #{_lambda_.66} parent=0 // pred_check
    _
  $region7: #{_lambda_.66} parent=0 // pred_check_branch
    %11 = sbr.rel (0) target = $region9
  $region8: #{_lambda_.66} parent=0 // pred_region
    _
  $region9: #{_lambda_.66} parent=0 // pred_fallthru
    _
  // Predicated region
  $region10: #{_lambda_.66} parent=0 // pred_check
    _
  $region11: #{_lambda_.66} parent=0 // pred_check_branch
    %13 = sbr.rel (0) target = $region13
  $region12: #{_lambda_.66} parent=0 // pred_region
    _
  $region13: #{_lambda_.66} parent=0 // pred_fallthru
    _
  %v15 = vld [vmem:[%s1] sm:$0xf]
  %v16 = vld [vmem:[%s1 + $0x4] sm:$0xf]
  %v17 = vld [vmem:[%s0] sm:$0xf]
  %v18 = vld [vmem:[%s0 + $0x4] sm:$0xf]
  %v19 = vld [vmem:[%s0 + $0x8] sm:$0xf]
  %v20 = vld [vmem:[%s0 + $0xc] sm:$0xf]
  %v21 = vld [vmem:[%s0 + $0x10] sm:$0xf]
  %v22 = vld [vmem:[%s0 + $0x14] sm:$0xf]
  %v23 = vld [vmem:[%s0 + $0x18] sm:$0xf]
  %v24 = vld [vmem:[%s0 + $0x1c] sm:$0xf]
  %v25 = vld [vmem:[%s0 + $0x20] sm:$0xf]
  %v26 = vld [vmem:[%s2] sm:$0xff]
  %v27 = vld [vmem:[%s2 + $0x8] sm:$0xff]
  %29 = vset.pattern.permute.xlu0 0
  %30 = vperm.xlu0 %29, %v26
  %v31 = vpop.permute.xlu0 %30
  %34 = vset.pattern.permute.xlu0 0
  %35 = vperm.xlu0 %34, %v27
  %v36 = vpop.permute.xlu0 %35
  %v40 = vunpack.c.l.b16 %v15
  %v41 = vunpack.c.l.b16 %v16
  %v42 = vpack.c.b16 %v41, %v40
  %v52 = vunpack.c.l.b16 %v17
  %v53 = vunpack.c.l.b16 %v18
  %v54 = vunpack.c.l.b16 %v19
  %v55 = vunpack.c.l.b16 %v20
  %v56 = vunpack.c.l.b16 %v21
  %v57 = vunpack.c.l.b16 %v22
  %v58 = vunpack.c.l.b16 %v23
  %v59 = vunpack.c.l.b16 %v24
  %v60 = vunpack.c.l.b16 %v25
  %v61 = vpack.c.b16 %v53, %v52
  %v62 = vpack.c.b16 %v55, %v54
  %v63 = vpack.c.b16 %v57, %v56
  %v64 = vpack.c.b16 %v59, %v58
  %v65 = vpack.c.b16 %v60, %v60
  %vm70 = vcmask 588800
  %v72 = vsel %vm70, %v42, 0
  %vm74 = vcmask 1043456
  %v76 = vsel %vm74, %v65, 0
  %78 = vmatprep.subr.bf16.mxu0 0
  %79 = vmatpush1.bf16.msra.mxu0 %v61
  %80 = vmatprep.subr.bf16.mxu0 0
  %81 = vmatpush1.bf16.msra.mxu0 %v62
  %82 = vmatprep.subr.bf16.mxu0 0
  %83 = vmatpush1.bf16.msra.mxu0 %v63
  %84 = vmatprep.subr.bf16.mxu0 0
  %85 = vmatpush1.bf16.msra.mxu0 %v64
  %86 = vmatprep.subr.bf16.mxu0 0
  %87 = vmatpush1.bf16.msra.mxu0 %v76
  %88 = vmatprep.subr.bf16.mxu0 0
  %89 = vmatpush1.bf16.msra.mxu0 0
  %90 = vmatprep.subr.bf16.mxu0 0
  %91 = vmatpush1.bf16.msra.mxu0 0
  %92 = vmatprep.subr.bf16.mxu0 0
  %93 = vmatpush1.bf16.msra.mxu0 0
  %94 = vmatprep.subr.bf16.mxu0 0
  %95 = vmatpush1.bf16.msra.mxu0 0
  %96 = vmatprep.subr.bf16.mxu0 0
  %97 = vmatpush1.bf16.msra.mxu0 0
  %98 = vmatprep.subr.bf16.mxu0 0
  %99 = vmatpush1.bf16.msra.mxu0 0
  %100 = vmatprep.subr.bf16.mxu0 0
  %101 = vmatpush1.bf16.msra.mxu0 0
  %102 = vmatprep.subr.bf16.mxu0 0
  %103 = vmatpush1.bf16.msra.mxu0 0
  %104 = vmatprep.subr.bf16.mxu0 0
  %105 = vmatpush1.bf16.msra.mxu0 0
  %106 = vmatprep.subr.bf16.mxu0 0
  %107 = vmatpush1.bf16.msra.mxu0 0
  %108 = vmatprep.subr.bf16.mxu0 0
  %109 = vmatpush1.bf16.msra.mxu0 0
  %110 = vmatprep.mubr.bf16.mxu0 0
  %111 = vmatmul.mubr.bf16.gmra.mrb[0].mxu0 %v72
  %v112 = vpop.f32.mrb[0].mxu0
  %v113 = vadd.f32 %v31, %v112
  %v114 = vpop.f32.mrb[0].mxu0
  %v115 = vpop.f32.mrb[0].mxu0
  %v116 = vadd.f32 %v36, %v115
  %v117 = vpop.f32.mrb[0].mxu0
  %118 = vdwg.mxu0
  %v119 = vmax.f32 %v113, 0.0
  %v120 = vmax.f32 %v116, 0.0
  %121 = vst [vmem:[%s3] sm:$0xff] %v119
  %122 = vst [vmem:[%s3 + $0x8] sm:$0xff] %v120
  // Predicated region
  $region14: #{_lambda_.66} parent=0 // pred_check
    _
  $region15: #{_lambda_.66} parent=0 // pred_check_branch
    %124 = sbr.rel (0) target = $region17
  $region16: #{_lambda_.66} parent=0 // pred_region
    _
  $region17: #{_lambda_.66} parent=0 // pred_fallthru
    _
  // Predicated region
  $region18: #{_lambda_.66} parent=0 // pred_check
    _
  $region19: #{_lambda_.66} parent=0 // pred_check_branch
    %126 = sbr.rel (0) target = $region21
  $region20: #{_lambda_.66} parent=0 // pred_region
    _
  $region21: #{_lambda_.66} parent=0 // pred_fallthru
    _

// kernel: _lambda_.67
$region0: #{_lambda_.67}
  #allocation0 [shape = 'u32[]', space=smem, size = 0x4, offset = 0x4, fixed_abs, tag = 'smem constant byte address 0x4 - core index']
  #allocation1 [shape = 'u32[144,128]{1,0:T(1,128)}', space=vmem, size = 0x12000, scoped, tag = 'internal scratch']
  %s0 = inlined_call_operand.vmem [shape: bf16[144,128], index: 0, kind: input, shape index: {}]
  %s1 = inlined_call_operand.vmem [shape: f32[8,128], index: 1, kind: input, shape index: {}]
  %s2 = inlined_call_operand.vmem [shape: bf16[16,144], index: 2, kind: input, shape index: {}]
  %s3 = inlined_call_operand.vmem [shape: f32[16,1], index: 3, kind: input, shape index: {}]
  %s4 = inlined_call_operand.vmem [shape: f32[8,128], index: 4, kind: output, shape index: {}]
  %s5 = sld [smem:[#allocation0]]
  $region26: #{_lambda_.67} parent=0
    _
  %s7 = ssub.s32 1, %s5
  %s8 = scalar_select 0, %s7, %s5
  // Predicated region
  $region2: #{_lambda_.67} parent=0 // pred_check
    _
  $region3: #{_lambda_.67} parent=0 // pred_check_branch
    %10 = sbr.rel (0) target = $region5
  $region4: #{_lambda_.67} parent=0 // pred_region
    _
  $region5: #{_lambda_.67} parent=0 // pred_fallthru
    _
  // Predicated region
  $region6: #{_lambda_.67} parent=0 // pred_check
    _
  $region7: #{_lambda_.67} parent=0 // pred_check_branch
    %12 = sbr.rel (0) target = $region9
  $region8: #{_lambda_.67} parent=0 // pred_region
    _
  $region9: #{_lambda_.67} parent=0 // pred_fallthru
    _
  // Predicated region
  $region10: #{_lambda_.67} parent=0 // pred_check
    _
  $region11: #{_lambda_.67} parent=0 // pred_check_branch
    %14 = sbr.rel (0) target = $region13
  $region12: #{_lambda_.67} parent=0 // pred_region
    _
  $region13: #{_lambda_.67} parent=0 // pred_fallthru
    _
  // Predicated region
  $region14: #{_lambda_.67} parent=0 // pred_check
    _
  $region15: #{_lambda_.67} parent=0 // pred_check_branch
    %16 = sbr.rel (0) target = $region17
  $region16: #{_lambda_.67} parent=0 // pred_region
    _
  $region17: #{_lambda_.67} parent=0 // pred_fallthru
    _
  %v18 = vld [vmem:[%s2] sm:$0xff]
  %v19 = vld [vmem:[%s2 + $0x8] sm:$0xff]
  %v20 = vld [vmem:[%s0] sm:$0xf]
  %v21 = vld [vmem:[%s0 + $0x4] sm:$0xf]
  %v22 = vld [vmem:[%s0 + $0x8] sm:$0xf]
  %v23 = vld [vmem:[%s0 + $0xc] sm:$0xf]
  %v24 = vld [vmem:[%s0 + $0x10] sm:$0xf]
  %v25 = vld [vmem:[%s0 + $0x14] sm:$0xf]
  %v26 = vld [vmem:[%s0 + $0x18] sm:$0xf]
  %v27 = vld [vmem:[%s0 + $0x1c] sm:$0xf]
  %v28 = vld [vmem:[%s0 + $0x20] sm:$0xf]
  %v29 = vld [vmem:[%s0 + $0x24] sm:$0xf]
  %v30 = vld [vmem:[%s0 + $0x28] sm:$0xf]
  %v31 = vld [vmem:[%s0 + $0x2c] sm:$0xf]
  %v32 = vld [vmem:[%s0 + $0x30] sm:$0xf]
  %v33 = vld [vmem:[%s0 + $0x34] sm:$0xf]
  %v34 = vld [vmem:[%s0 + $0x38] sm:$0xf]
  %v35 = vld [vmem:[%s0 + $0x3c] sm:$0xf]
  %v36 = vld [vmem:[%s0 + $0x40] sm:$0xf]
  %v37 = vld [vmem:[%s0 + $0x44] sm:$0xf]
  %v38 = vld [vmem:[%s3] sm:$0xff]
  %v39 = vld [vmem:[%s3 + $0x8] sm:$0xff]
  %41 = vset.pattern.permute.xlu0 0
  %42 = vperm.xlu0 %41, %v38
  %v43 = vpop.permute.xlu0 %42
  %46 = vset.pattern.permute.xlu0 0
  %47 = vperm.xlu0 %46, %v39
  %v48 = vpop.permute.xlu0 %47
  %v52 = vunpack.c.l.b16 %v18
  %v53 = vunpack.c.h.b16 %v18
  %v54 = vunpack.c.l.b16 %v19
  %v55 = vunpack.c.h.b16 %v19
  %v56 = vpack.c.b16 %v54, %v52
  %v57 = vpack.c.b16 %v55, %v53
  %v77 = vunpack.c.l.b16 %v20
  %v78 = vunpack.c.l.b16 %v21
  %v79 = vunpack.c.l.b16 %v22
  %v80 = vunpack.c.l.b16 %v23
  %v81 = vunpack.c.l.b16 %v24
  %v82 = vunpack.c.l.b16 %v25
  %v83 = vunpack.c.l.b16 %v26
  %v84 = vunpack.c.l.b16 %v27
  %v85 = vunpack.c.l.b16 %v28
  %v86 = vunpack.c.l.b16 %v29
  %v87 = vunpack.c.l.b16 %v30
  %v88 = vunpack.c.l.b16 %v31
  %v89 = vunpack.c.l.b16 %v32
  %v90 = vunpack.c.l.b16 %v33
  %v91 = vunpack.c.l.b16 %v34
  %v92 = vunpack.c.l.b16 %v35
  %v93 = vunpack.c.l.b16 %v36
  %v94 = vunpack.c.l.b16 %v37
  %v95 = vpack.c.b16 %v78, %v77
  %v96 = vpack.c.b16 %v80, %v79
  %v97 = vpack.c.b16 %v82, %v81
  %v98 = vpack.c.b16 %v84, %v83
  %v99 = vpack.c.b16 %v86, %v85
  %v100 = vpack.c.b16 %v88, %v87
  %v101 = vpack.c.b16 %v90, %v89
  %v102 = vpack.c.b16 %v92, %v91
  %v103 = vpack.c.b16 %v94, %v93
  %vm113 = vcmask 130048
  %v115 = vsel %vm113, %v57, 0
  %117 = vmatprep.subr.bf16.mxu0 0
  %118 = vmatpush1.bf16.msra.mxu0 %v95
  %119 = vmatprep.subr.bf16.mxu0 0
  %120 = vmatpush1.bf16.msra.mxu0 %v96
  %121 = vmatprep.subr.bf16.mxu0 0
  %122 = vmatpush1.bf16.msra.mxu0 %v97
  %123 = vmatprep.subr.bf16.mxu0 0
  %124 = vmatpush1.bf16.msra.mxu0 %v98
  %125 = vmatprep.subr.bf16.mxu0 0
  %126 = vmatpush1.bf16.msra.mxu0 %v99
  %127 = vmatprep.subr.bf16.mxu0 0
  %128 = vmatpush1.bf16.msra.mxu0 %v100
  %129 = vmatprep.subr.bf16.mxu0 0
  %130 = vmatpush1.bf16.msra.mxu0 %v101
  %131 = vmatprep.subr.bf16.mxu0 0
  %132 = vmatpush1.bf16.msra.mxu0 %v102
  %133 = vmatprep.subr.bf16.mxu0 0
  %134 = vmatpush1.bf16.msra.mxu0 %v103
  %135 = vmatprep.subr.bf16.mxu0 0
  %136 = vmatpush1.bf16.msra.mxu0 0
  %137 = vmatprep.subr.bf16.mxu0 0
  %138 = vmatpush1.bf16.msra.mxu0 0
  %139 = vmatprep.subr.bf16.mxu0 0
  %140 = vmatpush1.bf16.msra.mxu0 0
  %141 = vmatprep.subr.bf16.mxu0 0
  %142 = vmatpush1.bf16.msra.mxu0 0
  %143 = vmatprep.subr.bf16.mxu0 0
  %144 = vmatpush1.bf16.msra.mxu0 0
  %145 = vmatprep.subr.bf16.mxu0 0
  %146 = vmatpush1.bf16.msra.mxu0 0
  %147 = vmatprep.subr.bf16.mxu0 0
  %148 = vmatpush1.bf16.msra.mxu0 0
  %149 = vmatprep.mubr.bf16.mxu0 %v115
  %150 = vmatmul.mubr.bf16.gmra.mrb[0].mxu0 %v56
  %v151 = vpop.f32.mrb[0].mxu0
  %v152 = vadd.f32 %v43, %v151
  %v153 = vpop.f32.mrb[0].mxu0
  %v154 = vpop.f32.mrb[0].mxu0
  %v155 = vadd.f32 %v48, %v154
  %v156 = vpop.f32.mrb[0].mxu0
  %157 = vdwg.mxu0
  %v158 = vld [vmem:[%s1] sm:$0xff]
  %v159 = vadd.f32 %v152, 1.0
  %v160 = vmul.f32 %v158, %v159
  %v161 = vadd.f32 %v160, %v155
  %162 = vst [vmem:[%s4] sm:$0xff] %v161
  // Predicated region
  $region18: #{_lambda_.67} parent=0 // pred_check
    _
  $region19: #{_lambda_.67} parent=0 // pred_check_branch
    %164 = sbr.rel (0) target = $region21
  $region20: #{_lambda_.67} parent=0 // pred_region
    _
  $region21: #{_lambda_.67} parent=0 // pred_fallthru
    _
  // Predicated region
  $region22: #{_lambda_.67} parent=0 // pred_check
    _
  $region23: #{_lambda_.67} parent=0 // pred_check_branch
    %166 = sbr.rel (0) target = $region25
  $region24: #{_lambda_.67} parent=0 // pred_region
    _
  $region25: #{_lambda_.67} parent=0 // pred_fallthru
    _

// kernel: _lambda_.70
$region0: #{_lambda_.70}
  #allocation0 [shape = 'u32[]', space=smem, size = 0x4, offset = 0x4, fixed_abs, tag = 'smem constant byte address 0x4 - core index']
  #allocation1 [shape = 'u32[144,128]{1,0:T(1,128)}', space=vmem, size = 0x12000, scoped, tag = 'internal scratch']
  %s0 = inlined_call_operand.vmem [shape: bf16[72,32], index: 0, kind: input, shape index: {}]
  %s1 = inlined_call_operand.vmem [shape: bf16[32,72], index: 1, kind: input, shape index: {}]
  %s2 = inlined_call_operand.vmem [shape: f32[32,1], index: 2, kind: input, shape index: {}]
  %s3 = inlined_call_operand.vmem [shape: f32[32,32], index: 3, kind: output, shape index: {}]
  %s4 = sld [smem:[#allocation0]]
  $region22: #{_lambda_.70} parent=0
    _
  %s6 = ssub.s32 1, %s4
  %s7 = scalar_select 0, %s6, %s4
  // Predicated region
  $region2: #{_lambda_.70} parent=0 // pred_check
    _
  $region3: #{_lambda_.70} parent=0 // pred_check_branch
    %9 = sbr.rel (0) target = $region5
  $region4: #{_lambda_.70} parent=0 // pred_region
    _
  $region5: #{_lambda_.70} parent=0 // pred_fallthru
    _
  // Predicated region
  $region6: #{_lambda_.70} parent=0 // pred_check
    _
  $region7: #{_lambda_.70} parent=0 // pred_check_branch
    %11 = sbr.rel (0) target = $region9
  $region8: #{_lambda_.70} parent=0 // pred_region
    _
  $region9: #{_lambda_.70} parent=0 // pred_fallthru
    _
  // Predicated region
  $region10: #{_lambda_.70} parent=0 // pred_check
    _
  $region11: #{_lambda_.70} parent=0 // pred_check_branch
    %13 = sbr.rel (0) target = $region13
  $region12: #{_lambda_.70} parent=0 // pred_region
    _
  $region13: #{_lambda_.70} parent=0 // pred_fallthru
    _
  %v15 = vld [vmem:[%s1] sm:$0xf]
  %v16 = vld [vmem:[%s1 + $0x4] sm:$0xf]
  %v17 = vld [vmem:[%s1 + $0x8] sm:$0xf]
  %v18 = vld [vmem:[%s1 + $0xc] sm:$0xf]
  %v19 = vld [vmem:[%s0] sm:$0xf]
  %v20 = vld [vmem:[%s0 + $0x4] sm:$0xf]
  %v21 = vld [vmem:[%s0 + $0x8] sm:$0xf]
  %v22 = vld [vmem:[%s0 + $0xc] sm:$0xf]
  %v23 = vld [vmem:[%s0 + $0x10] sm:$0xf]
  %v24 = vld [vmem:[%s0 + $0x14] sm:$0xf]
  %v25 = vld [vmem:[%s0 + $0x18] sm:$0xf]
  %v26 = vld [vmem:[%s0 + $0x1c] sm:$0xf]
  %v27 = vld [vmem:[%s0 + $0x20] sm:$0xf]
  %v28 = vld [vmem:[%s2] sm:$0xff]
  %v29 = vld [vmem:[%s2 + $0x8] sm:$0xff]
  %v30 = vld [vmem:[%s2 + $0x10] sm:$0xff]
  %v31 = vld [vmem:[%s2 + $0x18] sm:$0xff]
  %33 = vset.pattern.permute.xlu0 0
  %34 = vperm.xlu0 %33, %v28
  %v35 = vpop.permute.xlu0 %34
  %38 = vset.pattern.permute.xlu0 0
  %39 = vperm.xlu0 %38, %v29
  %v40 = vpop.permute.xlu0 %39
  %43 = vset.pattern.permute.xlu0 0
  %44 = vperm.xlu0 %43, %v30
  %v45 = vpop.permute.xlu0 %44
  %48 = vset.pattern.permute.xlu0 0
  %49 = vperm.xlu0 %48, %v31
  %v50 = vpop.permute.xlu0 %49
  %v56 = vunpack.c.l.b16 %v15
  %v57 = vunpack.c.l.b16 %v16
  %v58 = vunpack.c.l.b16 %v17
  %v59 = vunpack.c.l.b16 %v18
  %v60 = vpack.c.b16 %v57, %v56
  %v61 = vpack.c.b16 %v59, %v58
  %v71 = vunpack.c.l.b16 %v19
  %v72 = vunpack.c.l.b16 %v20
  %v73 = vunpack.c.l.b16 %v21
  %v74 = vunpack.c.l.b16 %v22
  %v75 = vunpack.c.l.b16 %v23
  %v76 = vunpack.c.l.b16 %v24
  %v77 = vunpack.c.l.b16 %v25
  %v78 = vunpack.c.l.b16 %v26
  %v79 = vunpack.c.l.b16 %v27
  %v80 = vpack.c.b16 %v72, %v71
  %v81 = vpack.c.b16 %v74, %v73
  %v82 = vpack.c.b16 %v76, %v75
  %v83 = vpack.c.b16 %v78, %v77
  %v84 = vpack.c.b16 %v79, %v79
  %vm89 = vcmask 588800
  %v91 = vsel %vm89, %v60, 0
  %v94 = vsel %vm89, %v61, 0
  %vm96 = vcmask 1043456
  %v98 = vsel %vm96, %v84, 0
  %100 = vmatprep.subr.bf16.mxu0 0
  %101 = vmatpush1.bf16.msra.mxu0 %v80
  %102 = vmatprep.subr.bf16.mxu0 0
  %103 = vmatpush1.bf16.msra.mxu0 %v81
  %104 = vmatprep.subr.bf16.mxu0 0
  %105 = vmatpush1.bf16.msra.mxu0 %v82
  %106 = vmatprep.subr.bf16.mxu0 0
  %107 = vmatpush1.bf16.msra.mxu0 %v83
  %108 = vmatprep.subr.bf16.mxu0 0
  %109 = vmatpush1.bf16.msra.mxu0 %v98
  %110 = vmatprep.subr.bf16.mxu0 0
  %111 = vmatpush1.bf16.msra.mxu0 0
  %112 = vmatprep.subr.bf16.mxu0 0
  %113 = vmatpush1.bf16.msra.mxu0 0
  %114 = vmatprep.subr.bf16.mxu0 0
  %115 = vmatpush1.bf16.msra.mxu0 0
  %116 = vmatprep.subr.bf16.mxu0 0
  %117 = vmatpush1.bf16.msra.mxu0 0
  %118 = vmatprep.subr.bf16.mxu0 0
  %119 = vmatpush1.bf16.msra.mxu0 0
  %120 = vmatprep.subr.bf16.mxu0 0
  %121 = vmatpush1.bf16.msra.mxu0 0
  %122 = vmatprep.subr.bf16.mxu0 0
  %123 = vmatpush1.bf16.msra.mxu0 0
  %124 = vmatprep.subr.bf16.mxu0 0
  %125 = vmatpush1.bf16.msra.mxu0 0
  %126 = vmatprep.subr.bf16.mxu0 0
  %127 = vmatpush1.bf16.msra.mxu0 0
  %128 = vmatprep.subr.bf16.mxu0 0
  %129 = vmatpush1.bf16.msra.mxu0 0
  %130 = vmatprep.subr.bf16.mxu0 0
  %131 = vmatpush1.bf16.msra.mxu0 0
  %132 = vmatprep.mubr.bf16.mxu0 0
  %133 = vmatmul.mubr.bf16.gmra.mrb[0].mxu0 %v91
  %v134 = vpop.f32.mrb[0].mxu0
  %v135 = vadd.f32 %v35, %v134
  %v136 = vpop.f32.mrb[0].mxu0
  %v137 = vpop.f32.mrb[0].mxu0
  %v138 = vadd.f32 %v40, %v137
  %v139 = vpop.f32.mrb[0].mxu0
  %140 = vmatprep.mubr.bf16.mxu0 0
  %141 = vmatmul.mubr.bf16.gmra.mrb[0].mxu0 %v94
  %v142 = vpop.f32.mrb[0].mxu0
  %v143 = vadd.f32 %v45, %v142
  %v144 = vpop.f32.mrb[0].mxu0
  %v145 = vpop.f32.mrb[0].mxu0
  %v146 = vadd.f32 %v50, %v145
  %v147 = vpop.f32.mrb[0].mxu0
  %148 = vdwg.mxu0
  %vm149 = vcmp.ge.f32.partialorder %v135, 0.0
  %vm150 = vcmp.ge.f32.partialorder %v138, 0.0
  %vm151 = vcmp.ge.f32.partialorder %v143, 0.0
  %vm152 = vcmp.ge.f32.partialorder %v146, 0.0
  %v153 = vmul.f32 %v135, 0.01
  %v154 = vmul.f32 %v138, 0.01
  %v155 = vmul.f32 %v143, 0.01
  %v156 = vmul.f32 %v146, 0.01
  %v157 = vsel %vm149, %v135, %v153
  %v158 = vsel %vm150, %v138, %v154
  %v159 = vsel %vm151, %v143, %v155
  %v160 = vsel %vm152, %v146, %v156
  %v161 = vlaneseq
  %v162 = vshrl.u32 %v161, 7
  %v163 = vadd.s32 %v162, 8
  %v164 = vadd.s32 %v162, 16
  %v165 = vadd.s32 %v162, 24
  %vm166 = vcmp.lt.s32.totalorder %v162, 16
  %vm167 = vcmp.lt.s32.totalorder %v163, 16
  %vm168 = vcmp.lt.s32.totalorder %v164, 16
  %vm169 = vcmp.lt.s32.totalorder %v165, 16
  %v170 = vsel %vm166, %v157, %v135
  %v171 = vsel %vm167, %v158, %v138
  %v172 = vsel %vm168, %v159, %v143
  %v173 = vsel %vm169, %v160, %v146
  %vm174 = vcmask 261120
  %175 = vst.msk [vmem:[%s3] sm:$0xff] %vm174, %v170
  %176 = vst.msk [vmem:[%s3 + $0x8] sm:$0xff] %vm174, %v171
  %177 = vst.msk [vmem:[%s3 + $0x10] sm:$0xff] %vm174, %v172
  %178 = vst.msk [vmem:[%s3 + $0x18] sm:$0xff] %vm174, %v173
  // Predicated region
  $region14: #{_lambda_.70} parent=0 // pred_check
    _
  $region15: #{_lambda_.70} parent=0 // pred_check_branch
    %180 = sbr.rel (0) target = $region17
  $region16: #{_lambda_.70} parent=0 // pred_region
    _
  $region17: #{_lambda_.70} parent=0 // pred_fallthru
    _
  // Predicated region
  $region18: #{_lambda_.70} parent=0 // pred_check
    _
  $region19: #{_lambda_.70} parent=0 // pred_check_branch
    %182 = sbr.rel (0) target = $region21
  $region20: #{_lambda_.70} parent=0 // pred_region
    _
  $region21: #{_lambda_.70} parent=0 // pred_fallthru
    _

// kernel: _lambda_.72
$region0: #{_lambda_.72}
  #allocation0 [shape = 'u32[]', space=smem, size = 0x4, offset = 0x4, fixed_abs, tag = 'smem constant byte address 0x4 - core index']
  #allocation1 [shape = 'u32[144,128]{1,0:T(1,128)}', space=vmem, size = 0x12000, scoped, tag = 'internal scratch']
  %s0 = inlined_call_operand.vmem [shape: bf16[16,32], index: 0, kind: input, shape index: {}]
  %s1 = inlined_call_operand.vmem [shape: bf16[8,16], index: 1, kind: input, shape index: {}]
  %s2 = inlined_call_operand.vmem [shape: f32[8,1], index: 2, kind: input, shape index: {}]
  %s3 = inlined_call_operand.vmem [shape: f32[8,32], index: 3, kind: output, shape index: {}]
  %s4 = sld [smem:[#allocation0]]
  $region22: #{_lambda_.72} parent=0
    _
  %s6 = ssub.s32 1, %s4
  %s7 = scalar_select 0, %s6, %s4
  // Predicated region
  $region2: #{_lambda_.72} parent=0 // pred_check
    _
  $region3: #{_lambda_.72} parent=0 // pred_check_branch
    %9 = sbr.rel (0) target = $region5
  $region4: #{_lambda_.72} parent=0 // pred_region
    _
  $region5: #{_lambda_.72} parent=0 // pred_fallthru
    _
  // Predicated region
  $region6: #{_lambda_.72} parent=0 // pred_check
    _
  $region7: #{_lambda_.72} parent=0 // pred_check_branch
    %11 = sbr.rel (0) target = $region9
  $region8: #{_lambda_.72} parent=0 // pred_region
    _
  $region9: #{_lambda_.72} parent=0 // pred_fallthru
    _
  // Predicated region
  $region10: #{_lambda_.72} parent=0 // pred_check
    _
  $region11: #{_lambda_.72} parent=0 // pred_check_branch
    %13 = sbr.rel (0) target = $region13
  $region12: #{_lambda_.72} parent=0 // pred_region
    _
  $region13: #{_lambda_.72} parent=0 // pred_fallthru
    _
  %v15 = vld [vmem:[%s1] sm:$0xf]
  %v16 = vld [vmem:[%s0] sm:$0xf]
  %v17 = vld [vmem:[%s0 + $0x4] sm:$0xf]
  %v18 = vld [vmem:[%s2] sm:$0xff]
  %20 = vset.pattern.permute.xlu0 0
  %21 = vperm.xlu0 %20, %v18
  %v22 = vpop.permute.xlu0 %21
  %v26 = vunpack.c.l.b16 %v16
  %v27 = vunpack.c.l.b16 %v17
  %v28 = vpack.c.b16 %v27, %v26
  %vm30 = vcmask 130048
  %v32 = vsel %vm30, %v15, 0
  %34 = vmatprep.subr.bf16.mxu0 0
  %35 = vmatpush1.bf16.msra.mxu0 %v28
  %36 = vmatprep.subr.bf16.mxu0 0
  %37 = vmatpush1.bf16.msra.mxu0 0
  %38 = vmatprep.subr.bf16.mxu0 0
  %39 = vmatpush1.bf16.msra.mxu0 0
  %40 = vmatprep.subr.bf16.mxu0 0
  %41 = vmatpush1.bf16.msra.mxu0 0
  %42 = vmatprep.subr.bf16.mxu0 0
  %43 = vmatpush1.bf16.msra.mxu0 0
  %44 = vmatprep.subr.bf16.mxu0 0
  %45 = vmatpush1.bf16.msra.mxu0 0
  %46 = vmatprep.subr.bf16.mxu0 0
  %47 = vmatpush1.bf16.msra.mxu0 0
  %48 = vmatprep.subr.bf16.mxu0 0
  %49 = vmatpush1.bf16.msra.mxu0 0
  %50 = vmatprep.subr.bf16.mxu0 0
  %51 = vmatpush1.bf16.msra.mxu0 0
  %52 = vmatprep.subr.bf16.mxu0 0
  %53 = vmatpush1.bf16.msra.mxu0 0
  %54 = vmatprep.subr.bf16.mxu0 0
  %55 = vmatpush1.bf16.msra.mxu0 0
  %56 = vmatprep.subr.bf16.mxu0 0
  %57 = vmatpush1.bf16.msra.mxu0 0
  %58 = vmatprep.subr.bf16.mxu0 0
  %59 = vmatpush1.bf16.msra.mxu0 0
  %60 = vmatprep.subr.bf16.mxu0 0
  %61 = vmatpush1.bf16.msra.mxu0 0
  %62 = vmatprep.subr.bf16.mxu0 0
  %63 = vmatpush1.bf16.msra.mxu0 0
  %64 = vmatprep.subr.bf16.mxu0 0
  %65 = vmatpush1.bf16.msra.mxu0 0
  %66 = vmatprep.mubr.bf16.mxu0 0
  %67 = vmatmul.mubr.bf16.gmra.mrb[0].mxu0 %v32
  %v68 = vpop.f32.mrb[0].mxu0
  %v69 = vadd.f32 %v22, %v68
  %v70 = vpop.f32.mrb[0].mxu0
  %v71 = vpop.f32.mrb[0].mxu0
  %v72 = vpop.f32.mrb[0].mxu0
  %73 = vdwg.mxu0
  %v74 = vmax.f32 %v69, 0.0
  %vm75 = vcmask 261120
  %76 = vst.msk [vmem:[%s3] sm:$0xff] %vm75, %v74
  // Predicated region
  $region14: #{_lambda_.72} parent=0 // pred_check
    _
  $region15: #{_lambda_.72} parent=0 // pred_check_branch
    %78 = sbr.rel (0) target = $region17
  $region16: #{_lambda_.72} parent=0 // pred_region
    _
  $region17: #{_lambda_.72} parent=0 // pred_fallthru
    _
  // Predicated region
  $region18: #{_lambda_.72} parent=0 // pred_check
    _
  $region19: #{_lambda_.72} parent=0 // pred_check_branch
    %80 = sbr.rel (0) target = $region21
  $region20: #{_lambda_.72} parent=0 // pred_region
    _
  $region21: #{_lambda_.72} parent=0 // pred_fallthru
    _

// kernel: _lambda_.71
$region0: #{_lambda_.71}
  #allocation0 [shape = 'u32[]', space=smem, size = 0x4, offset = 0x4, fixed_abs, tag = 'smem constant byte address 0x4 - core index']
  #allocation1 [shape = 'u32[144,128]{1,0:T(1,128)}', space=vmem, size = 0x12000, scoped, tag = 'internal scratch']
  %s0 = inlined_call_operand.vmem [shape: bf16[144,32], index: 0, kind: input, shape index: {}]
  %s1 = inlined_call_operand.vmem [shape: f32[16,32], index: 1, kind: input, shape index: {}]
  %s2 = inlined_call_operand.vmem [shape: bf16[16,144], index: 2, kind: input, shape index: {}]
  %s3 = inlined_call_operand.vmem [shape: f32[16,1], index: 3, kind: input, shape index: {}]
  %s4 = inlined_call_operand.vmem [shape: f32[16,16], index: 4, kind: input, shape index: {}]
  %s5 = inlined_call_operand.vmem [shape: f32[16,1], index: 5, kind: input, shape index: {}]
  %s6 = inlined_call_operand.vmem [shape: f32[16,32], index: 6, kind: output, shape index: {}]
  %s7 = sld [smem:[#allocation0]]
  $region34: #{_lambda_.71} parent=0
    _
  %s9 = ssub.s32 1, %s7
  %s10 = scalar_select 0, %s9, %s7
  // Predicated region
  $region2: #{_lambda_.71} parent=0 // pred_check
    _
  $region3: #{_lambda_.71} parent=0 // pred_check_branch
    %12 = sbr.rel (0) target = $region5
  $region4: #{_lambda_.71} parent=0 // pred_region
    _
  $region5: #{_lambda_.71} parent=0 // pred_fallthru
    _
  // Predicated region
  $region6: #{_lambda_.71} parent=0 // pred_check
    _
  $region7: #{_lambda_.71} parent=0 // pred_check_branch
    %14 = sbr.rel (0) target = $region9
  $region8: #{_lambda_.71} parent=0 // pred_region
    _
  $region9: #{_lambda_.71} parent=0 // pred_fallthru
    _
  // Predicated region
  $region10: #{_lambda_.71} parent=0 // pred_check
    _
  $region11: #{_lambda_.71} parent=0 // pred_check_branch
    %16 = sbr.rel (0) target = $region13
  $region12: #{_lambda_.71} parent=0 // pred_region
    _
  $region13: #{_lambda_.71} parent=0 // pred_fallthru
    _
  // Predicated region
  $region14: #{_lambda_.71} parent=0 // pred_check
    _
  $region15: #{_lambda_.71} parent=0 // pred_check_branch
    %18 = sbr.rel (0) target = $region17
  $region16: #{_lambda_.71} parent=0 // pred_region
    _
  $region17: #{_lambda_.71} parent=0 // pred_fallthru
    _
  // Predicated region
  $region18: #{_lambda_.71} parent=0 // pred_check
    _
  $region19: #{_lambda_.71} parent=0 // pred_check_branch
    %20 = sbr.rel (0) target = $region21
  $region20: #{_lambda_.71} parent=0 // pred_region
    _
  $region21: #{_lambda_.71} parent=0 // pred_fallthru
    _
  // Predicated region
  $region22: #{_lambda_.71} parent=0 // pred_check
    _
  $region23: #{_lambda_.71} parent=0 // pred_check_branch
    %22 = sbr.rel (0) target = $region25
  $region24: #{_lambda_.71} parent=0 // pred_region
    _
  $region25: #{_lambda_.71} parent=0 // pred_fallthru
    _
  %v24 = vld [vmem:[%s2] sm:$0xff]
  %v25 = vld [vmem:[%s2 + $0x8] sm:$0xff]
  %v26 = vld [vmem:[%s0] sm:$0xf]
  %v27 = vld [vmem:[%s0 + $0x4] sm:$0xf]
  %v28 = vld [vmem:[%s0 + $0x8] sm:$0xf]
  %v29 = vld [vmem:[%s0 + $0xc] sm:$0xf]
  %v30 = vld [vmem:[%s0 + $0x10] sm:$0xf]
  %v31 = vld [vmem:[%s0 + $0x14] sm:$0xf]
  %v32 = vld [vmem:[%s0 + $0x18] sm:$0xf]
  %v33 = vld [vmem:[%s0 + $0x1c] sm:$0xf]
  %v34 = vld [vmem:[%s0 + $0x20] sm:$0xf]
  %v35 = vld [vmem:[%s0 + $0x24] sm:$0xf]
  %v36 = vld [vmem:[%s0 + $0x28] sm:$0xf]
  %v37 = vld [vmem:[%s0 + $0x2c] sm:$0xf]
  %v38 = vld [vmem:[%s0 + $0x30] sm:$0xf]
  %v39 = vld [vmem:[%s0 + $0x34] sm:$0xf]
  %v40 = vld [vmem:[%s0 + $0x38] sm:$0xf]
  %v41 = vld [vmem:[%s0 + $0x3c] sm:$0xf]
  %v42 = vld [vmem:[%s0 + $0x40] sm:$0xf]
  %v43 = vld [vmem:[%s0 + $0x44] sm:$0xf]
  %v44 = vld [vmem:[%s3] sm:$0xff]
  %v45 = vld [vmem:[%s3 + $0x8] sm:$0xff]
  %47 = vset.pattern.permute.xlu0 0
  %48 = vperm.xlu0 %47, %v44
  %v49 = vpop.permute.xlu0 %48
  %52 = vset.pattern.permute.xlu0 0
  %53 = vperm.xlu0 %52, %v45
  %v54 = vpop.permute.xlu0 %53
  %v58 = vunpack.c.l.b16 %v24
  %v59 = vunpack.c.h.b16 %v24
  %v60 = vunpack.c.l.b16 %v25
  %v61 = vunpack.c.h.b16 %v25
  %v62 = vpack.c.b16 %v60, %v58
  %v63 = vpack.c.b16 %v61, %v59
  %v83 = vunpack.c.l.b16 %v26
  %v84 = vunpack.c.l.b16 %v27
  %v85 = vunpack.c.l.b16 %v28
  %v86 = vunpack.c.l.b16 %v29
  %v87 = vunpack.c.l.b16 %v30
  %v88 = vunpack.c.l.b16 %v31
  %v89 = vunpack.c.l.b16 %v32
  %v90 = vunpack.c.l.b16 %v33
  %v91 = vunpack.c.l.b16 %v34
  %v92 = vunpack.c.l.b16 %v35
  %v93 = vunpack.c.l.b16 %v36
  %v94 = vunpack.c.l.b16 %v37
  %v95 = vunpack.c.l.b16 %v38
  %v96 = vunpack.c.l.b16 %v39
  %v97 = vunpack.c.l.b16 %v40
  %v98 = vunpack.c.l.b16 %v41
  %v99 = vunpack.c.l.b16 %v42
  %v100 = vunpack.c.l.b16 %v43
  %v101 = vpack.c.b16 %v84, %v83
  %v102 = vpack.c.b16 %v86, %v85
  %v103 = vpack.c.b16 %v88, %v87
  %v104 = vpack.c.b16 %v90, %v89
  %v105 = vpack.c.b16 %v92, %v91
  %v106 = vpack.c.b16 %v94, %v93
  %v107 = vpack.c.b16 %v96, %v95
  %v108 = vpack.c.b16 %v98, %v97
  %v109 = vpack.c.b16 %v100, %v99
  %vm119 = vcmask 130048
  %v121 = vsel %vm119, %v63, 0
  %123 = vmatprep.subr.bf16.mxu0 0
  %124 = vmatpush1.bf16.msra.mxu0 %v101
  %125 = vmatprep.subr.bf16.mxu0 0
  %126 = vmatpush1.bf16.msra.mxu0 %v102
  %127 = vmatprep.subr.bf16.mxu0 0
  %128 = vmatpush1.bf16.msra.mxu0 %v103
  %129 = vmatprep.subr.bf16.mxu0 0
  %130 = vmatpush1.bf16.msra.mxu0 %v104
  %131 = vmatprep.subr.bf16.mxu0 0
  %132 = vmatpush1.bf16.msra.mxu0 %v105
  %133 = vmatprep.subr.bf16.mxu0 0
  %134 = vmatpush1.bf16.msra.mxu0 %v106
  %135 = vmatprep.subr.bf16.mxu0 0
  %136 = vmatpush1.bf16.msra.mxu0 %v107
  %137 = vmatprep.subr.bf16.mxu0 0
  %138 = vmatpush1.bf16.msra.mxu0 %v108
  %139 = vmatprep.subr.bf16.mxu0 0
  %140 = vmatpush1.bf16.msra.mxu0 %v109
  %141 = vmatprep.subr.bf16.mxu0 0
  %142 = vmatpush1.bf16.msra.mxu0 0
  %143 = vmatprep.subr.bf16.mxu0 0
  %144 = vmatpush1.bf16.msra.mxu0 0
  %145 = vmatprep.subr.bf16.mxu0 0
  %146 = vmatpush1.bf16.msra.mxu0 0
  %147 = vmatprep.subr.bf16.mxu0 0
  %148 = vmatpush1.bf16.msra.mxu0 0
  %149 = vmatprep.subr.bf16.mxu0 0
  %150 = vmatpush1.bf16.msra.mxu0 0
  %151 = vmatprep.subr.bf16.mxu0 0
  %152 = vmatpush1.bf16.msra.mxu0 0
  %153 = vmatprep.subr.bf16.mxu0 0
  %154 = vmatpush1.bf16.msra.mxu0 0
  %155 = vmatprep.mubr.bf16.mxu0 %v121
  %156 = vmatmul.mubr.bf16.gmra.mrb[0].mxu0 %v62
  %v157 = vpop.f32.mrb[0].mxu0
  %v158 = vadd.f32 %v49, %v157
  %v159 = vpop.f32.mrb[0].mxu0
  %v160 = vpop.f32.mrb[0].mxu0
  %v161 = vadd.f32 %v54, %v160
  %v162 = vpop.f32.mrb[0].mxu0
  %163 = vdwg.mxu0
  %v164 = vld [vmem:[%s4] sm:$0xff]
  %v165 = vld [vmem:[%s4 + $0x8] sm:$0xff]
  %v166 = vmul.f32 %v158, %v158
  %v167 = vmul.f32 %v161, %v161
  %v168 = vld [vmem:[%s5] sm:$0xff]
  %v169 = vld [vmem:[%s5 + $0x8] sm:$0xff]
  %171 = vset.pattern.permute.xlu0 0
  %172 = vperm.xlu0 %171, %v168
  %v173 = vpop.permute.xlu0 %172
  %176 = vset.pattern.permute.xlu0 0
  %177 = vperm.xlu0 %176, %v169
  %v178 = vpop.permute.xlu0 %177
  %v181 = vsel %vm119, %v164, 0
  %v184 = vsel %vm119, %v165, 0
  %186 = vmatprep.subr.mxu0 0.0
  %187 = vmatpush1.msra.mxu0 %v166
  %188 = vmatprep.subr.mxu0 0.0
  %189 = vmatpush1.msra.mxu0 %v167
  %190 = vmatprep.subr.mxu0 0.0
  %191 = vmatpush1.msra.mxu0 0.0
  %192 = vmatprep.subr.mxu0 0.0
  %193 = vmatpush1.msra.mxu0 0.0
  %194 = vmatprep.subr.mxu0 0.0
  %195 = vmatpush1.msra.mxu0 0.0
  %196 = vmatprep.subr.mxu0 0.0
  %197 = vmatpush1.msra.mxu0 0.0
  %198 = vmatprep.subr.mxu0 0.0
  %199 = vmatpush1.msra.mxu0 0.0
  %200 = vmatprep.subr.mxu0 0.0
  %201 = vmatpush1.msra.mxu0 0.0
  %202 = vmatprep.subr.mxu0 0.0
  %203 = vmatpush1.msra.mxu0 0.0
  %204 = vmatprep.subr.mxu0 0.0
  %205 = vmatpush1.msra.mxu0 0.0
  %206 = vmatprep.subr.mxu0 0.0
  %207 = vmatpush1.msra.mxu0 0.0
  %208 = vmatprep.subr.mxu0 0.0
  %209 = vmatpush1.msra.mxu0 0.0
  %210 = vmatprep.subr.mxu0 0.0
  %211 = vmatpush1.msra.mxu0 0.0
  %212 = vmatprep.subr.mxu0 0.0
  %213 = vmatpush1.msra.mxu0 0.0
  %214 = vmatprep.subr.mxu0 0.0
  %215 = vmatpush1.msra.mxu0 0.0
  %216 = vmatprep.subr.mxu0 0.0
  %217 = vmatpush1.msra.mxu0 0.0
  %218 = vmatprep.subr.mxu0 0.0
  %219 = vmatpush1.msra.mxu0 0.0
  %220 = vmatprep.subr.mxu0 0.0
  %221 = vmatpush1.msra.mxu0 0.0
  %222 = vmatprep.subr.mxu0 0.0
  %223 = vmatpush1.msra.mxu0 0.0
  %224 = vmatprep.subr.mxu0 0.0
  %225 = vmatpush1.msra.mxu0 0.0
  %226 = vmatprep.subr.mxu0 0.0
  %227 = vmatpush1.msra.mxu0 0.0
  %228 = vmatprep.subr.mxu0 0.0
  %229 = vmatpush1.msra.mxu0 0.0
  %230 = vmatprep.subr.mxu0 0.0
  %231 = vmatpush1.msra.mxu0 0.0
  %232 = vmatprep.subr.mxu0 0.0
  %233 = vmatpush1.msra.mxu0 0.0
  %234 = vmatprep.subr.mxu0 0.0
  %235 = vmatpush1.msra.mxu0 0.0
  %236 = vmatprep.subr.mxu0 0.0
  %237 = vmatpush1.msra.mxu0 0.0
  %238 = vmatprep.subr.mxu0 0.0
  %239 = vmatpush1.msra.mxu0 0.0
  %240 = vmatprep.subr.mxu0 0.0
  %241 = vmatpush1.msra.mxu0 0.0
  %242 = vmatprep.subr.mxu0 0.0
  %243 = vmatpush1.msra.mxu0 0.0
  %244 = vmatprep.subr.mxu0 0.0
  %245 = vmatpush1.msra.mxu0 0.0
  %246 = vmatprep.subr.mxu0 0.0
  %247 = vmatpush1.msra.mxu0 0.0
  %248 = vmatprep.subr.mxu0 0.0
  %249 = vmatpush1.msra.mxu0 0.0
  %250 = vmatprep.mubr.f32.mxu0 0.0
  %251 = vmatmul.mubr.f32.gmra.mrb[0].mxu0 %v181
  %v252 = vpop.f32.mrb[0].mxu0
  %v253 = vadd.f32 %v173, %v252
  %v254 = vpop.f32.mrb[0].mxu0
  %255 = vmatprep.mubr.f32.mxu0 0.0
  %256 = vmatmul.mubr.f32.gmra.mrb[0].mxu0 %v184
  %v257 = vpop.f32.mrb[0].mxu0
  %v258 = vadd.f32 %v178, %v257
  %v259 = vpop.f32.mrb[0].mxu0
  %260 = vdwg.mxu0
  %v261 = vmax.f32 %v253, 1e-12
  %v262 = vmax.f32 %v258, 1e-12
  %v263 = vrsqrt.pop %v261
  %v264 = vrsqrt.pop %v262
  %v265 = vmul.f32 %v158, %v263
  %v266 = vmul.f32 %v161, %v264
  %v267 = vld [vmem:[%s1] sm:$0xff]
  %v268 = vld [vmem:[%s1 + $0x8] sm:$0xff]
  %v269 = vadd.f32 %v265, %v267
  %v270 = vadd.f32 %v266, %v268
  %vm271 = vcmask 261120
  %272 = vst.msk [vmem:[%s6] sm:$0xff] %vm271, %v269
  %273 = vst.msk [vmem:[%s6 + $0x8] sm:$0xff] %vm271, %v270
  // Predicated region
  $region26: #{_lambda_.71} parent=0 // pred_check
    _
  $region27: #{_lambda_.71} parent=0 // pred_check_branch
    %275 = sbr.rel (0) target = $region29
  $region28: #{_lambda_.71} parent=0 // pred_region
    _
  $region29: #{_lambda_.71} parent=0 // pred_fallthru
    _
  // Predicated region
  $region30: #{_lambda_.71} parent=0 // pred_check
    _
  $region31: #{_lambda_.71} parent=0 // pred_check_branch
    %277 = sbr.rel (0) target = $region33
  $region32: #{_lambda_.71} parent=0 // pred_region
    _
  $region33: #{_lambda_.71} parent=0 // pred_fallthru
    _

// kernel: _lambda_.73
$region0: #{_lambda_.73}
  #allocation0 [shape = 'u32[]', space=smem, size = 0x4, offset = 0x4, fixed_abs, tag = 'smem constant byte address 0x4 - core index']
  #allocation1 [shape = 'u32[144,128]{1,0:T(1,128)}', space=vmem, size = 0x12000, scoped, tag = 'internal scratch']
  %s0 = inlined_call_operand.vmem [shape: bf16[72,32], index: 0, kind: input, shape index: {}]
  %s1 = inlined_call_operand.vmem [shape: f32[16,32], index: 1, kind: input, shape index: {}]
  %s2 = inlined_call_operand.vmem [shape: bf16[8,72], index: 2, kind: input, shape index: {}]
  %s3 = inlined_call_operand.vmem [shape: f32[8,1], index: 3, kind: input, shape index: {}]
  %s4 = inlined_call_operand.vmem [shape: bf16[16,8], index: 4, kind: input, shape index: {}]
  %s5 = inlined_call_operand.vmem [shape: f32[16,1], index: 5, kind: input, shape index: {}]
  %s6 = inlined_call_operand.vmem [shape: f32[16,32], index: 6, kind: output, shape index: {}]
  %s7 = sld [smem:[#allocation0]]
  $region34: #{_lambda_.73} parent=0
    _
  %s9 = ssub.s32 1, %s7
  %s10 = scalar_select 0, %s9, %s7
  // Predicated region
  $region2: #{_lambda_.73} parent=0 // pred_check
    _
  $region3: #{_lambda_.73} parent=0 // pred_check_branch
    %12 = sbr.rel (0) target = $region5
  $region4: #{_lambda_.73} parent=0 // pred_region
    _
  $region5: #{_lambda_.73} parent=0 // pred_fallthru
    _
  // Predicated region
  $region6: #{_lambda_.73} parent=0 // pred_check
    _
  $region7: #{_lambda_.73} parent=0 // pred_check_branch
    %14 = sbr.rel (0) target = $region9
  $region8: #{_lambda_.73} parent=0 // pred_region
    _
  $region9: #{_lambda_.73} parent=0 // pred_fallthru
    _
  // Predicated region
  $region10: #{_lambda_.73} parent=0 // pred_check
    _
  $region11: #{_lambda_.73} parent=0 // pred_check_branch
    %16 = sbr.rel (0) target = $region13
  $region12: #{_lambda_.73} parent=0 // pred_region
    _
  $region13: #{_lambda_.73} parent=0 // pred_fallthru
    _
  // Predicated region
  $region14: #{_lambda_.73} parent=0 // pred_check
    _
  $region15: #{_lambda_.73} parent=0 // pred_check_branch
    %18 = sbr.rel (0) target = $region17
  $region16: #{_lambda_.73} parent=0 // pred_region
    _
  $region17: #{_lambda_.73} parent=0 // pred_fallthru
    _
  // Predicated region
  $region18: #{_lambda_.73} parent=0 // pred_check
    _
  $region19: #{_lambda_.73} parent=0 // pred_check_branch
    %20 = sbr.rel (0) target = $region21
  $region20: #{_lambda_.73} parent=0 // pred_region
    _
  $region21: #{_lambda_.73} parent=0 // pred_fallthru
    _
  // Predicated region
  $region22: #{_lambda_.73} parent=0 // pred_check
    _
  $region23: #{_lambda_.73} parent=0 // pred_check_branch
    %22 = sbr.rel (0) target = $region25
  $region24: #{_lambda_.73} parent=0 // pred_region
    _
  $region25: #{_lambda_.73} parent=0 // pred_fallthru
    _
  %v24 = vld [vmem:[%s2] sm:$0xf]
  %v25 = vld [vmem:[%s0] sm:$0xf]
  %v26 = vld [vmem:[%s0 + $0x4] sm:$0xf]
  %v27 = vld [vmem:[%s0 + $0x8] sm:$0xf]
  %v28 = vld [vmem:[%s0 + $0xc] sm:$0xf]
  %v29 = vld [vmem:[%s0 + $0x10] sm:$0xf]
  %v30 = vld [vmem:[%s0 + $0x14] sm:$0xf]
  %v31 = vld [vmem:[%s0 + $0x18] sm:$0xf]
  %v32 = vld [vmem:[%s0 + $0x1c] sm:$0xf]
  %v33 = vld [vmem:[%s0 + $0x20] sm:$0xf]
  %v34 = vld [vmem:[%s3] sm:$0xff]
  %36 = vset.pattern.permute.xlu0 0
  %37 = vperm.xlu0 %36, %v34
  %v38 = vpop.permute.xlu0 %37
  %v49 = vunpack.c.l.b16 %v25
  %v50 = vunpack.c.l.b16 %v26
  %v51 = vunpack.c.l.b16 %v27
  %v52 = vunpack.c.l.b16 %v28
  %v53 = vunpack.c.l.b16 %v29
  %v54 = vunpack.c.l.b16 %v30
  %v55 = vunpack.c.l.b16 %v31
  %v56 = vunpack.c.l.b16 %v32
  %v57 = vunpack.c.l.b16 %v33
  %v58 = vpack.c.b16 %v50, %v49
  %v59 = vpack.c.b16 %v52, %v51
  %v60 = vpack.c.b16 %v54, %v53
  %v61 = vpack.c.b16 %v56, %v55
  %v62 = vpack.c.b16 %v57, %v57
  %vm67 = vcmask 588800
  %v69 = vsel %vm67, %v24, 0
  %vm71 = vcmask 1043456
  %v73 = vsel %vm71, %v62, 0
  %75 = vmatprep.subr.bf16.mxu0 0
  %76 = vmatpush1.bf16.msra.mxu0 %v58
  %77 = vmatprep.subr.bf16.mxu0 0
  %78 = vmatpush1.bf16.msra.mxu0 %v59
  %79 = vmatprep.subr.bf16.mxu0 0
  %80 = vmatpush1.bf16.msra.mxu0 %v60
  %81 = vmatprep.subr.bf16.mxu0 0
  %82 = vmatpush1.bf16.msra.mxu0 %v61
  %83 = vmatprep.subr.bf16.mxu0 0
  %84 = vmatpush1.bf16.msra.mxu0 %v73
  %85 = vmatprep.subr.bf16.mxu0 0
  %86 = vmatpush1.bf16.msra.mxu0 0
  %87 = vmatprep.subr.bf16.mxu0 0
  %88 = vmatpush1.bf16.msra.mxu0 0
  %89 = vmatprep.subr.bf16.mxu0 0
  %90 = vmatpush1.bf16.msra.mxu0 0
  %91 = vmatprep.subr.bf16.mxu0 0
  %92 = vmatpush1.bf16.msra.mxu0 0
  %93 = vmatprep.subr.bf16.mxu0 0
  %94 = vmatpush1.bf16.msra.mxu0 0
  %95 = vmatprep.subr.bf16.mxu0 0
  %96 = vmatpush1.bf16.msra.mxu0 0
  %97 = vmatprep.subr.bf16.mxu0 0
  %98 = vmatpush1.bf16.msra.mxu0 0
  %99 = vmatprep.subr.bf16.mxu0 0
  %100 = vmatpush1.bf16.msra.mxu0 0
  %101 = vmatprep.subr.bf16.mxu0 0
  %102 = vmatpush1.bf16.msra.mxu0 0
  %103 = vmatprep.subr.bf16.mxu0 0
  %104 = vmatpush1.bf16.msra.mxu0 0
  %105 = vmatprep.subr.bf16.mxu0 0
  %106 = vmatpush1.bf16.msra.mxu0 0
  %107 = vmatprep.mubr.bf16.mxu0 0
  %108 = vmatmul.mubr.bf16.gmra.mrb[0].mxu0 %v69
  %v109 = vpop.f32.mrb[0].mxu0
  %v110 = vadd.f32 %v38, %v109
  %v111 = vpop.f32.mrb[0].mxu0
  %v112 = vpop.f32.mrb[0].mxu0
  %v113 = vpop.f32.mrb[0].mxu0
  %114 = vdwg.mxu0
  %v115 = vmax.f32 %v110, 0.0
  %v116 = vpack.c.bf16 %v115, %v115
  %v117 = vld [vmem:[%s4] sm:$0xf]
  %v118 = vld [vmem:[%s4 + $0x4] sm:$0xf]
  %v119 = vld [vmem:[%s5] sm:$0xff]
  %v120 = vld [vmem:[%s5 + $0x8] sm:$0xff]
  %122 = vset.pattern.permute.xlu0 0
  %123 = vperm.xlu0 %122, %v119
  %v124 = vpop.permute.xlu0 %123
  %127 = vset.pattern.permute.xlu0 0
  %128 = vperm.xlu0 %127, %v120
  %v129 = vpop.permute.xlu0 %128
  %v133 = vunpack.c.l.b16 %v117
  %v134 = vunpack.c.l.b16 %v118
  %v135 = vpack.c.b16 %v134, %v133
  %vm136 = vcmask 64512
  %v138 = vsel %vm136, %v135, 0
  %v141 = vsel %vm71, %v116, 0
  %143 = vmatprep.subr.bf16.mxu0 0
  %144 = vmatpush1.bf16.msra.mxu0 %v141
  %145 = vmatprep.subr.bf16.mxu0 0
  %146 = vmatpush1.bf16.msra.mxu0 0
  %147 = vmatprep.subr.bf16.mxu0 0
  %148 = vmatpush1.bf16.msra.mxu0 0
  %149 = vmatprep.subr.bf16.mxu0 0
  %150 = vmatpush1.bf16.msra.mxu0 0
  %151 = vmatprep.subr.bf16.mxu0 0
  %152 = vmatpush1.bf16.msra.mxu0 0
  %153 = vmatprep.subr.bf16.mxu0 0
  %154 = vmatpush1.bf16.msra.mxu0 0
  %155 = vmatprep.subr.bf16.mxu0 0
  %156 = vmatpush1.bf16.msra.mxu0 0
  %157 = vmatprep.subr.bf16.mxu0 0
  %158 = vmatpush1.bf16.msra.mxu0 0
  %159 = vmatprep.subr.bf16.mxu0 0
  %160 = vmatpush1.bf16.msra.mxu0 0
  %161 = vmatprep.subr.bf16.mxu0 0
  %162 = vmatpush1.bf16.msra.mxu0 0
  %163 = vmatprep.subr.bf16.mxu0 0
  %164 = vmatpush1.bf16.msra.mxu0 0
  %165 = vmatprep.subr.bf16.mxu0 0
  %166 = vmatpush1.bf16.msra.mxu0 0
  %167 = vmatprep.subr.bf16.mxu0 0
  %168 = vmatpush1.bf16.msra.mxu0 0
  %169 = vmatprep.subr.bf16.mxu0 0
  %170 = vmatpush1.bf16.msra.mxu0 0
  %171 = vmatprep.subr.bf16.mxu0 0
  %172 = vmatpush1.bf16.msra.mxu0 0
  %173 = vmatprep.subr.bf16.mxu0 0
  %174 = vmatpush1.bf16.msra.mxu0 0
  %175 = vmatprep.mubr.bf16.mxu0 0
  %176 = vmatmul.mubr.bf16.gmra.mrb[0].mxu0 %v138
  %v177 = vpop.f32.mrb[0].mxu0
  %v178 = vadd.f32 %v124, %v177
  %v179 = vpop.f32.mrb[0].mxu0
  %v180 = vpop.f32.mrb[0].mxu0
  %v181 = vadd.f32 %v129, %v180
  %v182 = vpop.f32.mrb[0].mxu0
  %183 = vdwg.mxu0
  %v184 = vld [vmem:[%s1] sm:$0xff]
  %v185 = vld [vmem:[%s1 + $0x8] sm:$0xff]
  %v186 = vadd.f32 %v178, %v184
  %v187 = vadd.f32 %v181, %v185
  %vm188 = vcmask 261120
  %189 = vst.msk [vmem:[%s6] sm:$0xff] %vm188, %v186
  %190 = vst.msk [vmem:[%s6 + $0x8] sm:$0xff] %vm188, %v187
  // Predicated region
  $region26: #{_lambda_.73} parent=0 // pred_check
    _
  $region27: #{_lambda_.73} parent=0 // pred_check_branch
    %192 = sbr.rel (0) target = $region29
  $region28: #{_lambda_.73} parent=0 // pred_region
    _
  $region29: #{_lambda_.73} parent=0 // pred_fallthru
    _
  // Predicated region
  $region30: #{_lambda_.73} parent=0 // pred_check
    _
  $region31: #{_lambda_.73} parent=0 // pred_check_branch
    %194 = sbr.rel (0) target = $region33
  $region32: #{_lambda_.73} parent=0 // pred_region
    _
  $region33: #{_lambda_.73} parent=0 // pred_fallthru
    _

// kernel: _lambda_.68
$region0: #{_lambda_.68}
  #allocation0 [shape = 'u32[]', space=smem, size = 0x4, offset = 0x4, fixed_abs, tag = 'smem constant byte address 0x4 - core index']
  #allocation1 [shape = 'u32[144,128]{1,0:T(1,128)}', space=vmem, size = 0x12000, scoped, tag = 'internal scratch']
  %s0 = inlined_call_operand.vmem [shape: bf16[72,32], index: 0, kind: input, shape index: {}]
  %s1 = inlined_call_operand.vmem [shape: bf16[8,72], index: 1, kind: input, shape index: {}]
  %s2 = inlined_call_operand.vmem [shape: f32[8,1], index: 2, kind: input, shape index: {}]
  %s3 = inlined_call_operand.vmem [shape: f32[8,32], index: 3, kind: output, shape index: {}]
  %s4 = sld [smem:[#allocation0]]
  $region22: #{_lambda_.68} parent=0
    _
  %s6 = ssub.s32 1, %s4
  %s7 = scalar_select 0, %s6, %s4
  // Predicated region
  $region2: #{_lambda_.68} parent=0 // pred_check
    _
  $region3: #{_lambda_.68} parent=0 // pred_check_branch
    %9 = sbr.rel (0) target = $region5
  $region4: #{_lambda_.68} parent=0 // pred_region
    _
  $region5: #{_lambda_.68} parent=0 // pred_fallthru
    _
  // Predicated region
  $region6: #{_lambda_.68} parent=0 // pred_check
    _
  $region7: #{_lambda_.68} parent=0 // pred_check_branch
    %11 = sbr.rel (0) target = $region9
  $region8: #{_lambda_.68} parent=0 // pred_region
    _
  $region9: #{_lambda_.68} parent=0 // pred_fallthru
    _
  // Predicated region
  $region10: #{_lambda_.68} parent=0 // pred_check
    _
  $region11: #{_lambda_.68} parent=0 // pred_check_branch
    %13 = sbr.rel (0) target = $region13
  $region12: #{_lambda_.68} parent=0 // pred_region
    _
  $region13: #{_lambda_.68} parent=0 // pred_fallthru
    _
  %v15 = vld [vmem:[%s1] sm:$0xf]
  %v16 = vld [vmem:[%s0] sm:$0xf]
  %v17 = vld [vmem:[%s0 + $0x4] sm:$0xf]
  %v18 = vld [vmem:[%s0 + $0x8] sm:$0xf]
  %v19 = vld [vmem:[%s0 + $0xc] sm:$0xf]
  %v20 = vld [vmem:[%s0 + $0x10] sm:$0xf]
  %v21 = vld [vmem:[%s0 + $0x14] sm:$0xf]
  %v22 = vld [vmem:[%s0 + $0x18] sm:$0xf]
  %v23 = vld [vmem:[%s0 + $0x1c] sm:$0xf]
  %v24 = vld [vmem:[%s0 + $0x20] sm:$0xf]
  %v25 = vld [vmem:[%s2] sm:$0xff]
  %27 = vset.pattern.permute.xlu0 0
  %28 = vperm.xlu0 %27, %v25
  %v29 = vpop.permute.xlu0 %28
  %v40 = vunpack.c.l.b16 %v16
  %v41 = vunpack.c.l.b16 %v17
  %v42 = vunpack.c.l.b16 %v18
  %v43 = vunpack.c.l.b16 %v19
  %v44 = vunpack.c.l.b16 %v20
  %v45 = vunpack.c.l.b16 %v21
  %v46 = vunpack.c.l.b16 %v22
  %v47 = vunpack.c.l.b16 %v23
  %v48 = vunpack.c.l.b16 %v24
  %v49 = vpack.c.b16 %v41, %v40
  %v50 = vpack.c.b16 %v43, %v42
  %v51 = vpack.c.b16 %v45, %v44
  %v52 = vpack.c.b16 %v47, %v46
  %v53 = vpack.c.b16 %v48, %v48
  %vm58 = vcmask 588800
  %v60 = vsel %vm58, %v15, 0
  %vm62 = vcmask 1043456
  %v64 = vsel %vm62, %v53, 0
  %66 = vmatprep.subr.bf16.mxu0 0
  %67 = vmatpush1.bf16.msra.mxu0 %v49
  %68 = vmatprep.subr.bf16.mxu0 0
  %69 = vmatpush1.bf16.msra.mxu0 %v50
  %70 = vmatprep.subr.bf16.mxu0 0
  %71 = vmatpush1.bf16.msra.mxu0 %v51
  %72 = vmatprep.subr.bf16.mxu0 0
  %73 = vmatpush1.bf16.msra.mxu0 %v52
  %74 = vmatprep.subr.bf16.mxu0 0
  %75 = vmatpush1.bf16.msra.mxu0 %v64
  %76 = vmatprep.subr.bf16.mxu0 0
  %77 = vmatpush1.bf16.msra.mxu0 0
  %78 = vmatprep.subr.bf16.mxu0 0
  %79 = vmatpush1.bf16.msra.mxu0 0
  %80 = vmatprep.subr.bf16.mxu0 0
  %81 = vmatpush1.bf16.msra.mxu0 0
  %82 = vmatprep.subr.bf16.mxu0 0
  %83 = vmatpush1.bf16.msra.mxu0 0
  %84 = vmatprep.subr.bf16.mxu0 0
  %85 = vmatpush1.bf16.msra.mxu0 0
  %86 = vmatprep.subr.bf16.mxu0 0
  %87 = vmatpush1.bf16.msra.mxu0 0
  %88 = vmatprep.subr.bf16.mxu0 0
  %89 = vmatpush1.bf16.msra.mxu0 0
  %90 = vmatprep.subr.bf16.mxu0 0
  %91 = vmatpush1.bf16.msra.mxu0 0
  %92 = vmatprep.subr.bf16.mxu0 0
  %93 = vmatpush1.bf16.msra.mxu0 0
  %94 = vmatprep.subr.bf16.mxu0 0
  %95 = vmatpush1.bf16.msra.mxu0 0
  %96 = vmatprep.subr.bf16.mxu0 0
  %97 = vmatpush1.bf16.msra.mxu0 0
  %98 = vmatprep.mubr.bf16.mxu0 0
  %99 = vmatmul.mubr.bf16.gmra.mrb[0].mxu0 %v60
  %v100 = vpop.f32.mrb[0].mxu0
  %v101 = vadd.f32 %v29, %v100
  %v102 = vpop.f32.mrb[0].mxu0
  %v103 = vpop.f32.mrb[0].mxu0
  %v104 = vpop.f32.mrb[0].mxu0
  %105 = vdwg.mxu0
  %vm106 = vcmask 261120
  %107 = vst.msk [vmem:[%s3] sm:$0xff] %vm106, %v101
  // Predicated region
  $region14: #{_lambda_.68} parent=0 // pred_check
    _
  $region15: #{_lambda_.68} parent=0 // pred_check_branch
    %109 = sbr.rel (0) target = $region17
  $region16: #{_lambda_.68} parent=0 // pred_region
    _
  $region17: #{_lambda_.68} parent=0 // pred_fallthru
    _
  // Predicated region
  $region18: #{_lambda_.68} parent=0 // pred_check
    _
  $region19: #{_lambda_.68} parent=0 // pred_check_branch
    %111 = sbr.rel (0) target = $region21
  $region20: #{_lambda_.68} parent=0 // pred_region
    _
  $region21: #{_lambda_.68} parent=0 // pred_fallthru
    _

// kernel: _lambda_.69
$region0: #{_lambda_.69}
  #allocation0 [shape = 'u32[]', space=smem, size = 0x4, offset = 0x4, fixed_abs, tag = 'smem constant byte address 0x4 - core index']
  #allocation1 [shape = 'u32[144,128]{1,0:T(1,128)}', space=vmem, size = 0x12000, scoped, tag = 'internal scratch']
  %s0 = inlined_call_operand.vmem [shape: bf16[8,32], index: 0, kind: input, shape index: {}]
  %s1 = inlined_call_operand.vmem [shape: bf16[8,8], index: 1, kind: input, shape index: {}]
  %s2 = inlined_call_operand.vmem [shape: f32[8,1], index: 2, kind: input, shape index: {}]
  %s3 = inlined_call_operand.vmem [shape: f32[8,32], index: 3, kind: output, shape index: {}]
  %s4 = sld [smem:[#allocation0]]
  $region22: #{_lambda_.69} parent=0
    _
  %s6 = ssub.s32 1, %s4
  %s7 = scalar_select 0, %s6, %s4
  // Predicated region
  $region2: #{_lambda_.69} parent=0 // pred_check
    _
  $region3: #{_lambda_.69} parent=0 // pred_check_branch
    %9 = sbr.rel (0) target = $region5
  $region4: #{_lambda_.69} parent=0 // pred_region
    _
  $region5: #{_lambda_.69} parent=0 // pred_fallthru
    _
  // Predicated region
  $region6: #{_lambda_.69} parent=0 // pred_check
    _
  $region7: #{_lambda_.69} parent=0 // pred_check_branch
    %11 = sbr.rel (0) target = $region9
  $region8: #{_lambda_.69} parent=0 // pred_region
    _
  $region9: #{_lambda_.69} parent=0 // pred_fallthru
    _
  // Predicated region
  $region10: #{_lambda_.69} parent=0 // pred_check
    _
  $region11: #{_lambda_.69} parent=0 // pred_check_branch
    %13 = sbr.rel (0) target = $region13
  $region12: #{_lambda_.69} parent=0 // pred_region
    _
  $region13: #{_lambda_.69} parent=0 // pred_fallthru
    _
  %v15 = vld [vmem:[%s1] sm:$0xf]
  %v16 = vld [vmem:[%s0] sm:$0xf]
  %v17 = vld [vmem:[%s2] sm:$0xff]
  %19 = vset.pattern.permute.xlu0 0
  %20 = vperm.xlu0 %19, %v17
  %v21 = vpop.permute.xlu0 %20
  %vm23 = vcmask 64512
  %v25 = vsel %vm23, %v15, 0
  %vm27 = vcmask 1043456
  %v29 = vsel %vm27, %v16, 0
  %31 = vmatprep.subr.bf16.mxu0 0
  %32 = vmatpush1.bf16.msra.mxu0 %v29
  %33 = vmatprep.subr.bf16.mxu0 0
  %34 = vmatpush1.bf16.msra.mxu0 0
  %35 = vmatprep.subr.bf16.mxu0 0
  %36 = vmatpush1.bf16.msra.mxu0 0
  %37 = vmatprep.subr.bf16.mxu0 0
  %38 = vmatpush1.bf16.msra.mxu0 0
  %39 = vmatprep.subr.bf16.mxu0 0
  %40 = vmatpush1.bf16.msra.mxu0 0
  %41 = vmatprep.subr.bf16.mxu0 0
  %42 = vmatpush1.bf16.msra.mxu0 0
  %43 = vmatprep.subr.bf16.mxu0 0
  %44 = vmatpush1.bf16.msra.mxu0 0
  %45 = vmatprep.subr.bf16.mxu0 0
  %46 = vmatpush1.bf16.msra.mxu0 0
  %47 = vmatprep.subr.bf16.mxu0 0
  %48 = vmatpush1.bf16.msra.mxu0 0
  %49 = vmatprep.subr.bf16.mxu0 0
  %50 = vmatpush1.bf16.msra.mxu0 0
  %51 = vmatprep.subr.bf16.mxu0 0
  %52 = vmatpush1.bf16.msra.mxu0 0
  %53 = vmatprep.subr.bf16.mxu0 0
  %54 = vmatpush1.bf16.msra.mxu0 0
  %55 = vmatprep.subr.bf16.mxu0 0
  %56 = vmatpush1.bf16.msra.mxu0 0
  %57 = vmatprep.subr.bf16.mxu0 0
  %58 = vmatpush1.bf16.msra.mxu0 0
  %59 = vmatprep.subr.bf16.mxu0 0
  %60 = vmatpush1.bf16.msra.mxu0 0
  %61 = vmatprep.subr.bf16.mxu0 0
  %62 = vmatpush1.bf16.msra.mxu0 0
  %63 = vmatprep.mubr.bf16.mxu0 0
  %64 = vmatmul.mubr.bf16.gmra.mrb[0].mxu0 %v25
  %v65 = vpop.f32.mrb[0].mxu0
  %v66 = vadd.f32 %v21, %v65
  %v67 = vpop.f32.mrb[0].mxu0
  %v68 = vpop.f32.mrb[0].mxu0
  %v69 = vpop.f32.mrb[0].mxu0
  %70 = vdwg.mxu0
  %vm71 = vcmask 261120
  %72 = vst.msk [vmem:[%s3] sm:$0xff] %vm71, %v66
  // Predicated region
  $region14: #{_lambda_.69} parent=0 // pred_check
    _
  $region15: #{_lambda_.69} parent=0 // pred_check_branch
    %74 = sbr.rel (0) target = $region17
  $region16: #{_lambda_.69} parent=0 // pred_region
    _
  $region17: #{_lambda_.69} parent=0 // pred_fallthru
    _
  // Predicated region
  $region18: #{_lambda_.69} parent=0 // pred_check
    _
  $region19: #{_lambda_.69} parent=0 // pred_check_branch
    %76 = sbr.rel (0) target = $region21
  $region20: #{_lambda_.69} parent=0 // pred_region
    _
  $region21: #{_lambda_.69} parent=0 // pred_fallthru
    _

// kernel: _lambda_.78
$region0: #{_lambda_.78}
  #allocation0 [shape = 'u32[]', space=smem, size = 0x4, offset = 0x4, fixed_abs, tag = 'smem constant byte address 0x4 - core index']
  #allocation1 [shape = 'u32[144,128]{1,0:T(1,128)}', space=vmem, size = 0x12000, scoped, tag = 'internal scratch']
  %s0 = inlined_call_operand.vmem [shape: bf16[72,32], index: 0, kind: input, shape index: {}]
  %s1 = inlined_call_operand.vmem [shape: bf16[16,72], index: 1, kind: input, shape index: {}]
  %s2 = inlined_call_operand.vmem [shape: f32[16,1], index: 2, kind: input, shape index: {}]
  %s3 = inlined_call_operand.vmem [shape: f32[16,32], index: 3, kind: output, shape index: {}]
  %s4 = sld [smem:[#allocation0]]
  $region22: #{_lambda_.78} parent=0
    _
  %s6 = ssub.s32 1, %s4
  %s7 = scalar_select 0, %s6, %s4
  // Predicated region
  $region2: #{_lambda_.78} parent=0 // pred_check
    _
  $region3: #{_lambda_.78} parent=0 // pred_check_branch
    %9 = sbr.rel (0) target = $region5
  $region4: #{_lambda_.78} parent=0 // pred_region
    _
  $region5: #{_lambda_.78} parent=0 // pred_fallthru
    _
  // Predicated region
  $region6: #{_lambda_.78} parent=0 // pred_check
    _
  $region7: #{_lambda_.78} parent=0 // pred_check_branch
    %11 = sbr.rel (0) target = $region9
  $region8: #{_lambda_.78} parent=0 // pred_region
    _
  $region9: #{_lambda_.78} parent=0 // pred_fallthru
    _
  // Predicated region
  $region10: #{_lambda_.78} parent=0 // pred_check
    _
  $region11: #{_lambda_.78} parent=0 // pred_check_branch
    %13 = sbr.rel (0) target = $region13
  $region12: #{_lambda_.78} parent=0 // pred_region
    _
  $region13: #{_lambda_.78} parent=0 // pred_fallthru
    _
  %v15 = vld [vmem:[%s1] sm:$0xf]
  %v16 = vld [vmem:[%s1 + $0x4] sm:$0xf]
  %v17 = vld [vmem:[%s0] sm:$0xf]
  %v18 = vld [vmem:[%s0 + $0x4] sm:$0xf]
  %v19 = vld [vmem:[%s0 + $0x8] sm:$0xf]
  %v20 = vld [vmem:[%s0 + $0xc] sm:$0xf]
  %v21 = vld [vmem:[%s0 + $0x10] sm:$0xf]
  %v22 = vld [vmem:[%s0 + $0x14] sm:$0xf]
  %v23 = vld [vmem:[%s0 + $0x18] sm:$0xf]
  %v24 = vld [vmem:[%s0 + $0x1c] sm:$0xf]
  %v25 = vld [vmem:[%s0 + $0x20] sm:$0xf]
  %v26 = vld [vmem:[%s2] sm:$0xff]
  %v27 = vld [vmem:[%s2 + $0x8] sm:$0xff]
  %29 = vset.pattern.permute.xlu0 0
  %30 = vperm.xlu0 %29, %v26
  %v31 = vpop.permute.xlu0 %30
  %34 = vset.pattern.permute.xlu0 0
  %35 = vperm.xlu0 %34, %v27
  %v36 = vpop.permute.xlu0 %35
  %v40 = vunpack.c.l.b16 %v15
  %v41 = vunpack.c.l.b16 %v16
  %v42 = vpack.c.b16 %v41, %v40
  %v52 = vunpack.c.l.b16 %v17
  %v53 = vunpack.c.l.b16 %v18
  %v54 = vunpack.c.l.b16 %v19
  %v55 = vunpack.c.l.b16 %v20
  %v56 = vunpack.c.l.b16 %v21
  %v57 = vunpack.c.l.b16 %v22
  %v58 = vunpack.c.l.b16 %v23
  %v59 = vunpack.c.l.b16 %v24
  %v60 = vunpack.c.l.b16 %v25
  %v61 = vpack.c.b16 %v53, %v52
  %v62 = vpack.c.b16 %v55, %v54
  %v63 = vpack.c.b16 %v57, %v56
  %v64 = vpack.c.b16 %v59, %v58
  %v65 = vpack.c.b16 %v60, %v60
  %vm70 = vcmask 588800
  %v72 = vsel %vm70, %v42, 0
  %vm74 = vcmask 1043456
  %v76 = vsel %vm74, %v65, 0
  %78 = vmatprep.subr.bf16.mxu0 0
  %79 = vmatpush1.bf16.msra.mxu0 %v61
  %80 = vmatprep.subr.bf16.mxu0 0
  %81 = vmatpush1.bf16.msra.mxu0 %v62
  %82 = vmatprep.subr.bf16.mxu0 0
  %83 = vmatpush1.bf16.msra.mxu0 %v63
  %84 = vmatprep.subr.bf16.mxu0 0
  %85 = vmatpush1.bf16.msra.mxu0 %v64
  %86 = vmatprep.subr.bf16.mxu0 0
  %87 = vmatpush1.bf16.msra.mxu0 %v76
  %88 = vmatprep.subr.bf16.mxu0 0
  %89 = vmatpush1.bf16.msra.mxu0 0
  %90 = vmatprep.subr.bf16.mxu0 0
  %91 = vmatpush1.bf16.msra.mxu0 0
  %92 = vmatprep.subr.bf16.mxu0 0
  %93 = vmatpush1.bf16.msra.mxu0 0
  %94 = vmatprep.subr.bf16.mxu0 0
  %95 = vmatpush1.bf16.msra.mxu0 0
  %96 = vmatprep.subr.bf16.mxu0 0
  %97 = vmatpush1.bf16.msra.mxu0 0
  %98 = vmatprep.subr.bf16.mxu0 0
  %99 = vmatpush1.bf16.msra.mxu0 0
  %100 = vmatprep.subr.bf16.mxu0 0
  %101 = vmatpush1.bf16.msra.mxu0 0
  %102 = vmatprep.subr.bf16.mxu0 0
  %103 = vmatpush1.bf16.msra.mxu0 0
  %104 = vmatprep.subr.bf16.mxu0 0
  %105 = vmatpush1.bf16.msra.mxu0 0
  %106 = vmatprep.subr.bf16.mxu0 0
  %107 = vmatpush1.bf16.msra.mxu0 0
  %108 = vmatprep.subr.bf16.mxu0 0
  %109 = vmatpush1.bf16.msra.mxu0 0
  %110 = vmatprep.mubr.bf16.mxu0 0
  %111 = vmatmul.mubr.bf16.gmra.mrb[0].mxu0 %v72
  %v112 = vpop.f32.mrb[0].mxu0
  %v113 = vadd.f32 %v31, %v112
  %v114 = vpop.f32.mrb[0].mxu0
  %v115 = vpop.f32.mrb[0].mxu0
  %v116 = vadd.f32 %v36, %v115
  %v117 = vpop.f32.mrb[0].mxu0
  %118 = vdwg.mxu0
  %v119 = vmax.f32 %v113, 0.0
  %v120 = vmax.f32 %v116, 0.0
  %vm121 = vcmask 261120
  %122 = vst.msk [vmem:[%s3] sm:$0xff] %vm121, %v119
  %123 = vst.msk [vmem:[%s3 + $0x8] sm:$0xff] %vm121, %v120
  // Predicated region
  $region14: #{_lambda_.78} parent=0 // pred_check
    _
  $region15: #{_lambda_.78} parent=0 // pred_check_branch
    %125 = sbr.rel (0) target = $region17
  $region16: #{_lambda_.78} parent=0 // pred_region
    _
  $region17: #{_lambda_.78} parent=0 // pred_fallthru
    _
  // Predicated region
  $region18: #{_lambda_.78} parent=0 // pred_check
    _
  $region19: #{_lambda_.78} parent=0 // pred_check_branch
    %127 = sbr.rel (0) target = $region21
  $region20: #{_lambda_.78} parent=0 // pred_region
    _
  $region21: #{_lambda_.78} parent=0 // pred_fallthru
    _

// kernel: _lambda_.79
$region0: #{_lambda_.79}
  #allocation0 [shape = 'u32[]', space=smem, size = 0x4, offset = 0x4, fixed_abs, tag = 'smem constant byte address 0x4 - core index']
  #allocation1 [shape = 'u32[144,128]{1,0:T(1,128)}', space=vmem, size = 0x12000, scoped, tag = 'internal scratch']
  %s0 = inlined_call_operand.vmem [shape: bf16[144,32], index: 0, kind: input, shape index: {}]
  %s1 = inlined_call_operand.vmem [shape: f32[16,32], index: 1, kind: input, shape index: {}]
  %s2 = inlined_call_operand.vmem [shape: bf16[32,144], index: 2, kind: input, shape index: {}]
  %s3 = inlined_call_operand.vmem [shape: f32[32,1], index: 3, kind: input, shape index: {}]
  %s4 = inlined_call_operand.vmem [shape: f32[16,32], index: 4, kind: output, shape index: {}]
  %s5 = sld [smem:[#allocation0]]
  $region26: #{_lambda_.79} parent=0
    _
  %s7 = ssub.s32 1, %s5
  %s8 = scalar_select 0, %s7, %s5
  // Predicated region
  $region2: #{_lambda_.79} parent=0 // pred_check
    _
  $region3: #{_lambda_.79} parent=0 // pred_check_branch
    %10 = sbr.rel (0) target = $region5
  $region4: #{_lambda_.79} parent=0 // pred_region
    _
  $region5: #{_lambda_.79} parent=0 // pred_fallthru
    _
  // Predicated region
  $region6: #{_lambda_.79} parent=0 // pred_check
    _
  $region7: #{_lambda_.79} parent=0 // pred_check_branch
    %12 = sbr.rel (0) target = $region9
  $region8: #{_lambda_.79} parent=0 // pred_region
    _
  $region9: #{_lambda_.79} parent=0 // pred_fallthru
    _
  // Predicated region
  $region10: #{_lambda_.79} parent=0 // pred_check
    _
  $region11: #{_lambda_.79} parent=0 // pred_check_branch
    %14 = sbr.rel (0) target = $region13
  $region12: #{_lambda_.79} parent=0 // pred_region
    _
  $region13: #{_lambda_.79} parent=0 // pred_fallthru
    _
  // Predicated region
  $region14: #{_lambda_.79} parent=0 // pred_check
    _
  $region15: #{_lambda_.79} parent=0 // pred_check_branch
    %16 = sbr.rel (0) target = $region17
  $region16: #{_lambda_.79} parent=0 // pred_region
    _
  $region17: #{_lambda_.79} parent=0 // pred_fallthru
    _
  %v18 = vld [vmem:[%s2] sm:$0xff]
  %v19 = vld [vmem:[%s2 + $0x8] sm:$0xff]
  %v20 = vld [vmem:[%s2 + $0x10] sm:$0xff]
  %v21 = vld [vmem:[%s2 + $0x18] sm:$0xff]
  %v22 = vld [vmem:[%s0] sm:$0xf]
  %v23 = vld [vmem:[%s0 + $0x4] sm:$0xf]
  %v24 = vld [vmem:[%s0 + $0x8] sm:$0xf]
  %v25 = vld [vmem:[%s0 + $0xc] sm:$0xf]
  %v26 = vld [vmem:[%s0 + $0x10] sm:$0xf]
  %v27 = vld [vmem:[%s0 + $0x14] sm:$0xf]
  %v28 = vld [vmem:[%s0 + $0x18] sm:$0xf]
  %v29 = vld [vmem:[%s0 + $0x1c] sm:$0xf]
  %v30 = vld [vmem:[%s0 + $0x20] sm:$0xf]
  %v31 = vld [vmem:[%s0 + $0x24] sm:$0xf]
  %v32 = vld [vmem:[%s0 + $0x28] sm:$0xf]
  %v33 = vld [vmem:[%s0 + $0x2c] sm:$0xf]
  %v34 = vld [vmem:[%s0 + $0x30] sm:$0xf]
  %v35 = vld [vmem:[%s0 + $0x34] sm:$0xf]
  %v36 = vld [vmem:[%s0 + $0x38] sm:$0xf]
  %v37 = vld [vmem:[%s0 + $0x3c] sm:$0xf]
  %v38 = vld [vmem:[%s0 + $0x40] sm:$0xf]
  %v39 = vld [vmem:[%s0 + $0x44] sm:$0xf]
  %v40 = vld [vmem:[%s3] sm:$0xff]
  %v41 = vld [vmem:[%s3 + $0x8] sm:$0xff]
  %v42 = vld [vmem:[%s3 + $0x10] sm:$0xff]
  %v43 = vld [vmem:[%s3 + $0x18] sm:$0xff]
  %45 = vset.pattern.permute.xlu0 0
  %46 = vperm.xlu0 %45, %v40
  %v47 = vpop.permute.xlu0 %46
  %50 = vset.pattern.permute.xlu0 0
  %51 = vperm.xlu0 %50, %v41
  %v52 = vpop.permute.xlu0 %51
  %55 = vset.pattern.permute.xlu0 0
  %56 = vperm.xlu0 %55, %v42
  %v57 = vpop.permute.xlu0 %56
  %60 = vset.pattern.permute.xlu0 0
  %61 = vperm.xlu0 %60, %v43
  %v62 = vpop.permute.xlu0 %61
  %v68 = vunpack.c.l.b16 %v18
  %v69 = vunpack.c.h.b16 %v18
  %v70 = vunpack.c.l.b16 %v19
  %v71 = vunpack.c.h.b16 %v19
  %v72 = vunpack.c.l.b16 %v20
  %v73 = vunpack.c.h.b16 %v20
  %v74 = vunpack.c.l.b16 %v21
  %v75 = vunpack.c.h.b16 %v21
  %v76 = vpack.c.b16 %v70, %v68
  %v77 = vpack.c.b16 %v71, %v69
  %v78 = vpack.c.b16 %v74, %v72
  %v79 = vpack.c.b16 %v75, %v73
  %v100 = vunpack.c.l.b16 %v22
  %v101 = vunpack.c.l.b16 %v23
  %v102 = vunpack.c.l.b16 %v24
  %v103 = vunpack.c.l.b16 %v25
  %v104 = vunpack.c.l.b16 %v26
  %v105 = vunpack.c.l.b16 %v27
  %v106 = vunpack.c.l.b16 %v28
  %v107 = vunpack.c.l.b16 %v29
  %v108 = vunpack.c.l.b16 %v30
  %v109 = vunpack.c.l.b16 %v31
  %v110 = vunpack.c.l.b16 %v32
  %v111 = vunpack.c.l.b16 %v33
  %v112 = vunpack.c.l.b16 %v34
  %v113 = vunpack.c.l.b16 %v35
  %v114 = vunpack.c.l.b16 %v36
  %v115 = vunpack.c.l.b16 %v37
  %v116 = vunpack.c.l.b16 %v38
  %v117 = vunpack.c.l.b16 %v39
  %v118 = vpack.c.b16 %v101, %v100
  %v119 = vpack.c.b16 %v103, %v102
  %v120 = vpack.c.b16 %v105, %v104
  %v121 = vpack.c.b16 %v107, %v106
  %v122 = vpack.c.b16 %v109, %v108
  %v123 = vpack.c.b16 %v111, %v110
  %v124 = vpack.c.b16 %v113, %v112
  %v125 = vpack.c.b16 %v115, %v114
  %v126 = vpack.c.b16 %v117, %v116
  %vm136 = vcmask 130048
  %v138 = vsel %vm136, %v77, 0
  %v141 = vsel %vm136, %v79, 0
  %143 = vmatprep.subr.bf16.mxu0 0
  %144 = vmatpush1.bf16.msra.mxu0 %v118
  %145 = vmatprep.subr.bf16.mxu0 0
  %146 = vmatpush1.bf16.msra.mxu0 %v119
  %147 = vmatprep.subr.bf16.mxu0 0
  %148 = vmatpush1.bf16.msra.mxu0 %v120
  %149 = vmatprep.subr.bf16.mxu0 0
  %150 = vmatpush1.bf16.msra.mxu0 %v121
  %151 = vmatprep.subr.bf16.mxu0 0
  %152 = vmatpush1.bf16.msra.mxu0 %v122
  %153 = vmatprep.subr.bf16.mxu0 0
  %154 = vmatpush1.bf16.msra.mxu0 %v123
  %155 = vmatprep.subr.bf16.mxu0 0
  %156 = vmatpush1.bf16.msra.mxu0 %v124
  %157 = vmatprep.subr.bf16.mxu0 0
  %158 = vmatpush1.bf16.msra.mxu0 %v125
  %159 = vmatprep.subr.bf16.mxu0 0
  %160 = vmatpush1.bf16.msra.mxu0 %v126
  %161 = vmatprep.subr.bf16.mxu0 0
  %162 = vmatpush1.bf16.msra.mxu0 0
  %163 = vmatprep.subr.bf16.mxu0 0
  %164 = vmatpush1.bf16.msra.mxu0 0
  %165 = vmatprep.subr.bf16.mxu0 0
  %166 = vmatpush1.bf16.msra.mxu0 0
  %167 = vmatprep.subr.bf16.mxu0 0
  %168 = vmatpush1.bf16.msra.mxu0 0
  %169 = vmatprep.subr.bf16.mxu0 0
  %170 = vmatpush1.bf16.msra.mxu0 0
  %171 = vmatprep.subr.bf16.mxu0 0
  %172 = vmatpush1.bf16.msra.mxu0 0
  %173 = vmatprep.subr.bf16.mxu0 0
  %174 = vmatpush1.bf16.msra.mxu0 0
  %175 = vmatprep.mubr.bf16.mxu0 %v138
  %176 = vmatmul.mubr.bf16.gmra.mrb[0].mxu0 %v76
  %v177 = vpop.f32.mrb[0].mxu0
  %v178 = vadd.f32 %v47, %v177
  %v179 = vpop.f32.mrb[0].mxu0
  %v180 = vpop.f32.mrb[0].mxu0
  %v181 = vadd.f32 %v52, %v180
  %v182 = vpop.f32.mrb[0].mxu0
  %183 = vmatprep.mubr.bf16.mxu0 %v141
  %184 = vmatmul.mubr.bf16.gmra.mrb[0].mxu0 %v78
  %v185 = vpop.f32.mrb[0].mxu0
  %v186 = vadd.f32 %v57, %v185
  %v187 = vpop.f32.mrb[0].mxu0
  %v188 = vpop.f32.mrb[0].mxu0
  %v189 = vadd.f32 %v62, %v188
  %v190 = vpop.f32.mrb[0].mxu0
  %191 = vdwg.mxu0
  %v192 = vld [vmem:[%s1] sm:$0xff]
  %v193 = vld [vmem:[%s1 + $0x8] sm:$0xff]
  %v194 = vadd.f32 %v178, 1.0
  %v195 = vadd.f32 %v181, 1.0
  %v196 = vmul.f32 %v192, %v194
  %v197 = vmul.f32 %v193, %v195
  %v198 = vadd.f32 %v196, %v186
  %v199 = vadd.f32 %v197, %v189
  %vm200 = vcmask 261120
  %201 = vst.msk [vmem:[%s4] sm:$0xff] %vm200, %v198
  %202 = vst.msk [vmem:[%s4 + $0x8] sm:$0xff] %vm200, %v199
  // Predicated region
  $region18: #{_lambda_.79} parent=0 // pred_check
    _
  $region19: #{_lambda_.79} parent=0 // pred_check_branch
    %204 = sbr.rel (0) target = $region21
  $region20: #{_lambda_.79} parent=0 // pred_region
    _
  $region21: #{_lambda_.79} parent=0 // pred_fallthru
    _
  // Predicated region
  $region22: #{_lambda_.79} parent=0 // pred_check
    _
  $region23: #{_lambda_.79} parent=0 // pred_check_branch
    %206 = sbr.rel (0) target = $region25
  $region24: #{_lambda_.79} parent=0 // pred_region
    _
  $region25: #{_lambda_.79} parent=0 // pred_fallthru
    _

// kernel: _lambda_.82
$region0: #{_lambda_.82}
  #allocation0 [shape = 'u32[]', space=smem, size = 0x4, offset = 0x4, fixed_abs, tag = 'smem constant byte address 0x4 - core index']
  #allocation1 [shape = 'u32[144,128]{1,0:T(1,128)}', space=vmem, size = 0x12000, scoped, tag = 'internal scratch']
  %s0 = inlined_call_operand.vmem [shape: bf16[144,32], index: 0, kind: input, shape index: {}]
  %s1 = inlined_call_operand.vmem [shape: bf16[16,144], index: 1, kind: input, shape index: {}]
  %s2 = inlined_call_operand.vmem [shape: f32[16,1], index: 2, kind: input, shape index: {}]
  %s3 = inlined_call_operand.vmem [shape: f32[16,32], index: 3, kind: output, shape index: {}]
  %s4 = sld [smem:[#allocation0]]
  $region22: #{_lambda_.82} parent=0
    _
  %s6 = ssub.s32 1, %s4
  %s7 = scalar_select 0, %s6, %s4
  // Predicated region
  $region2: #{_lambda_.82} parent=0 // pred_check
    _
  $region3: #{_lambda_.82} parent=0 // pred_check_branch
    %9 = sbr.rel (0) target = $region5
  $region4: #{_lambda_.82} parent=0 // pred_region
    _
  $region5: #{_lambda_.82} parent=0 // pred_fallthru
    _
  // Predicated region
  $region6: #{_lambda_.82} parent=0 // pred_check
    _
  $region7: #{_lambda_.82} parent=0 // pred_check_branch
    %11 = sbr.rel (0) target = $region9
  $region8: #{_lambda_.82} parent=0 // pred_region
    _
  $region9: #{_lambda_.82} parent=0 // pred_fallthru
    _
  // Predicated region
  $region10: #{_lambda_.82} parent=0 // pred_check
    _
  $region11: #{_lambda_.82} parent=0 // pred_check_branch
    %13 = sbr.rel (0) target = $region13
  $region12: #{_lambda_.82} parent=0 // pred_region
    _
  $region13: #{_lambda_.82} parent=0 // pred_fallthru
    _
  %v15 = vld [vmem:[%s1] sm:$0xff]
  %v16 = vld [vmem:[%s1 + $0x8] sm:$0xff]
  %v17 = vld [vmem:[%s0] sm:$0xf]
  %v18 = vld [vmem:[%s0 + $0x4] sm:$0xf]
  %v19 = vld [vmem:[%s0 + $0x8] sm:$0xf]
  %v20 = vld [vmem:[%s0 + $0xc] sm:$0xf]
  %v21 = vld [vmem:[%s0 + $0x10] sm:$0xf]
  %v22 = vld [vmem:[%s0 + $0x14] sm:$0xf]
  %v23 = vld [vmem:[%s0 + $0x18] sm:$0xf]
  %v24 = vld [vmem:[%s0 + $0x1c] sm:$0xf]
  %v25 = vld [vmem:[%s0 + $0x20] sm:$0xf]
  %v26 = vld [vmem:[%s0 + $0x24] sm:$0xf]
  %v27 = vld [vmem:[%s0 + $0x28] sm:$0xf]
  %v28 = vld [vmem:[%s0 + $0x2c] sm:$0xf]
  %v29 = vld [vmem:[%s0 + $0x30] sm:$0xf]
  %v30 = vld [vmem:[%s0 + $0x34] sm:$0xf]
  %v31 = vld [vmem:[%s0 + $0x38] sm:$0xf]
  %v32 = vld [vmem:[%s0 + $0x3c] sm:$0xf]
  %v33 = vld [vmem:[%s0 + $0x40] sm:$0xf]
  %v34 = vld [vmem:[%s0 + $0x44] sm:$0xf]
  %v35 = vld [vmem:[%s2] sm:$0xff]
  %v36 = vld [vmem:[%s2 + $0x8] sm:$0xff]
  %38 = vset.pattern.permute.xlu0 0
  %39 = vperm.xlu0 %38, %v35
  %v40 = vpop.permute.xlu0 %39
  %43 = vset.pattern.permute.xlu0 0
  %44 = vperm.xlu0 %43, %v36
  %v45 = vpop.permute.xlu0 %44
  %v49 = vunpack.c.l.b16 %v15
  %v50 = vunpack.c.h.b16 %v15
  %v51 = vunpack.c.l.b16 %v16
  %v52 = vunpack.c.h.b16 %v16
  %v53 = vpack.c.b16 %v51, %v49
  %v54 = vpack.c.b16 %v52, %v50
  %v74 = vunpack.c.l.b16 %v17
  %v75 = vunpack.c.l.b16 %v18
  %v76 = vunpack.c.l.b16 %v19
  %v77 = vunpack.c.l.b16 %v20
  %v78 = vunpack.c.l.b16 %v21
  %v79 = vunpack.c.l.b16 %v22
  %v80 = vunpack.c.l.b16 %v23
  %v81 = vunpack.c.l.b16 %v24
  %v82 = vunpack.c.l.b16 %v25
  %v83 = vunpack.c.l.b16 %v26
  %v84 = vunpack.c.l.b16 %v27
  %v85 = vunpack.c.l.b16 %v28
  %v86 = vunpack.c.l.b16 %v29
  %v87 = vunpack.c.l.b16 %v30
  %v88 = vunpack.c.l.b16 %v31
  %v89 = vunpack.c.l.b16 %v32
  %v90 = vunpack.c.l.b16 %v33
  %v91 = vunpack.c.l.b16 %v34
  %v92 = vpack.c.b16 %v75, %v74
  %v93 = vpack.c.b16 %v77, %v76
  %v94 = vpack.c.b16 %v79, %v78
  %v95 = vpack.c.b16 %v81, %v80
  %v96 = vpack.c.b16 %v83, %v82
  %v97 = vpack.c.b16 %v85, %v84
  %v98 = vpack.c.b16 %v87, %v86
  %v99 = vpack.c.b16 %v89, %v88
  %v100 = vpack.c.b16 %v91, %v90
  %vm110 = vcmask 130048
  %v112 = vsel %vm110, %v54, 0
  %114 = vmatprep.subr.bf16.mxu0 0
  %115 = vmatpush1.bf16.msra.mxu0 %v92
  %116 = vmatprep.subr.bf16.mxu0 0
  %117 = vmatpush1.bf16.msra.mxu0 %v93
  %118 = vmatprep.subr.bf16.mxu0 0
  %119 = vmatpush1.bf16.msra.mxu0 %v94
  %120 = vmatprep.subr.bf16.mxu0 0
  %121 = vmatpush1.bf16.msra.mxu0 %v95
  %122 = vmatprep.subr.bf16.mxu0 0
  %123 = vmatpush1.bf16.msra.mxu0 %v96
  %124 = vmatprep.subr.bf16.mxu0 0
  %125 = vmatpush1.bf16.msra.mxu0 %v97
  %126 = vmatprep.subr.bf16.mxu0 0
  %127 = vmatpush1.bf16.msra.mxu0 %v98
  %128 = vmatprep.subr.bf16.mxu0 0
  %129 = vmatpush1.bf16.msra.mxu0 %v99
  %130 = vmatprep.subr.bf16.mxu0 0
  %131 = vmatpush1.bf16.msra.mxu0 %v100
  %132 = vmatprep.subr.bf16.mxu0 0
  %133 = vmatpush1.bf16.msra.mxu0 0
  %134 = vmatprep.subr.bf16.mxu0 0
  %135 = vmatpush1.bf16.msra.mxu0 0
  %136 = vmatprep.subr.bf16.mxu0 0
  %137 = vmatpush1.bf16.msra.mxu0 0
  %138 = vmatprep.subr.bf16.mxu0 0
  %139 = vmatpush1.bf16.msra.mxu0 0
  %140 = vmatprep.subr.bf16.mxu0 0
  %141 = vmatpush1.bf16.msra.mxu0 0
  %142 = vmatprep.subr.bf16.mxu0 0
  %143 = vmatpush1.bf16.msra.mxu0 0
  %144 = vmatprep.subr.bf16.mxu0 0
  %145 = vmatpush1.bf16.msra.mxu0 0
  %146 = vmatprep.mubr.bf16.mxu0 %v112
  %147 = vmatmul.mubr.bf16.gmra.mrb[0].mxu0 %v53
  %v148 = vpop.f32.mrb[0].mxu0
  %v149 = vadd.f32 %v40, %v148
  %v150 = vpop.f32.mrb[0].mxu0
  %v151 = vpop.f32.mrb[0].mxu0
  %v152 = vadd.f32 %v45, %v151
  %v153 = vpop.f32.mrb[0].mxu0
  %154 = vdwg.mxu0
  %vm155 = vcmask 261120
  %156 = vst.msk [vmem:[%s3] sm:$0xff] %vm155, %v149
  %157 = vst.msk [vmem:[%s3 + $0x8] sm:$0xff] %vm155, %v152
  // Predicated region
  $region14: #{_lambda_.82} parent=0 // pred_check
    _
  $region15: #{_lambda_.82} parent=0 // pred_check_branch
    %159 = sbr.rel (0) target = $region17
  $region16: #{_lambda_.82} parent=0 // pred_region
    _
  $region17: #{_lambda_.82} parent=0 // pred_fallthru
    _
  // Predicated region
  $region18: #{_lambda_.82} parent=0 // pred_check
    _
  $region19: #{_lambda_.82} parent=0 // pred_check_branch
    %161 = sbr.rel (0) target = $region21
  $region20: #{_lambda_.82} parent=0 // pred_region
    _
  $region21: #{_lambda_.82} parent=0 // pred_fallthru
    _

// kernel: _lambda_.84
$region0: #{_lambda_.84}
  #allocation0 [shape = 'u32[]', space=smem, size = 0x4, offset = 0x4, fixed_abs, tag = 'smem constant byte address 0x4 - core index']
  #allocation1 [shape = 'u32[144,128]{1,0:T(1,128)}', space=vmem, size = 0x12000, scoped, tag = 'internal scratch']
  %s0 = inlined_call_operand.vmem [shape: bf16[144,32], index: 0, kind: input, shape index: {}]
  %s1 = inlined_call_operand.vmem [shape: f32[16,32], index: 1, kind: input, shape index: {}]
  %s2 = inlined_call_operand.vmem [shape: bf16[32,144], index: 2, kind: input, shape index: {}]
  %s3 = inlined_call_operand.vmem [shape: f32[32,1], index: 3, kind: input, shape index: {}]
  %s4 = inlined_call_operand.vmem [shape: f32[16,32], index: 4, kind: output, shape index: {}]
  %s5 = sld [smem:[#allocation0]]
  $region26: #{_lambda_.84} parent=0
    _
  %s7 = ssub.s32 1, %s5
  %s8 = scalar_select 0, %s7, %s5
  // Predicated region
  $region2: #{_lambda_.84} parent=0 // pred_check
    _
  $region3: #{_lambda_.84} parent=0 // pred_check_branch
    %10 = sbr.rel (0) target = $region5
  $region4: #{_lambda_.84} parent=0 // pred_region
    _
  $region5: #{_lambda_.84} parent=0 // pred_fallthru
    _
  // Predicated region
  $region6: #{_lambda_.84} parent=0 // pred_check
    _
  $region7: #{_lambda_.84} parent=0 // pred_check_branch
    %12 = sbr.rel (0) target = $region9
  $region8: #{_lambda_.84} parent=0 // pred_region
    _
  $region9: #{_lambda_.84} parent=0 // pred_fallthru
    _
  // Predicated region
  $region10: #{_lambda_.84} parent=0 // pred_check
    _
  $region11: #{_lambda_.84} parent=0 // pred_check_branch
    %14 = sbr.rel (0) target = $region13
  $region12: #{_lambda_.84} parent=0 // pred_region
    _
  $region13: #{_lambda_.84} parent=0 // pred_fallthru
    _
  // Predicated region
  $region14: #{_lambda_.84} parent=0 // pred_check
    _
  $region15: #{_lambda_.84} parent=0 // pred_check_branch
    %16 = sbr.rel (0) target = $region17
  $region16: #{_lambda_.84} parent=0 // pred_region
    _
  $region17: #{_lambda_.84} parent=0 // pred_fallthru
    _
  %v18 = vld [vmem:[%s2] sm:$0xff]
  %v19 = vld [vmem:[%s2 + $0x8] sm:$0xff]
  %v20 = vld [vmem:[%s2 + $0x10] sm:$0xff]
  %v21 = vld [vmem:[%s2 + $0x18] sm:$0xff]
  %v22 = vld [vmem:[%s0] sm:$0xf]
  %v23 = vld [vmem:[%s0 + $0x4] sm:$0xf]
  %v24 = vld [vmem:[%s0 + $0x8] sm:$0xf]
  %v25 = vld [vmem:[%s0 + $0xc] sm:$0xf]
  %v26 = vld [vmem:[%s0 + $0x10] sm:$0xf]
  %v27 = vld [vmem:[%s0 + $0x14] sm:$0xf]
  %v28 = vld [vmem:[%s0 + $0x18] sm:$0xf]
  %v29 = vld [vmem:[%s0 + $0x1c] sm:$0xf]
  %v30 = vld [vmem:[%s0 + $0x20] sm:$0xf]
  %v31 = vld [vmem:[%s0 + $0x24] sm:$0xf]
  %v32 = vld [vmem:[%s0 + $0x28] sm:$0xf]
  %v33 = vld [vmem:[%s0 + $0x2c] sm:$0xf]
  %v34 = vld [vmem:[%s0 + $0x30] sm:$0xf]
  %v35 = vld [vmem:[%s0 + $0x34] sm:$0xf]
  %v36 = vld [vmem:[%s0 + $0x38] sm:$0xf]
  %v37 = vld [vmem:[%s0 + $0x3c] sm:$0xf]
  %v38 = vld [vmem:[%s0 + $0x40] sm:$0xf]
  %v39 = vld [vmem:[%s0 + $0x44] sm:$0xf]
  %v40 = vld [vmem:[%s3] sm:$0xff]
  %v41 = vld [vmem:[%s3 + $0x8] sm:$0xff]
  %v42 = vld [vmem:[%s3 + $0x10] sm:$0xff]
  %v43 = vld [vmem:[%s3 + $0x18] sm:$0xff]
  %45 = vset.pattern.permute.xlu0 0
  %46 = vperm.xlu0 %45, %v40
  %v47 = vpop.permute.xlu0 %46
  %50 = vset.pattern.permute.xlu0 0
  %51 = vperm.xlu0 %50, %v41
  %v52 = vpop.permute.xlu0 %51
  %55 = vset.pattern.permute.xlu0 0
  %56 = vperm.xlu0 %55, %v42
  %v57 = vpop.permute.xlu0 %56
  %60 = vset.pattern.permute.xlu0 0
  %61 = vperm.xlu0 %60, %v43
  %v62 = vpop.permute.xlu0 %61
  %v68 = vunpack.c.l.b16 %v18
  %v69 = vunpack.c.h.b16 %v18
  %v70 = vunpack.c.l.b16 %v19
  %v71 = vunpack.c.h.b16 %v19
  %v72 = vunpack.c.l.b16 %v20
  %v73 = vunpack.c.h.b16 %v20
  %v74 = vunpack.c.l.b16 %v21
  %v75 = vunpack.c.h.b16 %v21
  %v76 = vpack.c.b16 %v70, %v68
  %v77 = vpack.c.b16 %v71, %v69
  %v78 = vpack.c.b16 %v74, %v72
  %v79 = vpack.c.b16 %v75, %v73
  %v100 = vunpack.c.l.b16 %v22
  %v101 = vunpack.c.l.b16 %v23
  %v102 = vunpack.c.l.b16 %v24
  %v103 = vunpack.c.l.b16 %v25
  %v104 = vunpack.c.l.b16 %v26
  %v105 = vunpack.c.l.b16 %v27
  %v106 = vunpack.c.l.b16 %v28
  %v107 = vunpack.c.l.b16 %v29
  %v108 = vunpack.c.l.b16 %v30
  %v109 = vunpack.c.l.b16 %v31
  %v110 = vunpack.c.l.b16 %v32
  %v111 = vunpack.c.l.b16 %v33
  %v112 = vunpack.c.l.b16 %v34
  %v113 = vunpack.c.l.b16 %v35
  %v114 = vunpack.c.l.b16 %v36
  %v115 = vunpack.c.l.b16 %v37
  %v116 = vunpack.c.l.b16 %v38
  %v117 = vunpack.c.l.b16 %v39
  %v118 = vpack.c.b16 %v101, %v100
  %v119 = vpack.c.b16 %v103, %v102
  %v120 = vpack.c.b16 %v105, %v104
  %v121 = vpack.c.b16 %v107, %v106
  %v122 = vpack.c.b16 %v109, %v108
  %v123 = vpack.c.b16 %v111, %v110
  %v124 = vpack.c.b16 %v113, %v112
  %v125 = vpack.c.b16 %v115, %v114
  %v126 = vpack.c.b16 %v117, %v116
  %vm136 = vcmask 130048
  %v138 = vsel %vm136, %v77, 0
  %v141 = vsel %vm136, %v79, 0
  %143 = vmatprep.subr.bf16.mxu0 0
  %144 = vmatpush1.bf16.msra.mxu0 %v118
  %145 = vmatprep.subr.bf16.mxu0 0
  %146 = vmatpush1.bf16.msra.mxu0 %v119
  %147 = vmatprep.subr.bf16.mxu0 0
  %148 = vmatpush1.bf16.msra.mxu0 %v120
  %149 = vmatprep.subr.bf16.mxu0 0
  %150 = vmatpush1.bf16.msra.mxu0 %v121
  %151 = vmatprep.subr.bf16.mxu0 0
  %152 = vmatpush1.bf16.msra.mxu0 %v122
  %153 = vmatprep.subr.bf16.mxu0 0
  %154 = vmatpush1.bf16.msra.mxu0 %v123
  %155 = vmatprep.subr.bf16.mxu0 0
  %156 = vmatpush1.bf16.msra.mxu0 %v124
  %157 = vmatprep.subr.bf16.mxu0 0
  %158 = vmatpush1.bf16.msra.mxu0 %v125
  %159 = vmatprep.subr.bf16.mxu0 0
  %160 = vmatpush1.bf16.msra.mxu0 %v126
  %161 = vmatprep.subr.bf16.mxu0 0
  %162 = vmatpush1.bf16.msra.mxu0 0
  %163 = vmatprep.subr.bf16.mxu0 0
  %164 = vmatpush1.bf16.msra.mxu0 0
  %165 = vmatprep.subr.bf16.mxu0 0
  %166 = vmatpush1.bf16.msra.mxu0 0
  %167 = vmatprep.subr.bf16.mxu0 0
  %168 = vmatpush1.bf16.msra.mxu0 0
  %169 = vmatprep.subr.bf16.mxu0 0
  %170 = vmatpush1.bf16.msra.mxu0 0
  %171 = vmatprep.subr.bf16.mxu0 0
  %172 = vmatpush1.bf16.msra.mxu0 0
  %173 = vmatprep.subr.bf16.mxu0 0
  %174 = vmatpush1.bf16.msra.mxu0 0
  %175 = vmatprep.mubr.bf16.mxu0 %v138
  %176 = vmatmul.mubr.bf16.gmra.mrb[0].mxu0 %v76
  %v177 = vpop.f32.mrb[0].mxu0
  %v178 = vadd.f32 %v47, %v177
  %v179 = vpop.f32.mrb[0].mxu0
  %v180 = vpop.f32.mrb[0].mxu0
  %v181 = vadd.f32 %v52, %v180
  %v182 = vpop.f32.mrb[0].mxu0
  %183 = vmatprep.mubr.bf16.mxu0 %v141
  %184 = vmatmul.mubr.bf16.gmra.mrb[0].mxu0 %v78
  %v185 = vpop.f32.mrb[0].mxu0
  %v186 = vadd.f32 %v57, %v185
  %v187 = vpop.f32.mrb[0].mxu0
  %v188 = vpop.f32.mrb[0].mxu0
  %v189 = vadd.f32 %v62, %v188
  %v190 = vpop.f32.mrb[0].mxu0
  %191 = vdwg.mxu0
  %v192 = vld [vmem:[%s1] sm:$0xff]
  %v193 = vld [vmem:[%s1 + $0x8] sm:$0xff]
  %v194 = vadd.f32 %v178, 1.0
  %v195 = vadd.f32 %v181, 1.0
  %v196 = vmul.f32 %v192, %v194
  %v197 = vmul.f32 %v193, %v195
  %v198 = vadd.f32 %v196, %v186
  %v199 = vadd.f32 %v197, %v189
  %vm200 = vcmp.ge.f32.partialorder %v198, 0.0
  %vm201 = vcmp.ge.f32.partialorder %v199, 0.0
  %v202 = vmul.f32 %v198, 0.2
  %v203 = vmul.f32 %v199, 0.2
  %v204 = vsel %vm200, %v198, %v202
  %v205 = vsel %vm201, %v199, %v203
  %vm206 = vcmask 261120
  %207 = vst.msk [vmem:[%s4] sm:$0xff] %vm206, %v204
  %208 = vst.msk [vmem:[%s4 + $0x8] sm:$0xff] %vm206, %v205
  // Predicated region
  $region18: #{_lambda_.84} parent=0 // pred_check
    _
  $region19: #{_lambda_.84} parent=0 // pred_check_branch
    %210 = sbr.rel (0) target = $region21
  $region20: #{_lambda_.84} parent=0 // pred_region
    _
  $region21: #{_lambda_.84} parent=0 // pred_fallthru
    _
  // Predicated region
  $region22: #{_lambda_.84} parent=0 // pred_check
    _
  $region23: #{_lambda_.84} parent=0 // pred_check_branch
    %212 = sbr.rel (0) target = $region25
  $region24: #{_lambda_.84} parent=0 // pred_region
    _
  $region25: #{_lambda_.84} parent=0 // pred_fallthru
    _

// kernel: _lambda_.88
$region0: #{_lambda_.88}
  #allocation0 [shape = 'u32[]', space=smem, size = 0x4, offset = 0x4, fixed_abs, tag = 'smem constant byte address 0x4 - core index']
  #allocation1 [shape = 'u32[144,128]{1,0:T(1,128)}', space=vmem, size = 0x12000, scoped, tag = 'internal scratch']
  %s0 = inlined_call_operand.vmem [shape: bf16[144,32], index: 0, kind: input, shape index: {}]
  %s1 = inlined_call_operand.vmem [shape: f32[16,32], index: 1, kind: input, shape index: {}]
  %s2 = inlined_call_operand.vmem [shape: bf16[16,144], index: 2, kind: input, shape index: {}]
  %s3 = inlined_call_operand.vmem [shape: f32[16,1], index: 3, kind: input, shape index: {}]
  %s4 = inlined_call_operand.vmem [shape: f32[16,32], index: 4, kind: output, shape index: {}]
  %s5 = sld [smem:[#allocation0]]
  $region26: #{_lambda_.88} parent=0
    _
  %s7 = ssub.s32 1, %s5
  %s8 = scalar_select 0, %s7, %s5
  // Predicated region
  $region2: #{_lambda_.88} parent=0 // pred_check
    _
  $region3: #{_lambda_.88} parent=0 // pred_check_branch
    %10 = sbr.rel (0) target = $region5
  $region4: #{_lambda_.88} parent=0 // pred_region
    _
  $region5: #{_lambda_.88} parent=0 // pred_fallthru
    _
  // Predicated region
  $region6: #{_lambda_.88} parent=0 // pred_check
    _
  $region7: #{_lambda_.88} parent=0 // pred_check_branch
    %12 = sbr.rel (0) target = $region9
  $region8: #{_lambda_.88} parent=0 // pred_region
    _
  $region9: #{_lambda_.88} parent=0 // pred_fallthru
    _
  // Predicated region
  $region10: #{_lambda_.88} parent=0 // pred_check
    _
  $region11: #{_lambda_.88} parent=0 // pred_check_branch
    %14 = sbr.rel (0) target = $region13
  $region12: #{_lambda_.88} parent=0 // pred_region
    _
  $region13: #{_lambda_.88} parent=0 // pred_fallthru
    _
  // Predicated region
  $region14: #{_lambda_.88} parent=0 // pred_check
    _
  $region15: #{_lambda_.88} parent=0 // pred_check_branch
    %16 = sbr.rel (0) target = $region17
  $region16: #{_lambda_.88} parent=0 // pred_region
    _
  $region17: #{_lambda_.88} parent=0 // pred_fallthru
    _
  %v18 = vld [vmem:[%s2] sm:$0xff]
  %v19 = vld [vmem:[%s2 + $0x8] sm:$0xff]
  %v20 = vld [vmem:[%s0] sm:$0xf]
  %v21 = vld [vmem:[%s0 + $0x4] sm:$0xf]
  %v22 = vld [vmem:[%s0 + $0x8] sm:$0xf]
  %v23 = vld [vmem:[%s0 + $0xc] sm:$0xf]
  %v24 = vld [vmem:[%s0 + $0x10] sm:$0xf]
  %v25 = vld [vmem:[%s0 + $0x14] sm:$0xf]
  %v26 = vld [vmem:[%s0 + $0x18] sm:$0xf]
  %v27 = vld [vmem:[%s0 + $0x1c] sm:$0xf]
  %v28 = vld [vmem:[%s0 + $0x20] sm:$0xf]
  %v29 = vld [vmem:[%s0 + $0x24] sm:$0xf]
  %v30 = vld [vmem:[%s0 + $0x28] sm:$0xf]
  %v31 = vld [vmem:[%s0 + $0x2c] sm:$0xf]
  %v32 = vld [vmem:[%s0 + $0x30] sm:$0xf]
  %v33 = vld [vmem:[%s0 + $0x34] sm:$0xf]
  %v34 = vld [vmem:[%s0 + $0x38] sm:$0xf]
  %v35 = vld [vmem:[%s0 + $0x3c] sm:$0xf]
  %v36 = vld [vmem:[%s0 + $0x40] sm:$0xf]
  %v37 = vld [vmem:[%s0 + $0x44] sm:$0xf]
  %v38 = vld [vmem:[%s3] sm:$0xff]
  %v39 = vld [vmem:[%s3 + $0x8] sm:$0xff]
  %41 = vset.pattern.permute.xlu0 0
  %42 = vperm.xlu0 %41, %v38
  %v43 = vpop.permute.xlu0 %42
  %46 = vset.pattern.permute.xlu0 0
  %47 = vperm.xlu0 %46, %v39
  %v48 = vpop.permute.xlu0 %47
  %v52 = vunpack.c.l.b16 %v18
  %v53 = vunpack.c.h.b16 %v18
  %v54 = vunpack.c.l.b16 %v19
  %v55 = vunpack.c.h.b16 %v19
  %v56 = vpack.c.b16 %v54, %v52
  %v57 = vpack.c.b16 %v55, %v53
  %v77 = vunpack.c.l.b16 %v20
  %v78 = vunpack.c.l.b16 %v21
  %v79 = vunpack.c.l.b16 %v22
  %v80 = vunpack.c.l.b16 %v23
  %v81 = vunpack.c.l.b16 %v24
  %v82 = vunpack.c.l.b16 %v25
  %v83 = vunpack.c.l.b16 %v26
  %v84 = vunpack.c.l.b16 %v27
  %v85 = vunpack.c.l.b16 %v28
  %v86 = vunpack.c.l.b16 %v29
  %v87 = vunpack.c.l.b16 %v30
  %v88 = vunpack.c.l.b16 %v31
  %v89 = vunpack.c.l.b16 %v32
  %v90 = vunpack.c.l.b16 %v33
  %v91 = vunpack.c.l.b16 %v34
  %v92 = vunpack.c.l.b16 %v35
  %v93 = vunpack.c.l.b16 %v36
  %v94 = vunpack.c.l.b16 %v37
  %v95 = vpack.c.b16 %v78, %v77
  %v96 = vpack.c.b16 %v80, %v79
  %v97 = vpack.c.b16 %v82, %v81
  %v98 = vpack.c.b16 %v84, %v83
  %v99 = vpack.c.b16 %v86, %v85
  %v100 = vpack.c.b16 %v88, %v87
  %v101 = vpack.c.b16 %v90, %v89
  %v102 = vpack.c.b16 %v92, %v91
  %v103 = vpack.c.b16 %v94, %v93
  %vm113 = vcmask 130048
  %v115 = vsel %vm113, %v57, 0
  %117 = vmatprep.subr.bf16.mxu0 0
  %118 = vmatpush1.bf16.msra.mxu0 %v95
  %119 = vmatprep.subr.bf16.mxu0 0
  %120 = vmatpush1.bf16.msra.mxu0 %v96
  %121 = vmatprep.subr.bf16.mxu0 0
  %122 = vmatpush1.bf16.msra.mxu0 %v97
  %123 = vmatprep.subr.bf16.mxu0 0
  %124 = vmatpush1.bf16.msra.mxu0 %v98
  %125 = vmatprep.subr.bf16.mxu0 0
  %126 = vmatpush1.bf16.msra.mxu0 %v99
  %127 = vmatprep.subr.bf16.mxu0 0
  %128 = vmatpush1.bf16.msra.mxu0 %v100
  %129 = vmatprep.subr.bf16.mxu0 0
  %130 = vmatpush1.bf16.msra.mxu0 %v101
  %131 = vmatprep.subr.bf16.mxu0 0
  %132 = vmatpush1.bf16.msra.mxu0 %v102
  %133 = vmatprep.subr.bf16.mxu0 0
  %134 = vmatpush1.bf16.msra.mxu0 %v103
  %135 = vmatprep.subr.bf16.mxu0 0
  %136 = vmatpush1.bf16.msra.mxu0 0
  %137 = vmatprep.subr.bf16.mxu0 0
  %138 = vmatpush1.bf16.msra.mxu0 0
  %139 = vmatprep.subr.bf16.mxu0 0
  %140 = vmatpush1.bf16.msra.mxu0 0
  %141 = vmatprep.subr.bf16.mxu0 0
  %142 = vmatpush1.bf16.msra.mxu0 0
  %143 = vmatprep.subr.bf16.mxu0 0
  %144 = vmatpush1.bf16.msra.mxu0 0
  %145 = vmatprep.subr.bf16.mxu0 0
  %146 = vmatpush1.bf16.msra.mxu0 0
  %147 = vmatprep.subr.bf16.mxu0 0
  %148 = vmatpush1.bf16.msra.mxu0 0
  %149 = vmatprep.mubr.bf16.mxu0 %v115
  %150 = vmatmul.mubr.bf16.gmra.mrb[0].mxu0 %v56
  %v151 = vpop.f32.mrb[0].mxu0
  %v152 = vadd.f32 %v43, %v151
  %v153 = vpop.f32.mrb[0].mxu0
  %v154 = vpop.f32.mrb[0].mxu0
  %v155 = vadd.f32 %v48, %v154
  %v156 = vpop.f32.mrb[0].mxu0
  %157 = vdwg.mxu0
  %v158 = vld [vmem:[%s1] sm:$0xff]
  %v159 = vld [vmem:[%s1 + $0x8] sm:$0xff]
  %v160 = vadd.f32 %v152, %v158
  %v161 = vadd.f32 %v155, %v159
  %vm162 = vcmask 261120
  %163 = vst.msk [vmem:[%s4] sm:$0xff] %vm162, %v160
  %164 = vst.msk [vmem:[%s4 + $0x8] sm:$0xff] %vm162, %v161
  // Predicated region
  $region18: #{_lambda_.88} parent=0 // pred_check
    _
  $region19: #{_lambda_.88} parent=0 // pred_check_branch
    %166 = sbr.rel (0) target = $region21
  $region20: #{_lambda_.88} parent=0 // pred_region
    _
  $region21: #{_lambda_.88} parent=0 // pred_fallthru
    _
  // Predicated region
  $region22: #{_lambda_.88} parent=0 // pred_check
    _
  $region23: #{_lambda_.88} parent=0 // pred_check_branch
    %168 = sbr.rel (0) target = $region25
  $region24: #{_lambda_.88} parent=0 // pred_region
    _
  $region25: #{_lambda_.88} parent=0 // pred_fallthru
    _

// kernel: _lambda_.96
$region0: #{_lambda_.96}
  #allocation0 [shape = 'u32[]', space=smem, size = 0x4, offset = 0x4, fixed_abs, tag = 'smem constant byte address 0x4 - core index']
  #allocation1 [shape = 'u32[144,128]{1,0:T(1,128)}', space=vmem, size = 0x12000, scoped, tag = 'internal scratch']
  %s0 = inlined_call_operand.vmem [shape: bf16[144,32], index: 0, kind: input, shape index: {}]
  %s1 = inlined_call_operand.vmem [shape: bf16[8,144], index: 1, kind: input, shape index: {}]
  %s2 = inlined_call_operand.vmem [shape: f32[8,1], index: 2, kind: input, shape index: {}]
  %s3 = inlined_call_operand.vmem [shape: f32[8,32], index: 3, kind: output, shape index: {}]
  %s4 = sld [smem:[#allocation0]]
  $region22: #{_lambda_.96} parent=0
    _
  %s6 = ssub.s32 1, %s4
  %s7 = scalar_select 0, %s6, %s4
  // Predicated region
  $region2: #{_lambda_.96} parent=0 // pred_check
    _
  $region3: #{_lambda_.96} parent=0 // pred_check_branch
    %9 = sbr.rel (0) target = $region5
  $region4: #{_lambda_.96} parent=0 // pred_region
    _
  $region5: #{_lambda_.96} parent=0 // pred_fallthru
    _
  // Predicated region
  $region6: #{_lambda_.96} parent=0 // pred_check
    _
  $region7: #{_lambda_.96} parent=0 // pred_check_branch
    %11 = sbr.rel (0) target = $region9
  $region8: #{_lambda_.96} parent=0 // pred_region
    _
  $region9: #{_lambda_.96} parent=0 // pred_fallthru
    _
  // Predicated region
  $region10: #{_lambda_.96} parent=0 // pred_check
    _
  $region11: #{_lambda_.96} parent=0 // pred_check_branch
    %13 = sbr.rel (0) target = $region13
  $region12: #{_lambda_.96} parent=0 // pred_region
    _
  $region13: #{_lambda_.96} parent=0 // pred_fallthru
    _
  %v15 = vld [vmem:[%s1] sm:$0xff]
  %v16 = vld [vmem:[%s0] sm:$0xf]
  %v17 = vld [vmem:[%s0 + $0x4] sm:$0xf]
  %v18 = vld [vmem:[%s0 + $0x8] sm:$0xf]
  %v19 = vld [vmem:[%s0 + $0xc] sm:$0xf]
  %v20 = vld [vmem:[%s0 + $0x10] sm:$0xf]
  %v21 = vld [vmem:[%s0 + $0x14] sm:$0xf]
  %v22 = vld [vmem:[%s0 + $0x18] sm:$0xf]
  %v23 = vld [vmem:[%s0 + $0x1c] sm:$0xf]
  %v24 = vld [vmem:[%s0 + $0x20] sm:$0xf]
  %v25 = vld [vmem:[%s0 + $0x24] sm:$0xf]
  %v26 = vld [vmem:[%s0 + $0x28] sm:$0xf]
  %v27 = vld [vmem:[%s0 + $0x2c] sm:$0xf]
  %v28 = vld [vmem:[%s0 + $0x30] sm:$0xf]
  %v29 = vld [vmem:[%s0 + $0x34] sm:$0xf]
  %v30 = vld [vmem:[%s0 + $0x38] sm:$0xf]
  %v31 = vld [vmem:[%s0 + $0x3c] sm:$0xf]
  %v32 = vld [vmem:[%s0 + $0x40] sm:$0xf]
  %v33 = vld [vmem:[%s0 + $0x44] sm:$0xf]
  %v34 = vld [vmem:[%s2] sm:$0xff]
  %36 = vset.pattern.permute.xlu0 0
  %37 = vperm.xlu0 %36, %v34
  %v38 = vpop.permute.xlu0 %37
  %v41 = vunpack.c.l.b16 %v15
  %v42 = vunpack.c.h.b16 %v15
  %v43 = vpack.c.b16 %v41, %v41
  %v44 = vpack.c.b16 %v42, %v42
  %v64 = vunpack.c.l.b16 %v16
  %v65 = vunpack.c.l.b16 %v17
  %v66 = vunpack.c.l.b16 %v18
  %v67 = vunpack.c.l.b16 %v19
  %v68 = vunpack.c.l.b16 %v20
  %v69 = vunpack.c.l.b16 %v21
  %v70 = vunpack.c.l.b16 %v22
  %v71 = vunpack.c.l.b16 %v23
  %v72 = vunpack.c.l.b16 %v24
  %v73 = vunpack.c.l.b16 %v25
  %v74 = vunpack.c.l.b16 %v26
  %v75 = vunpack.c.l.b16 %v27
  %v76 = vunpack.c.l.b16 %v28
  %v77 = vunpack.c.l.b16 %v29
  %v78 = vunpack.c.l.b16 %v30
  %v79 = vunpack.c.l.b16 %v31
  %v80 = vunpack.c.l.b16 %v32
  %v81 = vunpack.c.l.b16 %v33
  %v82 = vpack.c.b16 %v65, %v64
  %v83 = vpack.c.b16 %v67, %v66
  %v84 = vpack.c.b16 %v69, %v68
  %v85 = vpack.c.b16 %v71, %v70
  %v86 = vpack.c.b16 %v73, %v72
  %v87 = vpack.c.b16 %v75, %v74
  %v88 = vpack.c.b16 %v77, %v76
  %v89 = vpack.c.b16 %v79, %v78
  %v90 = vpack.c.b16 %v81, %v80
  %vm100 = vcmask 130048
  %v102 = vsel %vm100, %v44, 0
  %104 = vmatprep.subr.bf16.mxu0 0
  %105 = vmatpush1.bf16.msra.mxu0 %v82
  %106 = vmatprep.subr.bf16.mxu0 0
  %107 = vmatpush1.bf16.msra.mxu0 %v83
  %108 = vmatprep.subr.bf16.mxu0 0
  %109 = vmatpush1.bf16.msra.mxu0 %v84
  %110 = vmatprep.subr.bf16.mxu0 0
  %111 = vmatpush1.bf16.msra.mxu0 %v85
  %112 = vmatprep.subr.bf16.mxu0 0
  %113 = vmatpush1.bf16.msra.mxu0 %v86
  %114 = vmatprep.subr.bf16.mxu0 0
  %115 = vmatpush1.bf16.msra.mxu0 %v87
  %116 = vmatprep.subr.bf16.mxu0 0
  %117 = vmatpush1.bf16.msra.mxu0 %v88
  %118 = vmatprep.subr.bf16.mxu0 0
  %119 = vmatpush1.bf16.msra.mxu0 %v89
  %120 = vmatprep.subr.bf16.mxu0 0
  %121 = vmatpush1.bf16.msra.mxu0 %v90
  %122 = vmatprep.subr.bf16.mxu0 0
  %123 = vmatpush1.bf16.msra.mxu0 0
  %124 = vmatprep.subr.bf16.mxu0 0
  %125 = vmatpush1.bf16.msra.mxu0 0
  %126 = vmatprep.subr.bf16.mxu0 0
  %127 = vmatpush1.bf16.msra.mxu0 0
  %128 = vmatprep.subr.bf16.mxu0 0
  %129 = vmatpush1.bf16.msra.mxu0 0
  %130 = vmatprep.subr.bf16.mxu0 0
  %131 = vmatpush1.bf16.msra.mxu0 0
  %132 = vmatprep.subr.bf16.mxu0 0
  %133 = vmatpush1.bf16.msra.mxu0 0
  %134 = vmatprep.subr.bf16.mxu0 0
  %135 = vmatpush1.bf16.msra.mxu0 0
  %136 = vmatprep.mubr.bf16.mxu0 %v102
  %137 = vmatmul.mubr.bf16.gmra.mrb[0].mxu0 %v43
  %v138 = vpop.f32.mrb[0].mxu0
  %v139 = vadd.f32 %v38, %v138
  %v140 = vpop.f32.mrb[0].mxu0
  %v141 = vpop.f32.mrb[0].mxu0
  %v142 = vpop.f32.mrb[0].mxu0
  %143 = vdwg.mxu0
  %vm144 = vcmask 261120
  %145 = vst.msk [vmem:[%s3] sm:$0xff] %vm144, %v139
  // Predicated region
  $region14: #{_lambda_.96} parent=0 // pred_check
    _
  $region15: #{_lambda_.96} parent=0 // pred_check_branch
    %147 = sbr.rel (0) target = $region17
  $region16: #{_lambda_.96} parent=0 // pred_region
    _
  $region17: #{_lambda_.96} parent=0 // pred_fallthru
    _
  // Predicated region
  $region18: #{_lambda_.96} parent=0 // pred_check
    _
  $region19: #{_lambda_.96} parent=0 // pred_check_branch
    %149 = sbr.rel (0) target = $region21
  $region20: #{_lambda_.96} parent=0 // pred_region
    _
  $region21: #{_lambda_.96} parent=0 // pred_fallthru
    _

// kernel: _lambda_.97
$region0: #{_lambda_.97}
  #allocation0 [shape = 'u32[]', space=smem, size = 0x4, offset = 0x4, fixed_abs, tag = 'smem constant byte address 0x4 - core index']
  #allocation1 [shape = 'u32[144,128]{1,0:T(1,128)}', space=vmem, size = 0x12000, scoped, tag = 'internal scratch']
  %s0 = inlined_call_operand.vmem [shape: bf16[8,32], index: 0, kind: input, shape index: {}]
  %s1 = inlined_call_operand.vmem [shape: bf16[4,8], index: 1, kind: input, shape index: {}]
  %s2 = inlined_call_operand.vmem [shape: f32[4,1], index: 2, kind: input, shape index: {}]
  %s3 = inlined_call_operand.vmem [shape: f32[4,32], index: 3, kind: output, shape index: {}]
  %s4 = sld [smem:[#allocation0]]
  $region22: #{_lambda_.97} parent=0
    _
  %s6 = ssub.s32 1, %s4
  %s7 = scalar_select 0, %s6, %s4
  // Predicated region
  $region2: #{_lambda_.97} parent=0 // pred_check
    _
  $region3: #{_lambda_.97} parent=0 // pred_check_branch
    %9 = sbr.rel (0) target = $region5
  $region4: #{_lambda_.97} parent=0 // pred_region
    _
  $region5: #{_lambda_.97} parent=0 // pred_fallthru
    _
  // Predicated region
  $region6: #{_lambda_.97} parent=0 // pred_check
    _
  $region7: #{_lambda_.97} parent=0 // pred_check_branch
    %11 = sbr.rel (0) target = $region9
  $region8: #{_lambda_.97} parent=0 // pred_region
    _
  $region9: #{_lambda_.97} parent=0 // pred_fallthru
    _
  // Predicated region
  $region10: #{_lambda_.97} parent=0 // pred_check
    _
  $region11: #{_lambda_.97} parent=0 // pred_check_branch
    %13 = sbr.rel (0) target = $region13
  $region12: #{_lambda_.97} parent=0 // pred_region
    _
  $region13: #{_lambda_.97} parent=0 // pred_fallthru
    _
  %v15 = vld [vmem:[%s1] sm:$0x3]
  %v16 = vld [vmem:[%s0] sm:$0xf]
  %v17 = vld [vmem:[%s2] sm:$0xf]
  %19 = vset.pattern.permute.xlu0 0
  %20 = vperm.xlu0 %19, %v17
  %v21 = vpop.permute.xlu0 %20
  %vm23 = vcmask 64512
  %v25 = vsel %vm23, %v15, 0
  %vm27 = vcmask 1043456
  %v29 = vsel %vm27, %v16, 0
  %31 = vmatprep.subr.bf16.mxu0 0
  %32 = vmatpush1.bf16.msra.mxu0 %v29
  %33 = vmatprep.subr.bf16.mxu0 0
  %34 = vmatpush1.bf16.msra.mxu0 0
  %35 = vmatprep.subr.bf16.mxu0 0
  %36 = vmatpush1.bf16.msra.mxu0 0
  %37 = vmatprep.subr.bf16.mxu0 0
  %38 = vmatpush1.bf16.msra.mxu0 0
  %39 = vmatprep.subr.bf16.mxu0 0
  %40 = vmatpush1.bf16.msra.mxu0 0
  %41 = vmatprep.subr.bf16.mxu0 0
  %42 = vmatpush1.bf16.msra.mxu0 0
  %43 = vmatprep.subr.bf16.mxu0 0
  %44 = vmatpush1.bf16.msra.mxu0 0
  %45 = vmatprep.subr.bf16.mxu0 0
  %46 = vmatpush1.bf16.msra.mxu0 0
  %47 = vmatprep.subr.bf16.mxu0 0
  %48 = vmatpush1.bf16.msra.mxu0 0
  %49 = vmatprep.subr.bf16.mxu0 0
  %50 = vmatpush1.bf16.msra.mxu0 0
  %51 = vmatprep.subr.bf16.mxu0 0
  %52 = vmatpush1.bf16.msra.mxu0 0
  %53 = vmatprep.subr.bf16.mxu0 0
  %54 = vmatpush1.bf16.msra.mxu0 0
  %55 = vmatprep.subr.bf16.mxu0 0
  %56 = vmatpush1.bf16.msra.mxu0 0
  %57 = vmatprep.subr.bf16.mxu0 0
  %58 = vmatpush1.bf16.msra.mxu0 0
  %59 = vmatprep.subr.bf16.mxu0 0
  %60 = vmatpush1.bf16.msra.mxu0 0
  %61 = vmatprep.subr.bf16.mxu0 0
  %62 = vmatpush1.bf16.msra.mxu0 0
  %63 = vmatprep.mubr.bf16.mxu0 0
  %64 = vmatmul.mubr.bf16.gmra.mrb[0].mxu0 %v25
  %v65 = vpop.f32.mrb[0].mxu0
  %v66 = vadd.f32 %v21, %v65
  %v67 = vpop.f32.mrb[0].mxu0
  %v68 = vpop.f32.mrb[0].mxu0
  %v69 = vpop.f32.mrb[0].mxu0
  %70 = vdwg.mxu0
  %v71 = vmax.f32 %v66, 0.0
  %vm72 = vcmask 257024
  %73 = vst.msk [vmem:[%s3] sm:$0xf] %vm72, %v71
  // Predicated region
  $region14: #{_lambda_.97} parent=0 // pred_check
    _
  $region15: #{_lambda_.97} parent=0 // pred_check_branch
    %75 = sbr.rel (0) target = $region17
  $region16: #{_lambda_.97} parent=0 // pred_region
    _
  $region17: #{_lambda_.97} parent=0 // pred_fallthru
    _
  // Predicated region
  $region18: #{_lambda_.97} parent=0 // pred_check
    _
  $region19: #{_lambda_.97} parent=0 // pred_check_branch
    %77 = sbr.rel (0) target = $region21
  $region20: #{_lambda_.97} parent=0 // pred_region
    _
  $region21: #{_lambda_.97} parent=0 // pred_fallthru
    _

// kernel: _lambda_.98
$region0: #{_lambda_.98}
  #allocation0 [shape = 'u32[]', space=smem, size = 0x4, offset = 0x4, fixed_abs, tag = 'smem constant byte address 0x4 - core index']
  #allocation1 [shape = 'u32[144,128]{1,0:T(1,128)}', space=vmem, size = 0x12000, scoped, tag = 'internal scratch']
  %s0 = inlined_call_operand.vmem [shape: bf16[36,32], index: 0, kind: input, shape index: {}]
  %s1 = inlined_call_operand.vmem [shape: f32[8,32], index: 1, kind: input, shape index: {}]
  %s2 = inlined_call_operand.vmem [shape: bf16[4,36], index: 2, kind: input, shape index: {}]
  %s3 = inlined_call_operand.vmem [shape: f32[4,1], index: 3, kind: input, shape index: {}]
  %s4 = inlined_call_operand.vmem [shape: bf16[8,4], index: 4, kind: input, shape index: {}]
  %s5 = inlined_call_operand.vmem [shape: f32[8,1], index: 5, kind: input, shape index: {}]
  %s6 = inlined_call_operand.vmem [shape: f32[8,32], index: 6, kind: output, shape index: {}]
  %s7 = sld [smem:[#allocation0]]
  $region34: #{_lambda_.98} parent=0
    _
  %s9 = ssub.s32 1, %s7
  %s10 = scalar_select 0, %s9, %s7
  // Predicated region
  $region2: #{_lambda_.98} parent=0 // pred_check
    _
  $region3: #{_lambda_.98} parent=0 // pred_check_branch
    %12 = sbr.rel (0) target = $region5
  $region4: #{_lambda_.98} parent=0 // pred_region
    _
  $region5: #{_lambda_.98} parent=0 // pred_fallthru
    _
  // Predicated region
  $region6: #{_lambda_.98} parent=0 // pred_check
    _
  $region7: #{_lambda_.98} parent=0 // pred_check_branch
    %14 = sbr.rel (0) target = $region9
  $region8: #{_lambda_.98} parent=0 // pred_region
    _
  $region9: #{_lambda_.98} parent=0 // pred_fallthru
    _
  // Predicated region
  $region10: #{_lambda_.98} parent=0 // pred_check
    _
  $region11: #{_lambda_.98} parent=0 // pred_check_branch
    %16 = sbr.rel (0) target = $region13
  $region12: #{_lambda_.98} parent=0 // pred_region
    _
  $region13: #{_lambda_.98} parent=0 // pred_fallthru
    _
  // Predicated region
  $region14: #{_lambda_.98} parent=0 // pred_check
    _
  $region15: #{_lambda_.98} parent=0 // pred_check_branch
    %18 = sbr.rel (0) target = $region17
  $region16: #{_lambda_.98} parent=0 // pred_region
    _
  $region17: #{_lambda_.98} parent=0 // pred_fallthru
    _
  // Predicated region
  $region18: #{_lambda_.98} parent=0 // pred_check
    _
  $region19: #{_lambda_.98} parent=0 // pred_check_branch
    %20 = sbr.rel (0) target = $region21
  $region20: #{_lambda_.98} parent=0 // pred_region
    _
  $region21: #{_lambda_.98} parent=0 // pred_fallthru
    _
  // Predicated region
  $region22: #{_lambda_.98} parent=0 // pred_check
    _
  $region23: #{_lambda_.98} parent=0 // pred_check_branch
    %22 = sbr.rel (0) target = $region25
  $region24: #{_lambda_.98} parent=0 // pred_region
    _
  $region25: #{_lambda_.98} parent=0 // pred_fallthru
    _
  %v24 = vld [vmem:[%s2] sm:$0x3]
  %v25 = vld [vmem:[%s0] sm:$0xf]
  %v26 = vld [vmem:[%s0 + $0x4] sm:$0xf]
  %v27 = vld [vmem:[%s0 + $0x8] sm:$0xf]
  %v28 = vld [vmem:[%s0 + $0xc] sm:$0xf]
  %v29 = vld [vmem:[%s0 + $0x10] sm:$0x3]
  %v30 = vld [vmem:[%s3] sm:$0xf]
  %32 = vset.pattern.permute.xlu0 0
  %33 = vperm.xlu0 %32, %v30
  %v34 = vpop.permute.xlu0 %33
  %v41 = vunpack.c.l.b16 %v25
  %v42 = vunpack.c.l.b16 %v26
  %v43 = vunpack.c.l.b16 %v27
  %v44 = vunpack.c.l.b16 %v28
  %v45 = vunpack.c.l.b16 %v29
  %v46 = vpack.c.b16 %v42, %v41
  %v47 = vpack.c.b16 %v44, %v43
  %v48 = vpack.c.b16 %v45, %v45
  %vm51 = vcmask 293888
  %v53 = vsel %vm51, %v24, 0
  %vm55 = vcmask 1041408
  %v57 = vsel %vm55, %v48, 0
  %59 = vmatprep.subr.bf16.mxu0 0
  %60 = vmatpush1.bf16.msra.mxu0 %v46
  %61 = vmatprep.subr.bf16.mxu0 0
  %62 = vmatpush1.bf16.msra.mxu0 %v47
  %63 = vmatprep.subr.bf16.mxu0 0
  %64 = vmatpush1.bf16.msra.mxu0 %v57
  %65 = vmatprep.subr.bf16.mxu0 0
  %66 = vmatpush1.bf16.msra.mxu0 0
  %67 = vmatprep.subr.bf16.mxu0 0
  %68 = vmatpush1.bf16.msra.mxu0 0
  %69 = vmatprep.subr.bf16.mxu0 0
  %70 = vmatpush1.bf16.msra.mxu0 0
  %71 = vmatprep.subr.bf16.mxu0 0
  %72 = vmatpush1.bf16.msra.mxu0 0
  %73 = vmatprep.subr.bf16.mxu0 0
  %74 = vmatpush1.bf16.msra.mxu0 0
  %75 = vmatprep.subr.bf16.mxu0 0
  %76 = vmatpush1.bf16.msra.mxu0 0
  %77 = vmatprep.subr.bf16.mxu0 0
  %78 = vmatpush1.bf16.msra.mxu0 0
  %79 = vmatprep.subr.bf16.mxu0 0
  %80 = vmatpush1.bf16.msra.mxu0 0
  %81 = vmatprep.subr.bf16.mxu0 0
  %82 = vmatpush1.bf16.msra.mxu0 0
  %83 = vmatprep.subr.bf16.mxu0 0
  %84 = vmatpush1.bf16.msra.mxu0 0
  %85 = vmatprep.subr.bf16.mxu0 0
  %86 = vmatpush1.bf16.msra.mxu0 0
  %87 = vmatprep.subr.bf16.mxu0 0
  %88 = vmatpush1.bf16.msra.mxu0 0
  %89 = vmatprep.subr.bf16.mxu0 0
  %90 = vmatpush1.bf16.msra.mxu0 0
  %91 = vmatprep.mubr.bf16.mxu0 0
  %92 = vmatmul.mubr.bf16.gmra.mrb[0].mxu0 %v53
  %v93 = vpop.f32.mrb[0].mxu0
  %v94 = vadd.f32 %v34, %v93
  %v95 = vpop.f32.mrb[0].mxu0
  %v96 = vpop.f32.mrb[0].mxu0
  %v97 = vpop.f32.mrb[0].mxu0
  %98 = vdwg.mxu0
  %v99 = vmax.f32 %v94, 0.0
  %v100 = vpack.c.bf16 %v99, %v99
  %v101 = vld [vmem:[%s4] sm:$0xf]
  %v102 = vld [vmem:[%s5] sm:$0xff]
  %104 = vset.pattern.permute.xlu0 0
  %105 = vperm.xlu0 %104, %v102
  %v106 = vpop.permute.xlu0 %105
  %vm108 = vcmask 31744
  %v110 = vsel %vm108, %v101, 0
  %v113 = vsel %vm55, %v100, 0
  %115 = vmatprep.subr.bf16.mxu0 0
  %116 = vmatpush1.bf16.msra.mxu0 %v113
  %117 = vmatprep.subr.bf16.mxu0 0
  %118 = vmatpush1.bf16.msra.mxu0 0
  %119 = vmatprep.subr.bf16.mxu0 0
  %120 = vmatpush1.bf16.msra.mxu0 0
  %121 = vmatprep.subr.bf16.mxu0 0
  %122 = vmatpush1.bf16.msra.mxu0 0
  %123 = vmatprep.subr.bf16.mxu0 0
  %124 = vmatpush1.bf16.msra.mxu0 0
  %125 = vmatprep.subr.bf16.mxu0 0
  %126 = vmatpush1.bf16.msra.mxu0 0
  %127 = vmatprep.subr.bf16.mxu0 0
  %128 = vmatpush1.bf16.msra.mxu0 0
  %129 = vmatprep.subr.bf16.mxu0 0
  %130 = vmatpush1.bf16.msra.mxu0 0
  %131 = vmatprep.subr.bf16.mxu0 0
  %132 = vmatpush1.bf16.msra.mxu0 0
  %133 = vmatprep.subr.bf16.mxu0 0
  %134 = vmatpush1.bf16.msra.mxu0 0
  %135 = vmatprep.subr.bf16.mxu0 0
  %136 = vmatpush1.bf16.msra.mxu0 0
  %137 = vmatprep.subr.bf16.mxu0 0
  %138 = vmatpush1.bf16.msra.mxu0 0
  %139 = vmatprep.subr.bf16.mxu0 0
  %140 = vmatpush1.bf16.msra.mxu0 0
  %141 = vmatprep.subr.bf16.mxu0 0
  %142 = vmatpush1.bf16.msra.mxu0 0
  %143 = vmatprep.subr.bf16.mxu0 0
  %144 = vmatpush1.bf16.msra.mxu0 0
  %145 = vmatprep.subr.bf16.mxu0 0
  %146 = vmatpush1.bf16.msra.mxu0 0
  %147 = vmatprep.mubr.bf16.mxu0 0
  %148 = vmatmul.mubr.bf16.gmra.mrb[0].mxu0 %v110
  %v149 = vpop.f32.mrb[0].mxu0
  %v150 = vadd.f32 %v106, %v149
  %v151 = vpop.f32.mrb[0].mxu0
  %v152 = vpop.f32.mrb[0].mxu0
  %v153 = vpop.f32.mrb[0].mxu0
  %154 = vdwg.mxu0
  %v155 = vld [vmem:[%s1] sm:$0xff]
  %v156 = vadd.f32 %v150, %v155
  %vm157 = vcmask 261120
  %158 = vst.msk [vmem:[%s6] sm:$0xff] %vm157, %v156
  // Predicated region
  $region26: #{_lambda_.98} parent=0 // pred_check
    _
  $region27: #{_lambda_.98} parent=0 // pred_check_branch
    %160 = sbr.rel (0) target = $region29
  $region28: #{_lambda_.98} parent=0 // pred_region
    _
  $region29: #{_lambda_.98} parent=0 // pred_fallthru
    _
  // Predicated region
  $region30: #{_lambda_.98} parent=0 // pred_check
    _
  $region31: #{_lambda_.98} parent=0 // pred_check_branch
    %162 = sbr.rel (0) target = $region33
  $region32: #{_lambda_.98} parent=0 // pred_region
    _
  $region33: #{_lambda_.98} parent=0 // pred_fallthru
    _

// kernel: _lambda_.103
$region0: #{_lambda_.103}
  #allocation0 [shape = 'u32[]', space=smem, size = 0x4, offset = 0x4, fixed_abs, tag = 'smem constant byte address 0x4 - core index']
  #allocation1 [shape = 'u32[144,128]{1,0:T(1,128)}', space=vmem, size = 0x12000, scoped, tag = 'internal scratch']
  %s0 = inlined_call_operand.vmem [shape: bf16[72,32], index: 0, kind: input, shape index: {}]
  %s1 = inlined_call_operand.vmem [shape: bf16[64,72], index: 1, kind: input, shape index: {}]
  %s2 = inlined_call_operand.vmem [shape: f32[64,1], index: 2, kind: input, shape index: {}]
  %s3 = inlined_call_operand.vmem [shape: f32[64,32], index: 3, kind: output, shape index: {}]
  %s4 = sld [smem:[#allocation0]]
  $region22: #{_lambda_.103} parent=0
    _
  %s6 = ssub.s32 1, %s4
  %s7 = scalar_select 0, %s6, %s4
  // Predicated region
  $region2: #{_lambda_.103} parent=0 // pred_check
    _
  $region3: #{_lambda_.103} parent=0 // pred_check_branch
    %9 = sbr.rel (0) target = $region5
  $region4: #{_lambda_.103} parent=0 // pred_region
    _
  $region5: #{_lambda_.103} parent=0 // pred_fallthru
    _
  // Predicated region
  $region6: #{_lambda_.103} parent=0 // pred_check
    _
  $region7: #{_lambda_.103} parent=0 // pred_check_branch
    %11 = sbr.rel (0) target = $region9
  $region8: #{_lambda_.103} parent=0 // pred_region
    _
  $region9: #{_lambda_.103} parent=0 // pred_fallthru
    _
  // Predicated region
  $region10: #{_lambda_.103} parent=0 // pred_check
    _
  $region11: #{_lambda_.103} parent=0 // pred_check_branch
    %13 = sbr.rel (0) target = $region13
  $region12: #{_lambda_.103} parent=0 // pred_region
    _
  $region13: #{_lambda_.103} parent=0 // pred_fallthru
    _
  %v15 = vld [vmem:[%s1] sm:$0xf]
  %v16 = vld [vmem:[%s1 + $0x4] sm:$0xf]
  %v17 = vld [vmem:[%s1 + $0x8] sm:$0xf]
  %v18 = vld [vmem:[%s1 + $0xc] sm:$0xf]
  %v19 = vld [vmem:[%s1 + $0x10] sm:$0xf]
  %v20 = vld [vmem:[%s1 + $0x14] sm:$0xf]
  %v21 = vld [vmem:[%s1 + $0x18] sm:$0xf]
  %v22 = vld [vmem:[%s1 + $0x1c] sm:$0xf]
  %v23 = vld [vmem:[%s0] sm:$0xf]
  %v24 = vld [vmem:[%s0 + $0x4] sm:$0xf]
  %v25 = vld [vmem:[%s0 + $0x8] sm:$0xf]
  %v26 = vld [vmem:[%s0 + $0xc] sm:$0xf]
  %v27 = vld [vmem:[%s0 + $0x10] sm:$0xf]
  %v28 = vld [vmem:[%s0 + $0x14] sm:$0xf]
  %v29 = vld [vmem:[%s0 + $0x18] sm:$0xf]
  %v30 = vld [vmem:[%s0 + $0x1c] sm:$0xf]
  %v31 = vld [vmem:[%s0 + $0x20] sm:$0xf]
  %v32 = vld [vmem:[%s2] sm:$0xff]
  %v33 = vld [vmem:[%s2 + $0x8] sm:$0xff]
  %v34 = vld [vmem:[%s2 + $0x10] sm:$0xff]
  %v35 = vld [vmem:[%s2 + $0x18] sm:$0xff]
  %v36 = vld [vmem:[%s2 + $0x20] sm:$0xff]
  %v37 = vld [vmem:[%s2 + $0x28] sm:$0xff]
  %v38 = vld [vmem:[%s2 + $0x30] sm:$0xff]
  %v39 = vld [vmem:[%s2 + $0x38] sm:$0xff]
  %41 = vset.pattern.permute.xlu0 0
  %42 = vperm.xlu0 %41, %v32
  %v43 = vpop.permute.xlu0 %42
  %46 = vset.pattern.permute.xlu0 0
  %47 = vperm.xlu0 %46, %v33
  %v48 = vpop.permute.xlu0 %47
  %51 = vset.pattern.permute.xlu0 0
  %52 = vperm.xlu0 %51, %v34
  %v53 = vpop.permute.xlu0 %52
  %56 = vset.pattern.permute.xlu0 0
  %57 = vperm.xlu0 %56, %v35
  %v58 = vpop.permute.xlu0 %57
  %61 = vset.pattern.permute.xlu0 0
  %62 = vperm.xlu0 %61, %v36
  %v63 = vpop.permute.xlu0 %62
  %66 = vset.pattern.permute.xlu0 0
  %67 = vperm.xlu0 %66, %v37
  %v68 = vpop.permute.xlu0 %67
  %71 = vset.pattern.permute.xlu0 0
  %72 = vperm.xlu0 %71, %v38
  %v73 = vpop.permute.xlu0 %72
  %76 = vset.pattern.permute.xlu0 0
  %77 = vperm.xlu0 %76, %v39
  %v78 = vpop.permute.xlu0 %77
  %v88 = vunpack.c.l.b16 %v15
  %v89 = vunpack.c.l.b16 %v16
  %v90 = vunpack.c.l.b16 %v17
  %v91 = vunpack.c.l.b16 %v18
  %v92 = vunpack.c.l.b16 %v19
  %v93 = vunpack.c.l.b16 %v20
  %v94 = vunpack.c.l.b16 %v21
  %v95 = vunpack.c.l.b16 %v22
  %v96 = vpack.c.b16 %v89, %v88
  %v97 = vpack.c.b16 %v91, %v90
  %v98 = vpack.c.b16 %v93, %v92
  %v99 = vpack.c.b16 %v95, %v94
  %v109 = vunpack.c.l.b16 %v23
  %v110 = vunpack.c.l.b16 %v24
  %v111 = vunpack.c.l.b16 %v25
  %v112 = vunpack.c.l.b16 %v26
  %v113 = vunpack.c.l.b16 %v27
  %v114 = vunpack.c.l.b16 %v28
  %v115 = vunpack.c.l.b16 %v29
  %v116 = vunpack.c.l.b16 %v30
  %v117 = vunpack.c.l.b16 %v31
  %v118 = vpack.c.b16 %v110, %v109
  %v119 = vpack.c.b16 %v112, %v111
  %v120 = vpack.c.b16 %v114, %v113
  %v121 = vpack.c.b16 %v116, %v115
  %v122 = vpack.c.b16 %v117, %v117
  %vm127 = vcmask 588800
  %v129 = vsel %vm127, %v96, 0
  %v132 = vsel %vm127, %v97, 0
  %v135 = vsel %vm127, %v98, 0
  %v138 = vsel %vm127, %v99, 0
  %vm140 = vcmask 1043456
  %v142 = vsel %vm140, %v122, 0
  %144 = vmatprep.subr.bf16.mxu0 0
  %145 = vmatpush1.bf16.msra.mxu0 %v118
  %146 = vmatprep.subr.bf16.mxu0 0
  %147 = vmatpush1.bf16.msra.mxu0 %v119
  %148 = vmatprep.subr.bf16.mxu0 0
  %149 = vmatpush1.bf16.msra.mxu0 %v120
  %150 = vmatprep.subr.bf16.mxu0 0
  %151 = vmatpush1.bf16.msra.mxu0 %v121
  %152 = vmatprep.subr.bf16.mxu0 0
  %153 = vmatpush1.bf16.msra.mxu0 %v142
  %154 = vmatprep.subr.bf16.mxu0 0
  %155 = vmatpush1.bf16.msra.mxu0 0
  %156 = vmatprep.subr.bf16.mxu0 0
  %157 = vmatpush1.bf16.msra.mxu0 0
  %158 = vmatprep.subr.bf16.mxu0 0
  %159 = vmatpush1.bf16.msra.mxu0 0
  %160 = vmatprep.subr.bf16.mxu0 0
  %161 = vmatpush1.bf16.msra.mxu0 0
  %162 = vmatprep.subr.bf16.mxu0 0
  %163 = vmatpush1.bf16.msra.mxu0 0
  %164 = vmatprep.subr.bf16.mxu0 0
  %165 = vmatpush1.bf16.msra.mxu0 0
  %166 = vmatprep.subr.bf16.mxu0 0
  %167 = vmatpush1.bf16.msra.mxu0 0
  %168 = vmatprep.subr.bf16.mxu0 0
  %169 = vmatpush1.bf16.msra.mxu0 0
  %170 = vmatprep.subr.bf16.mxu0 0
  %171 = vmatpush1.bf16.msra.mxu0 0
  %172 = vmatprep.subr.bf16.mxu0 0
  %173 = vmatpush1.bf16.msra.mxu0 0
  %174 = vmatprep.subr.bf16.mxu0 0
  %175 = vmatpush1.bf16.msra.mxu0 0
  %176 = vmatprep.mubr.bf16.mxu0 0
  %177 = vmatmul.mubr.bf16.gmra.mrb[0].mxu0 %v129
  %v178 = vpop.f32.mrb[0].mxu0
  %v179 = vadd.f32 %v43, %v178
  %v180 = vpop.f32.mrb[0].mxu0
  %v181 = vpop.f32.mrb[0].mxu0
  %v182 = vadd.f32 %v48, %v181
  %v183 = vpop.f32.mrb[0].mxu0
  %184 = vmatprep.mubr.bf16.mxu0 0
  %185 = vmatmul.mubr.bf16.gmra.mrb[0].mxu0 %v132
  %v186 = vpop.f32.mrb[0].mxu0
  %v187 = vadd.f32 %v53, %v186
  %v188 = vpop.f32.mrb[0].mxu0
  %v189 = vpop.f32.mrb[0].mxu0
  %v190 = vadd.f32 %v58, %v189
  %v191 = vpop.f32.mrb[0].mxu0
  %192 = vmatprep.mubr.bf16.mxu0 0
  %193 = vmatmul.mubr.bf16.gmra.mrb[0].mxu0 %v135
  %v194 = vpop.f32.mrb[0].mxu0
  %v195 = vadd.f32 %v63, %v194
  %v196 = vpop.f32.mrb[0].mxu0
  %v197 = vpop.f32.mrb[0].mxu0
  %v198 = vadd.f32 %v68, %v197
  %v199 = vpop.f32.mrb[0].mxu0
  %200 = vmatprep.mubr.bf16.mxu0 0
  %201 = vmatmul.mubr.bf16.gmra.mrb[0].mxu0 %v138
  %v202 = vpop.f32.mrb[0].mxu0
  %v203 = vadd.f32 %v73, %v202
  %v204 = vpop.f32.mrb[0].mxu0
  %v205 = vpop.f32.mrb[0].mxu0
  %v206 = vadd.f32 %v78, %v205
  %v207 = vpop.f32.mrb[0].mxu0
  %208 = vdwg.mxu0
  %vm209 = vcmp.ge.f32.partialorder %v179, 0.0
  %vm210 = vcmp.ge.f32.partialorder %v182, 0.0
  %vm211 = vcmp.ge.f32.partialorder %v187, 0.0
  %vm212 = vcmp.ge.f32.partialorder %v190, 0.0
  %vm213 = vcmp.ge.f32.partialorder %v195, 0.0
  %vm214 = vcmp.ge.f32.partialorder %v198, 0.0
  %vm215 = vcmp.ge.f32.partialorder %v203, 0.0
  %vm216 = vcmp.ge.f32.partialorder %v206, 0.0
  %v217 = vmul.f32 %v179, 0.01
  %v218 = vmul.f32 %v182, 0.01
  %v219 = vmul.f32 %v187, 0.01
  %v220 = vmul.f32 %v190, 0.01
  %v221 = vmul.f32 %v195, 0.01
  %v222 = vmul.f32 %v198, 0.01
  %v223 = vmul.f32 %v203, 0.01
  %v224 = vmul.f32 %v206, 0.01
  %v225 = vsel %vm209, %v179, %v217
  %v226 = vsel %vm210, %v182, %v218
  %v227 = vsel %vm211, %v187, %v219
  %v228 = vsel %vm212, %v190, %v220
  %v229 = vsel %vm213, %v195, %v221
  %v230 = vsel %vm214, %v198, %v222
  %v231 = vsel %vm215, %v203, %v223
  %v232 = vsel %vm216, %v206, %v224
  %v233 = vlaneseq
  %v234 = vshrl.u32 %v233, 7
  %v235 = vadd.s32 %v234, 8
  %v236 = vadd.s32 %v234, 16
  %v237 = vadd.s32 %v234, 24
  %v238 = vadd.s32 %v234, 32
  %v239 = vadd.s32 %v234, 40
  %v240 = vadd.s32 %v234, 48
  %v241 = vadd.s32 %v234, 56
  %vm242 = vcmp.lt.s32.totalorder %v234, 32
  %vm243 = vcmp.lt.s32.totalorder %v235, 32
  %vm244 = vcmp.lt.s32.totalorder %v236, 32
  %vm245 = vcmp.lt.s32.totalorder %v237, 32
  %vm246 = vcmp.lt.s32.totalorder %v238, 32
  %vm247 = vcmp.lt.s32.totalorder %v239, 32
  %vm248 = vcmp.lt.s32.totalorder %v240, 32
  %vm249 = vcmp.lt.s32.totalorder %v241, 32
  %v250 = vsel %vm242, %v225, %v179
  %v251 = vsel %vm243, %v226, %v182
  %v252 = vsel %vm244, %v227, %v187
  %v253 = vsel %vm245, %v228, %v190
  %v254 = vsel %vm246, %v229, %v195
  %v255 = vsel %vm247, %v230, %v198
  %v256 = vsel %vm248, %v231, %v203
  %v257 = vsel %vm249, %v232, %v206
  %vm258 = vcmask 261120
  %259 = vst.msk [vmem:[%s3] sm:$0xff] %vm258, %v250
  %260 = vst.msk [vmem:[%s3 + $0x8] sm:$0xff] %vm258, %v251
  %261 = vst.msk [vmem:[%s3 + $0x10] sm:$0xff] %vm258, %v252
  %262 = vst.msk [vmem:[%s3 + $0x18] sm:$0xff] %vm258, %v253
  %263 = vst.msk [vmem:[%s3 + $0x20] sm:$0xff] %vm258, %v254
  %264 = vst.msk [vmem:[%s3 + $0x28] sm:$0xff] %vm258, %v255
  %265 = vst.msk [vmem:[%s3 + $0x30] sm:$0xff] %vm258, %v256
  %266 = vst.msk [vmem:[%s3 + $0x38] sm:$0xff] %vm258, %v257
  // Predicated region
  $region14: #{_lambda_.103} parent=0 // pred_check
    _
  $region15: #{_lambda_.103} parent=0 // pred_check_branch
    %268 = sbr.rel (0) target = $region17
  $region16: #{_lambda_.103} parent=0 // pred_region
    _
  $region17: #{_lambda_.103} parent=0 // pred_fallthru
    _
  // Predicated region
  $region18: #{_lambda_.103} parent=0 // pred_check
    _
  $region19: #{_lambda_.103} parent=0 // pred_check_branch
    %270 = sbr.rel (0) target = $region21
  $region20: #{_lambda_.103} parent=0 // pred_region
    _
  $region21: #{_lambda_.103} parent=0 // pred_fallthru
    _

// kernel: _lambda_.104
$region0: #{_lambda_.104}
  #allocation0 [shape = 'u32[]', space=smem, size = 0x4, offset = 0x4, fixed_abs, tag = 'smem constant byte address 0x4 - core index']
  #allocation1 [shape = 'u32[144,128]{1,0:T(1,128)}', space=vmem, size = 0x12000, scoped, tag = 'internal scratch']
  %s0 = inlined_call_operand.vmem [shape: bf16[72,128], index: 0, kind: input, shape index: {}]
  %s1 = inlined_call_operand.vmem [shape: f32[8,128], index: 1, kind: input, shape index: {}]
  %s2 = inlined_call_operand.vmem [shape: bf16[8,72], index: 2, kind: input, shape index: {}]
  %s3 = inlined_call_operand.vmem [shape: f32[8,1], index: 3, kind: input, shape index: {}]
  %s4 = inlined_call_operand.vmem [shape: f32[8,8], index: 4, kind: input, shape index: {}]
  %s5 = inlined_call_operand.vmem [shape: f32[8,1], index: 5, kind: input, shape index: {}]
  %s6 = inlined_call_operand.vmem [shape: f32[8,128], index: 6, kind: output, shape index: {}]
  %s7 = sld [smem:[#allocation0]]
  $region34: #{_lambda_.104} parent=0
    _
  %s9 = ssub.s32 1, %s7
  %s10 = scalar_select 0, %s9, %s7
  // Predicated region
  $region2: #{_lambda_.104} parent=0 // pred_check
    _
  $region3: #{_lambda_.104} parent=0 // pred_check_branch
    %12 = sbr.rel (0) target = $region5
  $region4: #{_lambda_.104} parent=0 // pred_region
    _
  $region5: #{_lambda_.104} parent=0 // pred_fallthru
    _
  // Predicated region
  $region6: #{_lambda_.104} parent=0 // pred_check
    _
  $region7: #{_lambda_.104} parent=0 // pred_check_branch
    %14 = sbr.rel (0) target = $region9
  $region8: #{_lambda_.104} parent=0 // pred_region
    _
  $region9: #{_lambda_.104} parent=0 // pred_fallthru
    _
  // Predicated region
  $region10: #{_lambda_.104} parent=0 // pred_check
    _
  $region11: #{_lambda_.104} parent=0 // pred_check_branch
    %16 = sbr.rel (0) target = $region13
  $region12: #{_lambda_.104} parent=0 // pred_region
    _
  $region13: #{_lambda_.104} parent=0 // pred_fallthru
    _
  // Predicated region
  $region14: #{_lambda_.104} parent=0 // pred_check
    _
  $region15: #{_lambda_.104} parent=0 // pred_check_branch
    %18 = sbr.rel (0) target = $region17
  $region16: #{_lambda_.104} parent=0 // pred_region
    _
  $region17: #{_lambda_.104} parent=0 // pred_fallthru
    _
  // Predicated region
  $region18: #{_lambda_.104} parent=0 // pred_check
    _
  $region19: #{_lambda_.104} parent=0 // pred_check_branch
    %20 = sbr.rel (0) target = $region21
  $region20: #{_lambda_.104} parent=0 // pred_region
    _
  $region21: #{_lambda_.104} parent=0 // pred_fallthru
    _
  // Predicated region
  $region22: #{_lambda_.104} parent=0 // pred_check
    _
  $region23: #{_lambda_.104} parent=0 // pred_check_branch
    %22 = sbr.rel (0) target = $region25
  $region24: #{_lambda_.104} parent=0 // pred_region
    _
  $region25: #{_lambda_.104} parent=0 // pred_fallthru
    _
  %v24 = vld [vmem:[%s2] sm:$0xf]
  %v25 = vld [vmem:[%s0] sm:$0xf]
  %v26 = vld [vmem:[%s0 + $0x4] sm:$0xf]
  %v27 = vld [vmem:[%s0 + $0x8] sm:$0xf]
  %v28 = vld [vmem:[%s0 + $0xc] sm:$0xf]
  %v29 = vld [vmem:[%s0 + $0x10] sm:$0xf]
  %v30 = vld [vmem:[%s0 + $0x14] sm:$0xf]
  %v31 = vld [vmem:[%s0 + $0x18] sm:$0xf]
  %v32 = vld [vmem:[%s0 + $0x1c] sm:$0xf]
  %v33 = vld [vmem:[%s0 + $0x20] sm:$0xf]
  %v34 = vld [vmem:[%s3] sm:$0xff]
  %36 = vset.pattern.permute.xlu0 0
  %37 = vperm.xlu0 %36, %v34
  %v38 = vpop.permute.xlu0 %37
  %v49 = vunpack.c.l.b16 %v25
  %v50 = vunpack.c.l.b16 %v26
  %v51 = vunpack.c.l.b16 %v27
  %v52 = vunpack.c.l.b16 %v28
  %v53 = vunpack.c.l.b16 %v29
  %v54 = vunpack.c.l.b16 %v30
  %v55 = vunpack.c.l.b16 %v31
  %v56 = vunpack.c.l.b16 %v32
  %v57 = vunpack.c.l.b16 %v33
  %v58 = vpack.c.b16 %v50, %v49
  %v59 = vpack.c.b16 %v52, %v51
  %v60 = vpack.c.b16 %v54, %v53
  %v61 = vpack.c.b16 %v56, %v55
  %v62 = vpack.c.b16 %v57, %v57
  %vm67 = vcmask 588800
  %v69 = vsel %vm67, %v24, 0
  %vm71 = vcmask 1043456
  %v73 = vsel %vm71, %v62, 0
  %75 = vmatprep.subr.bf16.mxu0 0
  %76 = vmatpush1.bf16.msra.mxu0 %v58
  %77 = vmatprep.subr.bf16.mxu0 0
  %78 = vmatpush1.bf16.msra.mxu0 %v59
  %79 = vmatprep.subr.bf16.mxu0 0
  %80 = vmatpush1.bf16.msra.mxu0 %v60
  %81 = vmatprep.subr.bf16.mxu0 0
  %82 = vmatpush1.bf16.msra.mxu0 %v61
  %83 = vmatprep.subr.bf16.mxu0 0
  %84 = vmatpush1.bf16.msra.mxu0 %v73
  %85 = vmatprep.subr.bf16.mxu0 0
  %86 = vmatpush1.bf16.msra.mxu0 0
  %87 = vmatprep.subr.bf16.mxu0 0
  %88 = vmatpush1.bf16.msra.mxu0 0
  %89 = vmatprep.subr.bf16.mxu0 0
  %90 = vmatpush1.bf16.msra.mxu0 0
  %91 = vmatprep.subr.bf16.mxu0 0
  %92 = vmatpush1.bf16.msra.mxu0 0
  %93 = vmatprep.subr.bf16.mxu0 0
  %94 = vmatpush1.bf16.msra.mxu0 0
  %95 = vmatprep.subr.bf16.mxu0 0
  %96 = vmatpush1.bf16.msra.mxu0 0
  %97 = vmatprep.subr.bf16.mxu0 0
  %98 = vmatpush1.bf16.msra.mxu0 0
  %99 = vmatprep.subr.bf16.mxu0 0
  %100 = vmatpush1.bf16.msra.mxu0 0
  %101 = vmatprep.subr.bf16.mxu0 0
  %102 = vmatpush1.bf16.msra.mxu0 0
  %103 = vmatprep.subr.bf16.mxu0 0
  %104 = vmatpush1.bf16.msra.mxu0 0
  %105 = vmatprep.subr.bf16.mxu0 0
  %106 = vmatpush1.bf16.msra.mxu0 0
  %107 = vmatprep.mubr.bf16.mxu0 0
  %108 = vmatmul.mubr.bf16.gmra.mrb[0].mxu0 %v69
  %v109 = vpop.f32.mrb[0].mxu0
  %v110 = vadd.f32 %v38, %v109
  %v111 = vpop.f32.mrb[0].mxu0
  %v112 = vpop.f32.mrb[0].mxu0
  %v113 = vpop.f32.mrb[0].mxu0
  %114 = vdwg.mxu0
  %v115 = vld [vmem:[%s4] sm:$0xff]
  %v116 = vmul.f32 %v110, %v110
  %v117 = vld [vmem:[%s5] sm:$0xff]
  %119 = vset.pattern.permute.xlu0 0
  %120 = vperm.xlu0 %119, %v117
  %v121 = vpop.permute.xlu0 %120
  %vm123 = vcmask 64512
  %v125 = vsel %vm123, %v115, 0
  %127 = vmatprep.subr.mxu0 0.0
  %128 = vmatpush1.msra.mxu0 %v116
  %129 = vmatprep.subr.mxu0 0.0
  %130 = vmatpush1.msra.mxu0 0.0
  %131 = vmatprep.subr.mxu0 0.0
  %132 = vmatpush1.msra.mxu0 0.0
  %133 = vmatprep.subr.mxu0 0.0
  %134 = vmatpush1.msra.mxu0 0.0
  %135 = vmatprep.subr.mxu0 0.0
  %136 = vmatpush1.msra.mxu0 0.0
  %137 = vmatprep.subr.mxu0 0.0
  %138 = vmatpush1.msra.mxu0 0.0
  %139 = vmatprep.subr.mxu0 0.0
  %140 = vmatpush1.msra.mxu0 0.0
  %141 = vmatprep.subr.mxu0 0.0
  %142 = vmatpush1.msra.mxu0 0.0
  %143 = vmatprep.subr.mxu0 0.0
  %144 = vmatpush1.msra.mxu0 0.0
  %145 = vmatprep.subr.mxu0 0.0
  %146 = vmatpush1.msra.mxu0 0.0
  %147 = vmatprep.subr.mxu0 0.0
  %148 = vmatpush1.msra.mxu0 0.0
  %149 = vmatprep.subr.mxu0 0.0
  %150 = vmatpush1.msra.mxu0 0.0
  %151 = vmatprep.subr.mxu0 0.0
  %152 = vmatpush1.msra.mxu0 0.0
  %153 = vmatprep.subr.mxu0 0.0
  %154 = vmatpush1.msra.mxu0 0.0
  %155 = vmatprep.subr.mxu0 0.0
  %156 = vmatpush1.msra.mxu0 0.0
  %157 = vmatprep.subr.mxu0 0.0
  %158 = vmatpush1.msra.mxu0 0.0
  %159 = vmatprep.subr.mxu0 0.0
  %160 = vmatpush1.msra.mxu0 0.0
  %161 = vmatprep.subr.mxu0 0.0
  %162 = vmatpush1.msra.mxu0 0.0
  %163 = vmatprep.subr.mxu0 0.0
  %164 = vmatpush1.msra.mxu0 0.0
  %165 = vmatprep.subr.mxu0 0.0
  %166 = vmatpush1.msra.mxu0 0.0
  %167 = vmatprep.subr.mxu0 0.0
  %168 = vmatpush1.msra.mxu0 0.0
  %169 = vmatprep.subr.mxu0 0.0
  %170 = vmatpush1.msra.mxu0 0.0
  %171 = vmatprep.subr.mxu0 0.0
  %172 = vmatpush1.msra.mxu0 0.0
  %173 = vmatprep.subr.mxu0 0.0
  %174 = vmatpush1.msra.mxu0 0.0
  %175 = vmatprep.subr.mxu0 0.0
  %176 = vmatpush1.msra.mxu0 0.0
  %177 = vmatprep.subr.mxu0 0.0
  %178 = vmatpush1.msra.mxu0 0.0
  %179 = vmatprep.subr.mxu0 0.0
  %180 = vmatpush1.msra.mxu0 0.0
  %181 = vmatprep.subr.mxu0 0.0
  %182 = vmatpush1.msra.mxu0 0.0
  %183 = vmatprep.subr.mxu0 0.0
  %184 = vmatpush1.msra.mxu0 0.0
  %185 = vmatprep.subr.mxu0 0.0
  %186 = vmatpush1.msra.mxu0 0.0
  %187 = vmatprep.subr.mxu0 0.0
  %188 = vmatpush1.msra.mxu0 0.0
  %189 = vmatprep.subr.mxu0 0.0
  %190 = vmatpush1.msra.mxu0 0.0
  %191 = vmatprep.mubr.f32.mxu0 0.0
  %192 = vmatmul.mubr.f32.gmra.mrb[0].mxu0 %v125
  %v193 = vpop.f32.mrb[0].mxu0
  %v194 = vadd.f32 %v121, %v193
  %v195 = vpop.f32.mrb[0].mxu0
  %196 = vdwg.mxu0
  %v197 = vmax.f32 %v194, 0.0
  %v198 = vrsqrt.pop %v197
  %v199 = vmul.f32 %v197, %v198
  %vm200 = vcmp.eq.f32.partialorder %v197, inf
  %v201 = vsel %vm200, %v197, %v199
  %vm202 = vcmp.eq.f32.partialorder %v197, 0.0
  %v203 = vand.u32 %v197, 2147483648
  %v204 = vsel %vm202, %v203, %v201
  %v205 = vmul.f32 %v110, %v204
  %v206 = vld [vmem:[%s1] sm:$0xff]
  %v207 = vadd.f32 %v205, %v206
  %208 = vst [vmem:[%s6] sm:$0xff] %v207
  // Predicated region
  $region26: #{_lambda_.104} parent=0 // pred_check
    _
  $region27: #{_lambda_.104} parent=0 // pred_check_branch
    %210 = sbr.rel (0) target = $region29
  $region28: #{_lambda_.104} parent=0 // pred_region
    _
  $region29: #{_lambda_.104} parent=0 // pred_fallthru
    _
  // Predicated region
  $region30: #{_lambda_.104} parent=0 // pred_check
    _
  $region31: #{_lambda_.104} parent=0 // pred_check_branch
    %212 = sbr.rel (0) target = $region33
  $region32: #{_lambda_.104} parent=0 // pred_region
    _
  $region33: #{_lambda_.104} parent=0 // pred_fallthru
    _

// kernel: _lambda_.111
$region0: #{_lambda_.111}
  #allocation0 [shape = 'u32[]', space=smem, size = 0x4, offset = 0x4, fixed_abs, tag = 'smem constant byte address 0x4 - core index']
  #allocation1 [shape = 'u32[144,128]{1,0:T(1,128)}', space=vmem, size = 0x12000, scoped, tag = 'internal scratch']
  %s0 = inlined_call_operand.vmem [shape: bf16[72,128], index: 0, kind: input, shape index: {}]
  %s1 = inlined_call_operand.vmem [shape: bf16[4,72], index: 1, kind: input, shape index: {}]
  %s2 = inlined_call_operand.vmem [shape: f32[4,1], index: 2, kind: input, shape index: {}]
  %s3 = inlined_call_operand.vmem [shape: f32[4,128], index: 3, kind: output, shape index: {}]
  %s4 = sld [smem:[#allocation0]]
  $region22: #{_lambda_.111} parent=0
    _
  %s6 = ssub.s32 1, %s4
  %s7 = scalar_select 0, %s6, %s4
  // Predicated region
  $region2: #{_lambda_.111} parent=0 // pred_check
    _
  $region3: #{_lambda_.111} parent=0 // pred_check_branch
    %9 = sbr.rel (0) target = $region5
  $region4: #{_lambda_.111} parent=0 // pred_region
    _
  $region5: #{_lambda_.111} parent=0 // pred_fallthru
    _
  // Predicated region
  $region6: #{_lambda_.111} parent=0 // pred_check
    _
  $region7: #{_lambda_.111} parent=0 // pred_check_branch
    %11 = sbr.rel (0) target = $region9
  $region8: #{_lambda_.111} parent=0 // pred_region
    _
  $region9: #{_lambda_.111} parent=0 // pred_fallthru
    _
  // Predicated region
  $region10: #{_lambda_.111} parent=0 // pred_check
    _
  $region11: #{_lambda_.111} parent=0 // pred_check_branch
    %13 = sbr.rel (0) target = $region13
  $region12: #{_lambda_.111} parent=0 // pred_region
    _
  $region13: #{_lambda_.111} parent=0 // pred_fallthru
    _
  %v15 = vld [vmem:[%s1] sm:$0x3]
  %v16 = vld [vmem:[%s0] sm:$0xf]
  %v17 = vld [vmem:[%s0 + $0x4] sm:$0xf]
  %v18 = vld [vmem:[%s0 + $0x8] sm:$0xf]
  %v19 = vld [vmem:[%s0 + $0xc] sm:$0xf]
  %v20 = vld [vmem:[%s0 + $0x10] sm:$0xf]
  %v21 = vld [vmem:[%s0 + $0x14] sm:$0xf]
  %v22 = vld [vmem:[%s0 + $0x18] sm:$0xf]
  %v23 = vld [vmem:[%s0 + $0x1c] sm:$0xf]
  %v24 = vld [vmem:[%s0 + $0x20] sm:$0xf]
  %v25 = vld [vmem:[%s2] sm:$0xf]
  %27 = vset.pattern.permute.xlu0 0
  %28 = vperm.xlu0 %27, %v25
  %v29 = vpop.permute.xlu0 %28
  %v40 = vunpack.c.l.b16 %v16
  %v41 = vunpack.c.l.b16 %v17
  %v42 = vunpack.c.l.b16 %v18
  %v43 = vunpack.c.l.b16 %v19
  %v44 = vunpack.c.l.b16 %v20
  %v45 = vunpack.c.l.b16 %v21
  %v46 = vunpack.c.l.b16 %v22
  %v47 = vunpack.c.l.b16 %v23
  %v48 = vunpack.c.l.b16 %v24
  %v49 = vpack.c.b16 %v41, %v40
  %v50 = vpack.c.b16 %v43, %v42
  %v51 = vpack.c.b16 %v45, %v44
  %v52 = vpack.c.b16 %v47, %v46
  %v53 = vpack.c.b16 %v48, %v48
  %vm58 = vcmask 588800
  %v60 = vsel %vm58, %v15, 0
  %vm62 = vcmask 1043456
  %v64 = vsel %vm62, %v53, 0
  %66 = vmatprep.subr.bf16.mxu0 0
  %67 = vmatpush1.bf16.msra.mxu0 %v49
  %68 = vmatprep.subr.bf16.mxu0 0
  %69 = vmatpush1.bf16.msra.mxu0 %v50
  %70 = vmatprep.subr.bf16.mxu0 0
  %71 = vmatpush1.bf16.msra.mxu0 %v51
  %72 = vmatprep.subr.bf16.mxu0 0
  %73 = vmatpush1.bf16.msra.mxu0 %v52
  %74 = vmatprep.subr.bf16.mxu0 0
  %75 = vmatpush1.bf16.msra.mxu0 %v64
  %76 = vmatprep.subr.bf16.mxu0 0
  %77 = vmatpush1.bf16.msra.mxu0 0
  %78 = vmatprep.subr.bf16.mxu0 0
  %79 = vmatpush1.bf16.msra.mxu0 0
  %80 = vmatprep.subr.bf16.mxu0 0
  %81 = vmatpush1.bf16.msra.mxu0 0
  %82 = vmatprep.subr.bf16.mxu0 0
  %83 = vmatpush1.bf16.msra.mxu0 0
  %84 = vmatprep.subr.bf16.mxu0 0
  %85 = vmatpush1.bf16.msra.mxu0 0
  %86 = vmatprep.subr.bf16.mxu0 0
  %87 = vmatpush1.bf16.msra.mxu0 0
  %88 = vmatprep.subr.bf16.mxu0 0
  %89 = vmatpush1.bf16.msra.mxu0 0
  %90 = vmatprep.subr.bf16.mxu0 0
  %91 = vmatpush1.bf16.msra.mxu0 0
  %92 = vmatprep.subr.bf16.mxu0 0
  %93 = vmatpush1.bf16.msra.mxu0 0
  %94 = vmatprep.subr.bf16.mxu0 0
  %95 = vmatpush1.bf16.msra.mxu0 0
  %96 = vmatprep.subr.bf16.mxu0 0
  %97 = vmatpush1.bf16.msra.mxu0 0
  %98 = vmatprep.mubr.bf16.mxu0 0
  %99 = vmatmul.mubr.bf16.gmra.mrb[0].mxu0 %v60
  %v100 = vpop.f32.mrb[0].mxu0
  %v101 = vadd.f32 %v29, %v100
  %v102 = vpop.f32.mrb[0].mxu0
  %v103 = vpop.f32.mrb[0].mxu0
  %v104 = vpop.f32.mrb[0].mxu0
  %105 = vdwg.mxu0
  %106 = vst [vmem:[%s3] sm:$0xf] %v101
  // Predicated region
  $region14: #{_lambda_.111} parent=0 // pred_check
    _
  $region15: #{_lambda_.111} parent=0 // pred_check_branch
    %108 = sbr.rel (0) target = $region17
  $region16: #{_lambda_.111} parent=0 // pred_region
    _
  $region17: #{_lambda_.111} parent=0 // pred_fallthru
    _
  // Predicated region
  $region18: #{_lambda_.111} parent=0 // pred_check
    _
  $region19: #{_lambda_.111} parent=0 // pred_check_branch
    %110 = sbr.rel (0) target = $region21
  $region20: #{_lambda_.111} parent=0 // pred_region
    _
  $region21: #{_lambda_.111} parent=0 // pred_fallthru
    _

</llo_original>
